<compile_context>
chip_gen: v7x
topology: tpu7x:2x2x1
jax: 0.10.0
libtpu: 0.0.40
codegen_flags: <defaults>
</compile_context>

<pallas_src>
import math

import jax
import jax.numpy as jnp
from jax.experimental import pallas as pl
from jax.experimental.pallas import tpu as pltpu  # noqa: F401  (kept for TPU-specific tuning hooks)

# ---- model hyper-parameters (from the PyTorch module) ----
D_MODEL = 128
D_FF = 512
N_HEADS = 4
D_K = D_MODEL // N_HEADS
NUM_LAYERS = 2
MAX_LEN = 50
LN_EPS = 1e-5            # PyTorch nn.LayerNorm default

# ---- small example shapes ----
BATCH = 2
SEQ = 8
VOCAB_SIZE = 64
VOCAB_PAD = 128          # pad logits / vocab head to a full 128-lane slab

MM_DTYPE = jnp.bfloat16  # storage / MXU dtype for all weight matmuls

# ---- packed weight-slab layout (all lane offsets are multiples of 128) ----
# WBIG  bf16 (128, NUM_LAYERS*1024 + 128): per layer [Wqkv(384) | Wo(128) | W1(512)],
#                                          then the lane-padded vocab-head weight (128)
# W2S   bf16 (512, NUM_LAYERS*128):        per layer W2 (D_FF, D_MODEL)
# BLN   f32  (1, NUM_LAYERS*1664 + 128):   per layer [bqkv(384)|bo|g1|b1n|b1(512)|b2|g2|b2n],
#                                          then the lane-padded vocab-head bias (128)
WBIG_FIELDS = (("wqkv", 3 * D_MODEL), ("wo", D_MODEL), ("w1", D_FF))
BLN_FIELDS = (("bqkv", 3 * D_MODEL), ("bo", D_MODEL), ("g1", D_MODEL),
              ("be1", D_MODEL), ("b1", D_FF), ("b2", D_MODEL),
              ("g2", D_MODEL), ("be2", D_MODEL))
WBIG_LAYER = sum(w for _, w in WBIG_FIELDS)   # 1024
BLN_LAYER = sum(w for _, w in BLN_FIELDS)     # 1664


# ----------------------------------------------------------------------------
# Pallas kernel
# ----------------------------------------------------------------------------
def _unpack_layer(wbig_ref, w2s_ref, bln_ref, layer):
    """Static, 128-lane-aligned slices of the packed weight slabs for one layer."""
    w = {}
    off = layer * WBIG_LAYER
    for name, width in WBIG_FIELDS:
        w[name] = wbig_ref[:, off:off + width]
        off += width
    off = layer * BLN_LAYER
    for name, width in BLN_FIELDS:
        w[name] = bln_ref[:, off:off + width]
        off += width
    w["w2"] = w2s_ref[:, layer * D_MODEL:(layer + 1) * D_MODEL]
    return w


def _transformer_block(x, bg, s, w):
    """One TransformerBlock on a (bg*s, D_MODEL) f32 activation slab."""
    rows = bg * s

    # --- fused QKV projection: one (rows, D) @ (D, 3D) matmul, bf16 in / f32 acc ---
    qkv = jnp.dot(x.astype(MM_DTYPE), w["wqkv"],
                  preferred_element_type=jnp.float32) + w["bqkv"]
    scale = 1.0 / math.sqrt(D_K)
    qb = (qkv[:, 0:D_MODEL] * scale).astype(MM_DTYPE)     # score scale folded into q
    kb = qkv[:, D_MODEL:2 * D_MODEL].astype(MM_DTYPE)
    vb = qkv[:, 2 * D_MODEL:3 * D_MODEL].astype(MM_DTYPE)

    # --- multi-head attention: static head loop, each einsum batched over batch,
    #     all MXU operands in bf16 (f32 accumulation) ---
    ctx_heads = []
    for h in range(N_HEADS):
        lo = h * D_K
        qh = qb[:, lo:lo + D_K].reshape(bg, s, D_K)
        kh = kb[:, lo:lo + D_K].reshape(bg, s, D_K)
        vh = vb[:, lo:lo + D_K].reshape(bg, s, D_K)
        sc = jnp.einsum("bid,bjd->bij", qh, kh,
                        preferred_element_type=jnp.float32)          # (bg, s, s)
        sc = sc - jnp.max(sc, axis=-1, keepdims=True)
        e = jnp.exp(sc)
        p = e * pl.reciprocal(jnp.sum(e, axis=-1, keepdims=True), approx=True)
        ctx = jnp.einsum("bij,bjd->bid", p.astype(MM_DTYPE), vh,
                         preferred_element_type=jnp.float32)         # (bg, s, d_k)
        ctx_heads.append(ctx.reshape(rows, D_K))

    # --- single fused W_o matmul (full K=D_MODEL) instead of N_HEADS K=32 partials ---
    ctx_all = jnp.concatenate(ctx_heads, axis=-1)                    # (rows, D) f32
    attn_out = jnp.dot(ctx_all.astype(MM_DTYPE), w["wo"],
                       preferred_element_type=jnp.float32) + w["bo"]

    # --- residual + LayerNorm 1 (dropout == identity in eval) ---
    h1 = x + attn_out
    mu1 = jnp.mean(h1, axis=-1, keepdims=True)
    var1 = jnp.mean((h1 - mu1) ** 2, axis=-1, keepdims=True)
    h1n = (h1 - mu1) * jax.lax.rsqrt(var1 + LN_EPS) * w["g1"] + w["be1"]

    # --- feed forward ---
    ff = jnp.dot(h1n.astype(MM_DTYPE), w["w1"],
                 preferred_element_type=jnp.float32) + w["b1"]
    ff = jnp.maximum(ff, 0.0)
    ff = jnp.dot(ff.astype(MM_DTYPE), w["w2"],
                 preferred_element_type=jnp.float32) + w["b2"]

    # --- residual + LayerNorm 2 ---
    h2 = h1n + ff
    mu2 = jnp.mean(h2, axis=-1, keepdims=True)
    var2 = jnp.mean((h2 - mu2) ** 2, axis=-1, keepdims=True)
    return (h2 - mu2) * jax.lax.rsqrt(var2 + LN_EPS) * w["g2"] + w["be2"]


def fused_forward_kernel(ids_ref, pe_ref, emb_ref, wbig_ref, w2s_ref, bln_ref, o_ref):
    """embedding (one-hot matmul) -> +PE -> NUM_LAYERS blocks -> padded vocab head."""
    B, S, _ = o_ref.shape
    rows = B * S

    # --- embedding lookup as a one-hot MXU matmul (no XLA gather, no HBM x round-trip) ---
    ids = ids_ref[...]                                               # (rows, 1) int32
    vocab_pos = jax.lax.broadcasted_iota(jnp.int32, (rows, VOCAB_SIZE), 1)
    onehot = jnp.where(ids == vocab_pos, 1.0, 0.0).astype(MM_DTYPE)  # (rows, V)
    x = jnp.dot(onehot, emb_ref[...], preferred_element_type=jnp.float32)

    # --- positional-encoding add, broadcast over batch, then fold batch into rows ---
    x = (x.reshape(B, S, D_MODEL) + pe_ref[0:S, :][None, :, :]).reshape(rows, D_MODEL)

    for layer in range(NUM_LAYERS):
        w = _unpack_layer(wbig_ref, w2s_ref, bln_ref, layer)
        x = _transformer_block(x, B, S, w)

    # --- final vocab projection (lane-dense: padded to 128 output lanes) ---
    fc_off_w = NUM_LAYERS * WBIG_LAYER
    fc_off_b = NUM_LAYERS * BLN_LAYER
    fcw = wbig_ref[:, fc_off_w:fc_off_w + VOCAB_PAD]
    fcb = bln_ref[:, fc_off_b:fc_off_b + VOCAB_PAD]
    logits = jnp.dot(x.astype(MM_DTYPE), fcw,
                     preferred_element_type=jnp.float32) + fcb
    o_ref[...] = logits.reshape(B, S, VOCAB_PAD)


# ----------------------------------------------------------------------------
# Wrapper
# ----------------------------------------------------------------------------
def _cost_estimate(batch, seq):
    rows = batch * seq
    layer_flops = (2 * rows * D_MODEL * 3 * D_MODEL            # QKV
                   + 2 * 2 * batch * N_HEADS * seq * seq * D_K  # scores + context
                   + 2 * rows * D_MODEL * D_MODEL               # W_o
                   + 2 * rows * D_MODEL * D_FF                  # FF1
                   + 2 * rows * D_FF * D_MODEL)                 # FF2
    flops = (NUM_LAYERS * layer_flops
             + 2 * rows * VOCAB_SIZE * D_MODEL                  # embedding one-hot
             + 2 * rows * D_MODEL * VOCAB_PAD)                  # vocab head
    transcendentals = (NUM_LAYERS * batch * N_HEADS * seq * seq   # exp
                       + NUM_LAYERS * batch * N_HEADS * seq       # reciprocal
                       + 2 * NUM_LAYERS * rows)                   # rsqrt (2 LNs/layer)
    bytes_accessed = (rows * 4                                     # token ids
                      + MAX_LEN * D_MODEL * 4                      # PE table
                      + VOCAB_SIZE * D_MODEL * 2                   # embedding (bf16)
                      + D_MODEL * (NUM_LAYERS * WBIG_LAYER + VOCAB_PAD) * 2   # WBIG
                      + D_FF * NUM_LAYERS * D_MODEL * 2            # W2S
                      + (NUM_LAYERS * BLN_LAYER + VOCAB_PAD) * 4   # BLN
                      + batch * seq * VOCAB_PAD * 4)               # logits out
    return pl.CostEstimate(flops=flops, transcendentals=transcendentals,
                           bytes_accessed=bytes_accessed)


def transformer_forward(token_ids, params, pe):
    B, S = token_ids.shape
    ids = token_ids.reshape(B * S, 1).astype(jnp.int32)

    # Gridless pallas_call: every operand is whole-array VMEM-resident (~0.9 MB
    # total, single-buffered, one DMA each). No megacore split at 16 rows of
    # work; add a "parallel" batch-group grid only when rows/core >= ~256.
    logits_pad = pl.pallas_call(
        fused_forward_kernel,
        out_shape=jax.ShapeDtypeStruct((B, S, VOCAB_PAD), jnp.float32),
        cost_estimate=_cost_estimate(B, S),
    )(ids, pe, params["embedding"], params["wbig"], params["w2s"], params["bln"])
    return logits_pad[:, :, :VOCAB_SIZE]


# ----------------------------------------------------------------------------
# Parameter construction (deterministic, in-script) + host-side slab packing
# ----------------------------------------------------------------------------
def make_params(key):
    keys = jax.random.split(key, 64)
    ki = iter(keys)

    def lin(in_f, out_f):
        # stored as (in, out); equivalent to PyTorch Linear weight (out, in).T
        w = jax.random.normal(next(ki), (in_f, out_f), jnp.float32) * 0.02
        b = jax.random.normal(next(ki), (1, out_f), jnp.float32) * 0.02
        return w, b

    embedding = jax.random.normal(next(ki), (VOCAB_SIZE, D_MODEL), jnp.float32) * 0.02

    wbig_cols, w2_cols, bln_cols = [], [], []
    for _ in range(NUM_LAYERS):
        wq, bq = lin(D_MODEL, D_MODEL)
        wk, bk = lin(D_MODEL, D_MODEL)
        wv, bv = lin(D_MODEL, D_MODEL)
        wo, bo = lin(D_MODEL, D_MODEL)
        w1, b1 = lin(D_MODEL, D_FF)
        w2, b2 = lin(D_FF, D_MODEL)
        g1 = jnp.ones((1, D_MODEL), jnp.float32)
        be1 = jnp.zeros((1, D_MODEL), jnp.float32)
        g2 = jnp.ones((1, D_MODEL), jnp.float32)
        be2 = jnp.zeros((1, D_MODEL), jnp.float32)
        # order must match WBIG_FIELDS: wqkv | wo | w1
        wbig_cols += [wq, wk, wv, wo, w1]
        w2_cols.append(w2)
        # order must match BLN_FIELDS: bqkv | bo | g1 | be1 | b1 | b2 | g2 | be2
        bln_cols += [bq, bk, bv, bo, g1, be1, b1, b2, g2, be2]

    # vocab head, padded to 128 output lanes (lane-dense logits)
    fw, fb = lin(D_MODEL, VOCAB_SIZE)
    wbig_cols.append(jnp.pad(fw, ((0, 0), (0, VOCAB_PAD - VOCAB_SIZE))))
    bln_cols.append(jnp.pad(fb, ((0, 0), (0, VOCAB_PAD - VOCAB_SIZE))))

    return {
        "embedding": embedding.astype(MM_DTYPE),                      # (64, 128) bf16
        "wbig": jnp.concatenate(wbig_cols, axis=1).astype(MM_DTYPE),  # (128, 2176) bf16
        "w2s": jnp.concatenate(w2_cols, axis=1).astype(MM_DTYPE),     # (512, 256) bf16
        "bln": jnp.concatenate(bln_cols, axis=1),                     # (1, 3456) f32
    }


def positional_encoding(max_len, d_model):
    position = jnp.arange(max_len, dtype=jnp.float32)[:, None]
    div_term = jnp.exp(
        jnp.arange(0, d_model, 2, dtype=jnp.float32) * (-math.log(10000.0) / d_model)
    )
    pe = jnp.zeros((max_len, d_model), jnp.float32)
    pe = pe.at[:, 0::2].set(jnp.sin(position * div_term))
    pe = pe.at[:, 1::2].set(jnp.cos(position * div_term))
    return pe  # (max_len, d_model)


# ----------------------------------------------------------------------------
# Main
# ----------------------------------------------------------------------------
if __name__ == "__main__":
    key = jax.random.PRNGKey(0)
    kp, kx = jax.random.split(key)

    params = make_params(kp)
    pe = positional_encoding(MAX_LEN, D_MODEL)

    token_ids = jax.random.randint(kx, (BATCH, SEQ), 0, VOCAB_SIZE, dtype=jnp.int32)

    fwd = jax.jit(transformer_forward)
    logits = fwd(token_ids, params, pe)
    jax.block_until_ready(logits)

    assert logits.shape == (BATCH, SEQ, VOCAB_SIZE)
    assert bool(jnp.all(jnp.isfinite(logits)))
    print("KERNEL_OK")
</pallas_src>

<mosaic_0001>
module attributes {stable_mosaic.version = 11 : i64} {
  func.func @fused_forward_kernel(%arg0: memref<16x1xi32, #tpu.memory_space<vmem>>, %arg1: memref<50x128xf32, #tpu.memory_space<vmem>>, %arg2: memref<64x128xbf16, #tpu.memory_space<vmem>>, %arg3: memref<128x2176xbf16, #tpu.memory_space<vmem>>, %arg4: memref<512x256xbf16, #tpu.memory_space<vmem>>, %arg5: memref<1x3456xf32, #tpu.memory_space<vmem>>, %arg6: memref<2x8x128xf32, #tpu.memory_space<vmem>>) attributes {dimension_semantics = [], scalar_prefetch = 0 : i64, scratch_operands = 0 : i64, tpu.core_type = #tpu.core_type<tc>} {
    %c0 = arith.constant 0 : index
    %c0_0 = arith.constant 0 : index
    %0 = vector.load %arg0[%c0, %c0_0] : memref<16x1xi32, #tpu.memory_space<vmem>>, vector<16x1xi32>
    %1 = tpu.iota {dimensions = array<i32: 1>} : vector<16x64xi32>
    %2 = vector.broadcast %0 : vector<16x1xi32> to vector<16x64xi32>
    %3 = arith.cmpi eq, %2, %1 : vector<16x64xi32>
    %cst = arith.constant 1.000000e+00 : f32
    %cst_1 = arith.constant 0.000000e+00 : f32
    %4 = vector.broadcast %cst : f32 to vector<16x64xf32>
    %5 = vector.broadcast %cst_1 : f32 to vector<16x64xf32>
    %6 = arith.select %3, %4, %5 : vector<16x64xi1>, vector<16x64xf32>
    %7 = arith.truncf %6 : vector<16x64xf32> to vector<16x64xbf16>
    %c0_2 = arith.constant 0 : index
    %c0_3 = arith.constant 0 : index
    %8 = vector.load %arg2[%c0_2, %c0_3] : memref<64x128xbf16, #tpu.memory_space<vmem>>, vector<64x128xbf16>
    %cst_4 = arith.constant dense<0.000000e+00> : vector<16x128xf32>
    %9 = tpu.matmul %7, %8, %cst_4 {dimension_numbers = #tpu.dot_dimension_numbers<[1], [0], [0], [1], [0, 0, 1, 1], [], []>} : vector<16x64xbf16>, vector<64x128xbf16>, vector<16x128xf32> -> vector<16x128xf32>
    %10 = vector.shape_cast %9 : vector<16x128xf32> to vector<2x8x128xf32>
    %c0_5 = arith.constant 0 : index
    %c0_6 = arith.constant 0 : index
    %11 = vector.load %arg1[%c0_5, %c0_6] : memref<50x128xf32, #tpu.memory_space<vmem>>, vector<8x128xf32>
    %12 = vector.shape_cast %11 : vector<8x128xf32> to vector<1x8x128xf32>
    %13 = vector.broadcast %12 : vector<1x8x128xf32> to vector<2x8x128xf32>
    %14 = arith.addf %10, %13 : vector<2x8x128xf32>
    %15 = vector.shape_cast %14 : vector<2x8x128xf32> to vector<16x128xf32>
    %c0_7 = arith.constant 0 : index
    %c0_8 = arith.constant 0 : index
    %16 = vector.load %arg3[%c0_7, %c0_8] : memref<128x2176xbf16, #tpu.memory_space<vmem>>, vector<128x384xbf16>
    %c0_9 = arith.constant 0 : index
    %c384 = arith.constant 384 : index
    %17 = vector.load %arg3[%c0_9, %c384] : memref<128x2176xbf16, #tpu.memory_space<vmem>>, vector<128x128xbf16>
    %c0_10 = arith.constant 0 : index
    %c512 = arith.constant 512 : index
    %18 = vector.load %arg3[%c0_10, %c512] : memref<128x2176xbf16, #tpu.memory_space<vmem>>, vector<128x512xbf16>
    %c0_11 = arith.constant 0 : index
    %c0_12 = arith.constant 0 : index
    %19 = vector.load %arg5[%c0_11, %c0_12] : memref<1x3456xf32, #tpu.memory_space<vmem>>, vector<1x384xf32>
    %c0_13 = arith.constant 0 : index
    %c384_14 = arith.constant 384 : index
    %20 = vector.load %arg5[%c0_13, %c384_14] : memref<1x3456xf32, #tpu.memory_space<vmem>>, vector<1x128xf32>
    %c0_15 = arith.constant 0 : index
    %c512_16 = arith.constant 512 : index
    %21 = vector.load %arg5[%c0_15, %c512_16] : memref<1x3456xf32, #tpu.memory_space<vmem>>, vector<1x128xf32>
    %c0_17 = arith.constant 0 : index
    %c640 = arith.constant 640 : index
    %22 = vector.load %arg5[%c0_17, %c640] : memref<1x3456xf32, #tpu.memory_space<vmem>>, vector<1x128xf32>
    %c0_18 = arith.constant 0 : index
    %c768 = arith.constant 768 : index
    %23 = vector.load %arg5[%c0_18, %c768] : memref<1x3456xf32, #tpu.memory_space<vmem>>, vector<1x512xf32>
    %c0_19 = arith.constant 0 : index
    %c1280 = arith.constant 1280 : index
    %24 = vector.load %arg5[%c0_19, %c1280] : memref<1x3456xf32, #tpu.memory_space<vmem>>, vector<1x128xf32>
    %c0_20 = arith.constant 0 : index
    %c1408 = arith.constant 1408 : index
    %25 = vector.load %arg5[%c0_20, %c1408] : memref<1x3456xf32, #tpu.memory_space<vmem>>, vector<1x128xf32>
    %c0_21 = arith.constant 0 : index
    %c1536 = arith.constant 1536 : index
    %26 = vector.load %arg5[%c0_21, %c1536] : memref<1x3456xf32, #tpu.memory_space<vmem>>, vector<1x128xf32>
    %c0_22 = arith.constant 0 : index
    %c0_23 = arith.constant 0 : index
    %27 = vector.load %arg4[%c0_22, %c0_23] : memref<512x256xbf16, #tpu.memory_space<vmem>>, vector<512x128xbf16>
    %28 = arith.truncf %15 : vector<16x128xf32> to vector<16x128xbf16>
    %cst_24 = arith.constant dense<0.000000e+00> : vector<16x384xf32>
    %29 = tpu.matmul %28, %16, %cst_24 {dimension_numbers = #tpu.dot_dimension_numbers<[1], [0], [0], [1], [0, 0, 1, 1], [], []>} : vector<16x128xbf16>, vector<128x384xbf16>, vector<16x384xf32> -> vector<16x384xf32>
    %30 = vector.broadcast %19 : vector<1x384xf32> to vector<16x384xf32>
    %31 = arith.addf %29, %30 : vector<16x384xf32>
    %32 = vector.extract_strided_slice %31 {offsets = [0, 0], sizes = [16, 128], strides = [1, 1]} : vector<16x384xf32> to vector<16x128xf32>
    %cst_25 = arith.constant 0.176776692 : f32
    %33 = vector.broadcast %cst_25 : f32 to vector<16x128xf32>
    %34 = arith.mulf %32, %33 : vector<16x128xf32>
    %35 = arith.truncf %34 : vector<16x128xf32> to vector<16x128xbf16>
    %36 = vector.extract_strided_slice %31 {offsets = [0, 128], sizes = [16, 128], strides = [1, 1]} : vector<16x384xf32> to vector<16x128xf32>
    %37 = arith.truncf %36 : vector<16x128xf32> to vector<16x128xbf16>
    %38 = vector.extract_strided_slice %31 {offsets = [0, 256], sizes = [16, 128], strides = [1, 1]} : vector<16x384xf32> to vector<16x128xf32>
    %39 = arith.truncf %38 : vector<16x128xf32> to vector<16x128xbf16>
    %40 = vector.extract_strided_slice %35 {offsets = [0, 0], sizes = [16, 32], strides = [1, 1]} : vector<16x128xbf16> to vector<16x32xbf16>
    %41 = vector.shape_cast %40 : vector<16x32xbf16> to vector<2x8x32xbf16>
    %42 = vector.extract_strided_slice %37 {offsets = [0, 0], sizes = [16, 32], strides = [1, 1]} : vector<16x128xbf16> to vector<16x32xbf16>
    %43 = vector.shape_cast %42 : vector<16x32xbf16> to vector<2x8x32xbf16>
    %44 = vector.extract_strided_slice %39 {offsets = [0, 0], sizes = [16, 32], strides = [1, 1]} : vector<16x128xbf16> to vector<16x32xbf16>
    %45 = vector.shape_cast %44 : vector<16x32xbf16> to vector<2x8x32xbf16>
    "tpu.trace_start"() <{level = 10 : i32, message = "bid,bjd->bij"}> : () -> ()
    %cst_26 = arith.constant dense<0.000000e+00> : vector<2x8x8xf32>
    %46 = tpu.matmul %41, %43, %cst_26 {dimension_numbers = #tpu.dot_dimension_numbers<[2], [2], [1], [1], [0, 0, 0, 1, 1, 1], [0], [0]>} : vector<2x8x32xbf16>, vector<2x8x32xbf16>, vector<2x8x8xf32> -> vector<2x8x8xf32>
    "tpu.trace_stop"() : () -> ()
    %cst_27 = arith.constant dense<0xFF800000> : vector<2x8xf32>
    %47 = vector.multi_reduction <maximumf>, %46, %cst_27 [2] : vector<2x8x8xf32> to vector<2x8xf32>
    %48 = vector.shape_cast %47 : vector<2x8xf32> to vector<2x8x1xf32>
    %49 = vector.broadcast %48 : vector<2x8x1xf32> to vector<2x8x8xf32>
    %50 = arith.subf %46, %49 : vector<2x8x8xf32>
    %51 = math.exp %50 : vector<2x8x8xf32>
    %cst_28 = arith.constant dense<0.000000e+00> : vector<2x8xf32>
    %52 = vector.multi_reduction <add>, %51, %cst_28 [2] : vector<2x8x8xf32> to vector<2x8xf32>
    %53 = vector.shape_cast %52 : vector<2x8xf32> to vector<2x8x1xf32>
    %54 = tpu.reciprocal %53 {approx = true} : vector<2x8x1xf32> -> vector<2x8x1xf32>
    %55 = vector.broadcast %54 : vector<2x8x1xf32> to vector<2x8x8xf32>
    %56 = arith.mulf %51, %55 : vector<2x8x8xf32>
    %57 = arith.truncf %56 : vector<2x8x8xf32> to vector<2x8x8xbf16>
    "tpu.trace_start"() <{level = 10 : i32, message = "bij,bjd->bid"}> : () -> ()
    %cst_29 = arith.constant dense<0.000000e+00> : vector<2x8x32xf32>
    %58 = tpu.matmul %57, %45, %cst_29 {dimension_numbers = #tpu.dot_dimension_numbers<[2], [1], [1], [2], [0, 0, 0, 1, 1, 2], [0], [0]>} : vector<2x8x8xbf16>, vector<2x8x32xbf16>, vector<2x8x32xf32> -> vector<2x8x32xf32>
    "tpu.trace_stop"() : () -> ()
    %59 = vector.shape_cast %58 : vector<2x8x32xf32> to vector<16x32xf32>
    %60 = vector.extract_strided_slice %35 {offsets = [0, 32], sizes = [16, 32], strides = [1, 1]} : vector<16x128xbf16> to vector<16x32xbf16>
    %61 = vector.shape_cast %60 : vector<16x32xbf16> to vector<2x8x32xbf16>
    %62 = vector.extract_strided_slice %37 {offsets = [0, 32], sizes = [16, 32], strides = [1, 1]} : vector<16x128xbf16> to vector<16x32xbf16>
    %63 = vector.shape_cast %62 : vector<16x32xbf16> to vector<2x8x32xbf16>
    %64 = vector.extract_strided_slice %39 {offsets = [0, 32], sizes = [16, 32], strides = [1, 1]} : vector<16x128xbf16> to vector<16x32xbf16>
    %65 = vector.shape_cast %64 : vector<16x32xbf16> to vector<2x8x32xbf16>
    "tpu.trace_start"() <{level = 10 : i32, message = "bid,bjd->bij"}> : () -> ()
    %cst_30 = arith.constant dense<0.000000e+00> : vector<2x8x8xf32>
    %66 = tpu.matmul %61, %63, %cst_30 {dimension_numbers = #tpu.dot_dimension_numbers<[2], [2], [1], [1], [0, 0, 0, 1, 1, 1], [0], [0]>} : vector<2x8x32xbf16>, vector<2x8x32xbf16>, vector<2x8x8xf32> -> vector<2x8x8xf32>
    "tpu.trace_stop"() : () -> ()
    %cst_31 = arith.constant dense<0xFF800000> : vector<2x8xf32>
    %67 = vector.multi_reduction <maximumf>, %66, %cst_31 [2] : vector<2x8x8xf32> to vector<2x8xf32>
    %68 = vector.shape_cast %67 : vector<2x8xf32> to vector<2x8x1xf32>
    %69 = vector.broadcast %68 : vector<2x8x1xf32> to vector<2x8x8xf32>
    %70 = arith.subf %66, %69 : vector<2x8x8xf32>
    %71 = math.exp %70 : vector<2x8x8xf32>
    %cst_32 = arith.constant dense<0.000000e+00> : vector<2x8xf32>
    %72 = vector.multi_reduction <add>, %71, %cst_32 [2] : vector<2x8x8xf32> to vector<2x8xf32>
    %73 = vector.shape_cast %72 : vector<2x8xf32> to vector<2x8x1xf32>
    %74 = tpu.reciprocal %73 {approx = true} : vector<2x8x1xf32> -> vector<2x8x1xf32>
    %75 = vector.broadcast %74 : vector<2x8x1xf32> to vector<2x8x8xf32>
    %76 = arith.mulf %71, %75 : vector<2x8x8xf32>
    %77 = arith.truncf %76 : vector<2x8x8xf32> to vector<2x8x8xbf16>
    "tpu.trace_start"() <{level = 10 : i32, message = "bij,bjd->bid"}> : () -> ()
    %cst_33 = arith.constant dense<0.000000e+00> : vector<2x8x32xf32>
    %78 = tpu.matmul %77, %65, %cst_33 {dimension_numbers = #tpu.dot_dimension_numbers<[2], [1], [1], [2], [0, 0, 0, 1, 1, 2], [0], [0]>} : vector<2x8x8xbf16>, vector<2x8x32xbf16>, vector<2x8x32xf32> -> vector<2x8x32xf32>
    "tpu.trace_stop"() : () -> ()
    %79 = vector.shape_cast %78 : vector<2x8x32xf32> to vector<16x32xf32>
    %80 = vector.extract_strided_slice %35 {offsets = [0, 64], sizes = [16, 32], strides = [1, 1]} : vector<16x128xbf16> to vector<16x32xbf16>
    %81 = vector.shape_cast %80 : vector<16x32xbf16> to vector<2x8x32xbf16>
    %82 = vector.extract_strided_slice %37 {offsets = [0, 64], sizes = [16, 32], strides = [1, 1]} : vector<16x128xbf16> to vector<16x32xbf16>
    %83 = vector.shape_cast %82 : vector<16x32xbf16> to vector<2x8x32xbf16>
    %84 = vector.extract_strided_slice %39 {offsets = [0, 64], sizes = [16, 32], strides = [1, 1]} : vector<16x128xbf16> to vector<16x32xbf16>
    %85 = vector.shape_cast %84 : vector<16x32xbf16> to vector<2x8x32xbf16>
    "tpu.trace_start"() <{level = 10 : i32, message = "bid,bjd->bij"}> : () -> ()
    %cst_34 = arith.constant dense<0.000000e+00> : vector<2x8x8xf32>
    %86 = tpu.matmul %81, %83, %cst_34 {dimension_numbers = #tpu.dot_dimension_numbers<[2], [2], [1], [1], [0, 0, 0, 1, 1, 1], [0], [0]>} : vector<2x8x32xbf16>, vector<2x8x32xbf16>, vector<2x8x8xf32> -> vector<2x8x8xf32>
    "tpu.trace_stop"() : () -> ()
    %cst_35 = arith.constant dense<0xFF800000> : vector<2x8xf32>
    %87 = vector.multi_reduction <maximumf>, %86, %cst_35 [2] : vector<2x8x8xf32> to vector<2x8xf32>
    %88 = vector.shape_cast %87 : vector<2x8xf32> to vector<2x8x1xf32>
    %89 = vector.broadcast %88 : vector<2x8x1xf32> to vector<2x8x8xf32>
    %90 = arith.subf %86, %89 : vector<2x8x8xf32>
    %91 = math.exp %90 : vector<2x8x8xf32>
    %cst_36 = arith.constant dense<0.000000e+00> : vector<2x8xf32>
    %92 = vector.multi_reduction <add>, %91, %cst_36 [2] : vector<2x8x8xf32> to vector<2x8xf32>
    %93 = vector.shape_cast %92 : vector<2x8xf32> to vector<2x8x1xf32>
    %94 = tpu.reciprocal %93 {approx = true} : vector<2x8x1xf32> -> vector<2x8x1xf32>
    %95 = vector.broadcast %94 : vector<2x8x1xf32> to vector<2x8x8xf32>
    %96 = arith.mulf %91, %95 : vector<2x8x8xf32>
    %97 = arith.truncf %96 : vector<2x8x8xf32> to vector<2x8x8xbf16>
    "tpu.trace_start"() <{level = 10 : i32, message = "bij,bjd->bid"}> : () -> ()
    %cst_37 = arith.constant dense<0.000000e+00> : vector<2x8x32xf32>
    %98 = tpu.matmul %97, %85, %cst_37 {dimension_numbers = #tpu.dot_dimension_numbers<[2], [1], [1], [2], [0, 0, 0, 1, 1, 2], [0], [0]>} : vector<2x8x8xbf16>, vector<2x8x32xbf16>, vector<2x8x32xf32> -> vector<2x8x32xf32>
    "tpu.trace_stop"() : () -> ()
    %99 = vector.shape_cast %98 : vector<2x8x32xf32> to vector<16x32xf32>
    %100 = vector.extract_strided_slice %35 {offsets = [0, 96], sizes = [16, 32], strides = [1, 1]} : vector<16x128xbf16> to vector<16x32xbf16>
    %101 = vector.shape_cast %100 : vector<16x32xbf16> to vector<2x8x32xbf16>
    %102 = vector.extract_strided_slice %37 {offsets = [0, 96], sizes = [16, 32], strides = [1, 1]} : vector<16x128xbf16> to vector<16x32xbf16>
    %103 = vector.shape_cast %102 : vector<16x32xbf16> to vector<2x8x32xbf16>
    %104 = vector.extract_strided_slice %39 {offsets = [0, 96], sizes = [16, 32], strides = [1, 1]} : vector<16x128xbf16> to vector<16x32xbf16>
    %105 = vector.shape_cast %104 : vector<16x32xbf16> to vector<2x8x32xbf16>
    "tpu.trace_start"() <{level = 10 : i32, message = "bid,bjd->bij"}> : () -> ()
    %cst_38 = arith.constant dense<0.000000e+00> : vector<2x8x8xf32>
    %106 = tpu.matmul %101, %103, %cst_38 {dimension_numbers = #tpu.dot_dimension_numbers<[2], [2], [1], [1], [0, 0, 0, 1, 1, 1], [0], [0]>} : vector<2x8x32xbf16>, vector<2x8x32xbf16>, vector<2x8x8xf32> -> vector<2x8x8xf32>
    "tpu.trace_stop"() : () -> ()
    %cst_39 = arith.constant dense<0xFF800000> : vector<2x8xf32>
    %107 = vector.multi_reduction <maximumf>, %106, %cst_39 [2] : vector<2x8x8xf32> to vector<2x8xf32>
    %108 = vector.shape_cast %107 : vector<2x8xf32> to vector<2x8x1xf32>
    %109 = vector.broadcast %108 : vector<2x8x1xf32> to vector<2x8x8xf32>
    %110 = arith.subf %106, %109 : vector<2x8x8xf32>
    %111 = math.exp %110 : vector<2x8x8xf32>
    %cst_40 = arith.constant dense<0.000000e+00> : vector<2x8xf32>
    %112 = vector.multi_reduction <add>, %111, %cst_40 [2] : vector<2x8x8xf32> to vector<2x8xf32>
    %113 = vector.shape_cast %112 : vector<2x8xf32> to vector<2x8x1xf32>
    %114 = tpu.reciprocal %113 {approx = true} : vector<2x8x1xf32> -> vector<2x8x1xf32>
    %115 = vector.broadcast %114 : vector<2x8x1xf32> to vector<2x8x8xf32>
    %116 = arith.mulf %111, %115 : vector<2x8x8xf32>
    %117 = arith.truncf %116 : vector<2x8x8xf32> to vector<2x8x8xbf16>
    "tpu.trace_start"() <{level = 10 : i32, message = "bij,bjd->bid"}> : () -> ()
    %cst_41 = arith.constant dense<0.000000e+00> : vector<2x8x32xf32>
    %118 = tpu.matmul %117, %105, %cst_41 {dimension_numbers = #tpu.dot_dimension_numbers<[2], [1], [1], [2], [0, 0, 0, 1, 1, 2], [0], [0]>} : vector<2x8x8xbf16>, vector<2x8x32xbf16>, vector<2x8x32xf32> -> vector<2x8x32xf32>
    "tpu.trace_stop"() : () -> ()
    %119 = vector.shape_cast %118 : vector<2x8x32xf32> to vector<16x32xf32>
    %120 = tpu.concatenate %59, %79, %99, %119 in 1 : vector<16x32xf32>, vector<16x32xf32>, vector<16x32xf32>, vector<16x32xf32> -> vector<16x128xf32>
    %121 = arith.truncf %120 : vector<16x128xf32> to vector<16x128xbf16>
    %cst_42 = arith.constant dense<0.000000e+00> : vector<16x128xf32>
    %122 = tpu.matmul %121, %17, %cst_42 {dimension_numbers = #tpu.dot_dimension_numbers<[1], [0], [0], [1], [0, 0, 1, 1], [], []>} : vector<16x128xbf16>, vector<128x128xbf16>, vector<16x128xf32> -> vector<16x128xf32>
    %123 = vector.broadcast %20 : vector<1x128xf32> to vector<16x128xf32>
    %124 = arith.addf %122, %123 : vector<16x128xf32>
    %125 = arith.addf %15, %124 : vector<16x128xf32>
    %cst_43 = arith.constant dense<0.000000e+00> : vector<16xf32>
    %126 = vector.multi_reduction <add>, %125, %cst_43 [1] : vector<16x128xf32> to vector<16xf32>
    %127 = vector.shape_cast %126 : vector<16xf32> to vector<16x1xf32>
    %cst_44 = arith.constant 1.280000e+02 : f32
    %128 = vector.broadcast %cst_44 : f32 to vector<16x1xf32>
    %129 = arith.divf %127, %128 : vector<16x1xf32>
    %130 = vector.broadcast %129 : vector<16x1xf32> to vector<16x128xf32>
    %131 = arith.subf %125, %130 : vector<16x128xf32>
    %132 = arith.mulf %131, %131 : vector<16x128xf32>
    %cst_45 = arith.constant dense<0.000000e+00> : vector<16xf32>
    %133 = vector.multi_reduction <add>, %132, %cst_45 [1] : vector<16x128xf32> to vector<16xf32>
    %134 = vector.shape_cast %133 : vector<16xf32> to vector<16x1xf32>
    %cst_46 = arith.constant 1.280000e+02 : f32
    %135 = vector.broadcast %cst_46 : f32 to vector<16x1xf32>
    %136 = arith.divf %134, %135 : vector<16x1xf32>
    %137 = vector.broadcast %129 : vector<16x1xf32> to vector<16x128xf32>
    %138 = arith.subf %125, %137 : vector<16x128xf32>
    %cst_47 = arith.constant 9.99999974E-6 : f32
    %139 = vector.broadcast %cst_47 : f32 to vector<16x1xf32>
    %140 = arith.addf %136, %139 : vector<16x1xf32>
    %141 = math.rsqrt %140 : vector<16x1xf32>
    %142 = vector.broadcast %141 : vector<16x1xf32> to vector<16x128xf32>
    %143 = arith.mulf %138, %142 : vector<16x128xf32>
    %144 = vector.broadcast %21 : vector<1x128xf32> to vector<16x128xf32>
    %145 = arith.mulf %143, %144 : vector<16x128xf32>
    %146 = vector.broadcast %22 : vector<1x128xf32> to vector<16x128xf32>
    %147 = arith.addf %145, %146 : vector<16x128xf32>
    %148 = arith.truncf %147 : vector<16x128xf32> to vector<16x128xbf16>
    %cst_48 = arith.constant dense<0.000000e+00> : vector<16x512xf32>
    %149 = tpu.matmul %148, %18, %cst_48 {dimension_numbers = #tpu.dot_dimension_numbers<[1], [0], [0], [1], [0, 0, 1, 1], [], []>} : vector<16x128xbf16>, vector<128x512xbf16>, vector<16x512xf32> -> vector<16x512xf32>
    %150 = vector.broadcast %23 : vector<1x512xf32> to vector<16x512xf32>
    %151 = arith.addf %149, %150 : vector<16x512xf32>
    %cst_49 = arith.constant 0.000000e+00 : f32
    %152 = vector.broadcast %cst_49 : f32 to vector<16x512xf32>
    %153 = arith.maximumf %151, %152 : vector<16x512xf32>
    %154 = arith.truncf %153 : vector<16x512xf32> to vector<16x512xbf16>
    %cst_50 = arith.constant dense<0.000000e+00> : vector<16x128xf32>
    %155 = tpu.matmul %154, %27, %cst_50 {dimension_numbers = #tpu.dot_dimension_numbers<[1], [0], [0], [1], [0, 0, 1, 1], [], []>} : vector<16x512xbf16>, vector<512x128xbf16>, vector<16x128xf32> -> vector<16x128xf32>
    %156 = vector.broadcast %24 : vector<1x128xf32> to vector<16x128xf32>
    %157 = arith.addf %155, %156 : vector<16x128xf32>
    %158 = arith.addf %147, %157 : vector<16x128xf32>
    %cst_51 = arith.constant dense<0.000000e+00> : vector<16xf32>
    %159 = vector.multi_reduction <add>, %158, %cst_51 [1] : vector<16x128xf32> to vector<16xf32>
    %160 = vector.shape_cast %159 : vector<16xf32> to vector<16x1xf32>
    %cst_52 = arith.constant 1.280000e+02 : f32
    %161 = vector.broadcast %cst_52 : f32 to vector<16x1xf32>
    %162 = arith.divf %160, %161 : vector<16x1xf32>
    %163 = vector.broadcast %162 : vector<16x1xf32> to vector<16x128xf32>
    %164 = arith.subf %158, %163 : vector<16x128xf32>
    %165 = arith.mulf %164, %164 : vector<16x128xf32>
    %cst_53 = arith.constant dense<0.000000e+00> : vector<16xf32>
    %166 = vector.multi_reduction <add>, %165, %cst_53 [1] : vector<16x128xf32> to vector<16xf32>
    %167 = vector.shape_cast %166 : vector<16xf32> to vector<16x1xf32>
    %cst_54 = arith.constant 1.280000e+02 : f32
    %168 = vector.broadcast %cst_54 : f32 to vector<16x1xf32>
    %169 = arith.divf %167, %168 : vector<16x1xf32>
    %170 = vector.broadcast %162 : vector<16x1xf32> to vector<16x128xf32>
    %171 = arith.subf %158, %170 : vector<16x128xf32>
    %cst_55 = arith.constant 9.99999974E-6 : f32
    %172 = vector.broadcast %cst_55 : f32 to vector<16x1xf32>
    %173 = arith.addf %169, %172 : vector<16x1xf32>
    %174 = math.rsqrt %173 : vector<16x1xf32>
    %175 = vector.broadcast %174 : vector<16x1xf32> to vector<16x128xf32>
    %176 = arith.mulf %171, %175 : vector<16x128xf32>
    %177 = vector.broadcast %25 : vector<1x128xf32> to vector<16x128xf32>
    %178 = arith.mulf %176, %177 : vector<16x128xf32>
    %179 = vector.broadcast %26 : vector<1x128xf32> to vector<16x128xf32>
    %180 = arith.addf %178, %179 : vector<16x128xf32>
    %c0_56 = arith.constant 0 : index
    %c1024 = arith.constant 1024 : index
    %181 = vector.load %arg3[%c0_56, %c1024] : memref<128x2176xbf16, #tpu.memory_space<vmem>>, vector<128x384xbf16>
    %c0_57 = arith.constant 0 : index
    %c1408_58 = arith.constant 1408 : index
    %182 = vector.load %arg3[%c0_57, %c1408_58] : memref<128x2176xbf16, #tpu.memory_space<vmem>>, vector<128x128xbf16>
    %c0_59 = arith.constant 0 : index
    %c1536_60 = arith.constant 1536 : index
    %183 = vector.load %arg3[%c0_59, %c1536_60] : memref<128x2176xbf16, #tpu.memory_space<vmem>>, vector<128x512xbf16>
    %c0_61 = arith.constant 0 : index
    %c1664 = arith.constant 1664 : index
    %184 = vector.load %arg5[%c0_61, %c1664] : memref<1x3456xf32, #tpu.memory_space<vmem>>, vector<1x384xf32>
    %c0_62 = arith.constant 0 : index
    %c2048 = arith.constant 2048 : index
    %185 = vector.load %arg5[%c0_62, %c2048] : memref<1x3456xf32, #tpu.memory_space<vmem>>, vector<1x128xf32>
    %c0_63 = arith.constant 0 : index
    %c2176 = arith.constant 2176 : index
    %186 = vector.load %arg5[%c0_63, %c2176] : memref<1x3456xf32, #tpu.memory_space<vmem>>, vector<1x128xf32>
    %c0_64 = arith.constant 0 : index
    %c2304 = arith.constant 2304 : index
    %187 = vector.load %arg5[%c0_64, %c2304] : memref<1x3456xf32, #tpu.memory_space<vmem>>, vector<1x128xf32>
    %c0_65 = arith.constant 0 : index
    %c2432 = arith.constant 2432 : index
    %188 = vector.load %arg5[%c0_65, %c2432] : memref<1x3456xf32, #tpu.memory_space<vmem>>, vector<1x512xf32>
    %c0_66 = arith.constant 0 : index
    %c2944 = arith.constant 2944 : index
    %189 = vector.load %arg5[%c0_66, %c2944] : memref<1x3456xf32, #tpu.memory_space<vmem>>, vector<1x128xf32>
    %c0_67 = arith.constant 0 : index
    %c3072 = arith.constant 3072 : index
    %190 = vector.load %arg5[%c0_67, %c3072] : memref<1x3456xf32, #tpu.memory_space<vmem>>, vector<1x128xf32>
    %c0_68 = arith.constant 0 : index
    %c3200 = arith.constant 3200 : index
    %191 = vector.load %arg5[%c0_68, %c3200] : memref<1x3456xf32, #tpu.memory_space<vmem>>, vector<1x128xf32>
    %c0_69 = arith.constant 0 : index
    %c128 = arith.constant 128 : index
    %192 = vector.load %arg4[%c0_69, %c128] : memref<512x256xbf16, #tpu.memory_space<vmem>>, vector<512x128xbf16>
    %193 = arith.truncf %180 : vector<16x128xf32> to vector<16x128xbf16>
    %cst_70 = arith.constant dense<0.000000e+00> : vector<16x384xf32>
    %194 = tpu.matmul %193, %181, %cst_70 {dimension_numbers = #tpu.dot_dimension_numbers<[1], [0], [0], [1], [0, 0, 1, 1], [], []>} : vector<16x128xbf16>, vector<128x384xbf16>, vector<16x384xf32> -> vector<16x384xf32>
    %195 = vector.broadcast %184 : vector<1x384xf32> to vector<16x384xf32>
    %196 = arith.addf %194, %195 : vector<16x384xf32>
    %197 = vector.extract_strided_slice %196 {offsets = [0, 0], sizes = [16, 128], strides = [1, 1]} : vector<16x384xf32> to vector<16x128xf32>
    %cst_71 = arith.constant 0.176776692 : f32
    %198 = vector.broadcast %cst_71 : f32 to vector<16x128xf32>
    %199 = arith.mulf %197, %198 : vector<16x128xf32>
    %200 = arith.truncf %199 : vector<16x128xf32> to vector<16x128xbf16>
    %201 = vector.extract_strided_slice %196 {offsets = [0, 128], sizes = [16, 128], strides = [1, 1]} : vector<16x384xf32> to vector<16x128xf32>
    %202 = arith.truncf %201 : vector<16x128xf32> to vector<16x128xbf16>
    %203 = vector.extract_strided_slice %196 {offsets = [0, 256], sizes = [16, 128], strides = [1, 1]} : vector<16x384xf32> to vector<16x128xf32>
    %204 = arith.truncf %203 : vector<16x128xf32> to vector<16x128xbf16>
    %205 = vector.extract_strided_slice %200 {offsets = [0, 0], sizes = [16, 32], strides = [1, 1]} : vector<16x128xbf16> to vector<16x32xbf16>
    %206 = vector.shape_cast %205 : vector<16x32xbf16> to vector<2x8x32xbf16>
    %207 = vector.extract_strided_slice %202 {offsets = [0, 0], sizes = [16, 32], strides = [1, 1]} : vector<16x128xbf16> to vector<16x32xbf16>
    %208 = vector.shape_cast %207 : vector<16x32xbf16> to vector<2x8x32xbf16>
    %209 = vector.extract_strided_slice %204 {offsets = [0, 0], sizes = [16, 32], strides = [1, 1]} : vector<16x128xbf16> to vector<16x32xbf16>
    %210 = vector.shape_cast %209 : vector<16x32xbf16> to vector<2x8x32xbf16>
    "tpu.trace_start"() <{level = 10 : i32, message = "bid,bjd->bij"}> : () -> ()
    %cst_72 = arith.constant dense<0.000000e+00> : vector<2x8x8xf32>
    %211 = tpu.matmul %206, %208, %cst_72 {dimension_numbers = #tpu.dot_dimension_numbers<[2], [2], [1], [1], [0, 0, 0, 1, 1, 1], [0], [0]>} : vector<2x8x32xbf16>, vector<2x8x32xbf16>, vector<2x8x8xf32> -> vector<2x8x8xf32>
    "tpu.trace_stop"() : () -> ()
    %cst_73 = arith.constant dense<0xFF800000> : vector<2x8xf32>
    %212 = vector.multi_reduction <maximumf>, %211, %cst_73 [2] : vector<2x8x8xf32> to vector<2x8xf32>
    %213 = vector.shape_cast %212 : vector<2x8xf32> to vector<2x8x1xf32>
    %214 = vector.broadcast %213 : vector<2x8x1xf32> to vector<2x8x8xf32>
    %215 = arith.subf %211, %214 : vector<2x8x8xf32>
    %216 = math.exp %215 : vector<2x8x8xf32>
    %cst_74 = arith.constant dense<0.000000e+00> : vector<2x8xf32>
    %217 = vector.multi_reduction <add>, %216, %cst_74 [2] : vector<2x8x8xf32> to vector<2x8xf32>
    %218 = vector.shape_cast %217 : vector<2x8xf32> to vector<2x8x1xf32>
    %219 = tpu.reciprocal %218 {approx = true} : vector<2x8x1xf32> -> vector<2x8x1xf32>
    %220 = vector.broadcast %219 : vector<2x8x1xf32> to vector<2x8x8xf32>
    %221 = arith.mulf %216, %220 : vector<2x8x8xf32>
    %222 = arith.truncf %221 : vector<2x8x8xf32> to vector<2x8x8xbf16>
    "tpu.trace_start"() <{level = 10 : i32, message = "bij,bjd->bid"}> : () -> ()
    %cst_75 = arith.constant dense<0.000000e+00> : vector<2x8x32xf32>
    %223 = tpu.matmul %222, %210, %cst_75 {dimension_numbers = #tpu.dot_dimension_numbers<[2], [1], [1], [2], [0, 0, 0, 1, 1, 2], [0], [0]>} : vector<2x8x8xbf16>, vector<2x8x32xbf16>, vector<2x8x32xf32> -> vector<2x8x32xf32>
    "tpu.trace_stop"() : () -> ()
    %224 = vector.shape_cast %223 : vector<2x8x32xf32> to vector<16x32xf32>
    %225 = vector.extract_strided_slice %200 {offsets = [0, 32], sizes = [16, 32], strides = [1, 1]} : vector<16x128xbf16> to vector<16x32xbf16>
    %226 = vector.shape_cast %225 : vector<16x32xbf16> to vector<2x8x32xbf16>
    %227 = vector.extract_strided_slice %202 {offsets = [0, 32], sizes = [16, 32], strides = [1, 1]} : vector<16x128xbf16> to vector<16x32xbf16>
    %228 = vector.shape_cast %227 : vector<16x32xbf16> to vector<2x8x32xbf16>
    %229 = vector.extract_strided_slice %204 {offsets = [0, 32], sizes = [16, 32], strides = [1, 1]} : vector<16x128xbf16> to vector<16x32xbf16>
    %230 = vector.shape_cast %229 : vector<16x32xbf16> to vector<2x8x32xbf16>
    "tpu.trace_start"() <{level = 10 : i32, message = "bid,bjd->bij"}> : () -> ()
    %cst_76 = arith.constant dense<0.000000e+00> : vector<2x8x8xf32>
    %231 = tpu.matmul %226, %228, %cst_76 {dimension_numbers = #tpu.dot_dimension_numbers<[2], [2], [1], [1], [0, 0, 0, 1, 1, 1], [0], [0]>} : vector<2x8x32xbf16>, vector<2x8x32xbf16>, vector<2x8x8xf32> -> vector<2x8x8xf32>
    "tpu.trace_stop"() : () -> ()
    %cst_77 = arith.constant dense<0xFF800000> : vector<2x8xf32>
    %232 = vector.multi_reduction <maximumf>, %231, %cst_77 [2] : vector<2x8x8xf32> to vector<2x8xf32>
    %233 = vector.shape_cast %232 : vector<2x8xf32> to vector<2x8x1xf32>
    %234 = vector.broadcast %233 : vector<2x8x1xf32> to vector<2x8x8xf32>
    %235 = arith.subf %231, %234 : vector<2x8x8xf32>
    %236 = math.exp %235 : vector<2x8x8xf32>
    %cst_78 = arith.constant dense<0.000000e+00> : vector<2x8xf32>
    %237 = vector.multi_reduction <add>, %236, %cst_78 [2] : vector<2x8x8xf32> to vector<2x8xf32>
    %238 = vector.shape_cast %237 : vector<2x8xf32> to vector<2x8x1xf32>
    %239 = tpu.reciprocal %238 {approx = true} : vector<2x8x1xf32> -> vector<2x8x1xf32>
    %240 = vector.broadcast %239 : vector<2x8x1xf32> to vector<2x8x8xf32>
    %241 = arith.mulf %236, %240 : vector<2x8x8xf32>
    %242 = arith.truncf %241 : vector<2x8x8xf32> to vector<2x8x8xbf16>
    "tpu.trace_start"() <{level = 10 : i32, message = "bij,bjd->bid"}> : () -> ()
    %cst_79 = arith.constant dense<0.000000e+00> : vector<2x8x32xf32>
    %243 = tpu.matmul %242, %230, %cst_79 {dimension_numbers = #tpu.dot_dimension_numbers<[2], [1], [1], [2], [0, 0, 0, 1, 1, 2], [0], [0]>} : vector<2x8x8xbf16>, vector<2x8x32xbf16>, vector<2x8x32xf32> -> vector<2x8x32xf32>
    "tpu.trace_stop"() : () -> ()
    %244 = vector.shape_cast %243 : vector<2x8x32xf32> to vector<16x32xf32>
    %245 = vector.extract_strided_slice %200 {offsets = [0, 64], sizes = [16, 32], strides = [1, 1]} : vector<16x128xbf16> to vector<16x32xbf16>
    %246 = vector.shape_cast %245 : vector<16x32xbf16> to vector<2x8x32xbf16>
    %247 = vector.extract_strided_slice %202 {offsets = [0, 64], sizes = [16, 32], strides = [1, 1]} : vector<16x128xbf16> to vector<16x32xbf16>
    %248 = vector.shape_cast %247 : vector<16x32xbf16> to vector<2x8x32xbf16>
    %249 = vector.extract_strided_slice %204 {offsets = [0, 64], sizes = [16, 32], strides = [1, 1]} : vector<16x128xbf16> to vector<16x32xbf16>
    %250 = vector.shape_cast %249 : vector<16x32xbf16> to vector<2x8x32xbf16>
    "tpu.trace_start"() <{level = 10 : i32, message = "bid,bjd->bij"}> : () -> ()
    %cst_80 = arith.constant dense<0.000000e+00> : vector<2x8x8xf32>
    %251 = tpu.matmul %246, %248, %cst_80 {dimension_numbers = #tpu.dot_dimension_numbers<[2], [2], [1], [1], [0, 0, 0, 1, 1, 1], [0], [0]>} : vector<2x8x32xbf16>, vector<2x8x32xbf16>, vector<2x8x8xf32> -> vector<2x8x8xf32>
    "tpu.trace_stop"() : () -> ()
    %cst_81 = arith.constant dense<0xFF800000> : vector<2x8xf32>
    %252 = vector.multi_reduction <maximumf>, %251, %cst_81 [2] : vector<2x8x8xf32> to vector<2x8xf32>
    %253 = vector.shape_cast %252 : vector<2x8xf32> to vector<2x8x1xf32>
    %254 = vector.broadcast %253 : vector<2x8x1xf32> to vector<2x8x8xf32>
    %255 = arith.subf %251, %254 : vector<2x8x8xf32>
    %256 = math.exp %255 : vector<2x8x8xf32>
    %cst_82 = arith.constant dense<0.000000e+00> : vector<2x8xf32>
    %257 = vector.multi_reduction <add>, %256, %cst_82 [2] : vector<2x8x8xf32> to vector<2x8xf32>
    %258 = vector.shape_cast %257 : vector<2x8xf32> to vector<2x8x1xf32>
    %259 = tpu.reciprocal %258 {approx = true} : vector<2x8x1xf32> -> vector<2x8x1xf32>
    %260 = vector.broadcast %259 : vector<2x8x1xf32> to vector<2x8x8xf32>
    %261 = arith.mulf %256, %260 : vector<2x8x8xf32>
    %262 = arith.truncf %261 : vector<2x8x8xf32> to vector<2x8x8xbf16>
    "tpu.trace_start"() <{level = 10 : i32, message = "bij,bjd->bid"}> : () -> ()
    %cst_83 = arith.constant dense<0.000000e+00> : vector<2x8x32xf32>
    %263 = tpu.matmul %262, %250, %cst_83 {dimension_numbers = #tpu.dot_dimension_numbers<[2], [1], [1], [2], [0, 0, 0, 1, 1, 2], [0], [0]>} : vector<2x8x8xbf16>, vector<2x8x32xbf16>, vector<2x8x32xf32> -> vector<2x8x32xf32>
    "tpu.trace_stop"() : () -> ()
    %264 = vector.shape_cast %263 : vector<2x8x32xf32> to vector<16x32xf32>
    %265 = vector.extract_strided_slice %200 {offsets = [0, 96], sizes = [16, 32], strides = [1, 1]} : vector<16x128xbf16> to vector<16x32xbf16>
    %266 = vector.shape_cast %265 : vector<16x32xbf16> to vector<2x8x32xbf16>
    %267 = vector.extract_strided_slice %202 {offsets = [0, 96], sizes = [16, 32], strides = [1, 1]} : vector<16x128xbf16> to vector<16x32xbf16>
    %268 = vector.shape_cast %267 : vector<16x32xbf16> to vector<2x8x32xbf16>
    %269 = vector.extract_strided_slice %204 {offsets = [0, 96], sizes = [16, 32], strides = [1, 1]} : vector<16x128xbf16> to vector<16x32xbf16>
    %270 = vector.shape_cast %269 : vector<16x32xbf16> to vector<2x8x32xbf16>
    "tpu.trace_start"() <{level = 10 : i32, message = "bid,bjd->bij"}> : () -> ()
    %cst_84 = arith.constant dense<0.000000e+00> : vector<2x8x8xf32>
    %271 = tpu.matmul %266, %268, %cst_84 {dimension_numbers = #tpu.dot_dimension_numbers<[2], [2], [1], [1], [0, 0, 0, 1, 1, 1], [0], [0]>} : vector<2x8x32xbf16>, vector<2x8x32xbf16>, vector<2x8x8xf32> -> vector<2x8x8xf32>
    "tpu.trace_stop"() : () -> ()
    %cst_85 = arith.constant dense<0xFF800000> : vector<2x8xf32>
    %272 = vector.multi_reduction <maximumf>, %271, %cst_85 [2] : vector<2x8x8xf32> to vector<2x8xf32>
    %273 = vector.shape_cast %272 : vector<2x8xf32> to vector<2x8x1xf32>
    %274 = vector.broadcast %273 : vector<2x8x1xf32> to vector<2x8x8xf32>
    %275 = arith.subf %271, %274 : vector<2x8x8xf32>
    %276 = math.exp %275 : vector<2x8x8xf32>
    %cst_86 = arith.constant dense<0.000000e+00> : vector<2x8xf32>
    %277 = vector.multi_reduction <add>, %276, %cst_86 [2] : vector<2x8x8xf32> to vector<2x8xf32>
    %278 = vector.shape_cast %277 : vector<2x8xf32> to vector<2x8x1xf32>
    %279 = tpu.reciprocal %278 {approx = true} : vector<2x8x1xf32> -> vector<2x8x1xf32>
    %280 = vector.broadcast %279 : vector<2x8x1xf32> to vector<2x8x8xf32>
    %281 = arith.mulf %276, %280 : vector<2x8x8xf32>
    %282 = arith.truncf %281 : vector<2x8x8xf32> to vector<2x8x8xbf16>
    "tpu.trace_start"() <{level = 10 : i32, message = "bij,bjd->bid"}> : () -> ()
    %cst_87 = arith.constant dense<0.000000e+00> : vector<2x8x32xf32>
    %283 = tpu.matmul %282, %270, %cst_87 {dimension_numbers = #tpu.dot_dimension_numbers<[2], [1], [1], [2], [0, 0, 0, 1, 1, 2], [0], [0]>} : vector<2x8x8xbf16>, vector<2x8x32xbf16>, vector<2x8x32xf32> -> vector<2x8x32xf32>
    "tpu.trace_stop"() : () -> ()
    %284 = vector.shape_cast %283 : vector<2x8x32xf32> to vector<16x32xf32>
    %285 = tpu.concatenate %224, %244, %264, %284 in 1 : vector<16x32xf32>, vector<16x32xf32>, vector<16x32xf32>, vector<16x32xf32> -> vector<16x128xf32>
    %286 = arith.truncf %285 : vector<16x128xf32> to vector<16x128xbf16>
    %cst_88 = arith.constant dense<0.000000e+00> : vector<16x128xf32>
    %287 = tpu.matmul %286, %182, %cst_88 {dimension_numbers = #tpu.dot_dimension_numbers<[1], [0], [0], [1], [0, 0, 1, 1], [], []>} : vector<16x128xbf16>, vector<128x128xbf16>, vector<16x128xf32> -> vector<16x128xf32>
    %288 = vector.broadcast %185 : vector<1x128xf32> to vector<16x128xf32>
    %289 = arith.addf %287, %288 : vector<16x128xf32>
    %290 = arith.addf %180, %289 : vector<16x128xf32>
    %cst_89 = arith.constant dense<0.000000e+00> : vector<16xf32>
    %291 = vector.multi_reduction <add>, %290, %cst_89 [1] : vector<16x128xf32> to vector<16xf32>
    %292 = vector.shape_cast %291 : vector<16xf32> to vector<16x1xf32>
    %cst_90 = arith.constant 1.280000e+02 : f32
    %293 = vector.broadcast %cst_90 : f32 to vector<16x1xf32>
    %294 = arith.divf %292, %293 : vector<16x1xf32>
    %295 = vector.broadcast %294 : vector<16x1xf32> to vector<16x128xf32>
    %296 = arith.subf %290, %295 : vector<16x128xf32>
    %297 = arith.mulf %296, %296 : vector<16x128xf32>
    %cst_91 = arith.constant dense<0.000000e+00> : vector<16xf32>
    %298 = vector.multi_reduction <add>, %297, %cst_91 [1] : vector<16x128xf32> to vector<16xf32>
    %299 = vector.shape_cast %298 : vector<16xf32> to vector<16x1xf32>
    %cst_92 = arith.constant 1.280000e+02 : f32
    %300 = vector.broadcast %cst_92 : f32 to vector<16x1xf32>
    %301 = arith.divf %299, %300 : vector<16x1xf32>
    %302 = vector.broadcast %294 : vector<16x1xf32> to vector<16x128xf32>
    %303 = arith.subf %290, %302 : vector<16x128xf32>
    %cst_93 = arith.constant 9.99999974E-6 : f32
    %304 = vector.broadcast %cst_93 : f32 to vector<16x1xf32>
    %305 = arith.addf %301, %304 : vector<16x1xf32>
    %306 = math.rsqrt %305 : vector<16x1xf32>
    %307 = vector.broadcast %306 : vector<16x1xf32> to vector<16x128xf32>
    %308 = arith.mulf %303, %307 : vector<16x128xf32>
    %309 = vector.broadcast %186 : vector<1x128xf32> to vector<16x128xf32>
    %310 = arith.mulf %308, %309 : vector<16x128xf32>
    %311 = vector.broadcast %187 : vector<1x128xf32> to vector<16x128xf32>
    %312 = arith.addf %310, %311 : vector<16x128xf32>
    %313 = arith.truncf %312 : vector<16x128xf32> to vector<16x128xbf16>
    %cst_94 = arith.constant dense<0.000000e+00> : vector<16x512xf32>
    %314 = tpu.matmul %313, %183, %cst_94 {dimension_numbers = #tpu.dot_dimension_numbers<[1], [0], [0], [1], [0, 0, 1, 1], [], []>} : vector<16x128xbf16>, vector<128x512xbf16>, vector<16x512xf32> -> vector<16x512xf32>
    %315 = vector.broadcast %188 : vector<1x512xf32> to vector<16x512xf32>
    %316 = arith.addf %314, %315 : vector<16x512xf32>
    %cst_95 = arith.constant 0.000000e+00 : f32
    %317 = vector.broadcast %cst_95 : f32 to vector<16x512xf32>
    %318 = arith.maximumf %316, %317 : vector<16x512xf32>
    %319 = arith.truncf %318 : vector<16x512xf32> to vector<16x512xbf16>
    %cst_96 = arith.constant dense<0.000000e+00> : vector<16x128xf32>
    %320 = tpu.matmul %319, %192, %cst_96 {dimension_numbers = #tpu.dot_dimension_numbers<[1], [0], [0], [1], [0, 0, 1, 1], [], []>} : vector<16x512xbf16>, vector<512x128xbf16>, vector<16x128xf32> -> vector<16x128xf32>
    %321 = vector.broadcast %189 : vector<1x128xf32> to vector<16x128xf32>
    %322 = arith.addf %320, %321 : vector<16x128xf32>
    %323 = arith.addf %312, %322 : vector<16x128xf32>
    %cst_97 = arith.constant dense<0.000000e+00> : vector<16xf32>
    %324 = vector.multi_reduction <add>, %323, %cst_97 [1] : vector<16x128xf32> to vector<16xf32>
    %325 = vector.shape_cast %324 : vector<16xf32> to vector<16x1xf32>
    %cst_98 = arith.constant 1.280000e+02 : f32
    %326 = vector.broadcast %cst_98 : f32 to vector<16x1xf32>
    %327 = arith.divf %325, %326 : vector<16x1xf32>
    %328 = vector.broadcast %327 : vector<16x1xf32> to vector<16x128xf32>
    %329 = arith.subf %323, %328 : vector<16x128xf32>
    %330 = arith.mulf %329, %329 : vector<16x128xf32>
    %cst_99 = arith.constant dense<0.000000e+00> : vector<16xf32>
    %331 = vector.multi_reduction <add>, %330, %cst_99 [1] : vector<16x128xf32> to vector<16xf32>
    %332 = vector.shape_cast %331 : vector<16xf32> to vector<16x1xf32>
    %cst_100 = arith.constant 1.280000e+02 : f32
    %333 = vector.broadcast %cst_100 : f32 to vector<16x1xf32>
    %334 = arith.divf %332, %333 : vector<16x1xf32>
    %335 = vector.broadcast %327 : vector<16x1xf32> to vector<16x128xf32>
    %336 = arith.subf %323, %335 : vector<16x128xf32>
    %cst_101 = arith.constant 9.99999974E-6 : f32
    %337 = vector.broadcast %cst_101 : f32 to vector<16x1xf32>
    %338 = arith.addf %334, %337 : vector<16x1xf32>
    %339 = math.rsqrt %338 : vector<16x1xf32>
    %340 = vector.broadcast %339 : vector<16x1xf32> to vector<16x128xf32>
    %341 = arith.mulf %336, %340 : vector<16x128xf32>
    %342 = vector.broadcast %190 : vector<1x128xf32> to vector<16x128xf32>
    %343 = arith.mulf %341, %342 : vector<16x128xf32>
    %344 = vector.broadcast %191 : vector<1x128xf32> to vector<16x128xf32>
    %345 = arith.addf %343, %344 : vector<16x128xf32>
    %c0_102 = arith.constant 0 : index
    %c2048_103 = arith.constant 2048 : index
    %346 = vector.load %arg3[%c0_102, %c2048_103] : memref<128x2176xbf16, #tpu.memory_space<vmem>>, vector<128x128xbf16>
    %c0_104 = arith.constant 0 : index
    %c3328 = arith.constant 3328 : index
    %347 = vector.load %arg5[%c0_104, %c3328] : memref<1x3456xf32, #tpu.memory_space<vmem>>, vector<1x128xf32>
    %348 = arith.truncf %345 : vector<16x128xf32> to vector<16x128xbf16>
    %cst_105 = arith.constant dense<0.000000e+00> : vector<16x128xf32>
    %349 = tpu.matmul %348, %346, %cst_105 {dimension_numbers = #tpu.dot_dimension_numbers<[1], [0], [0], [1], [0, 0, 1, 1], [], []>} : vector<16x128xbf16>, vector<128x128xbf16>, vector<16x128xf32> -> vector<16x128xf32>
    %350 = vector.broadcast %347 : vector<1x128xf32> to vector<16x128xf32>
    %351 = arith.addf %349, %350 : vector<16x128xf32>
    %352 = vector.shape_cast %351 : vector<16x128xf32> to vector<2x8x128xf32>
    %c0_106 = arith.constant 0 : index
    %c0_107 = arith.constant 0 : index
    %c0_108 = arith.constant 0 : index
    %353 = vector.load %arg6[%c0_106, %c0_107, %c0_108] : memref<2x8x128xf32, #tpu.memory_space<vmem>>, vector<2x8x128xf32>
    tpu.vector_store %arg6[%c0_106, %c0_107, %c0_108], %352 {strides = array<i32>} : memref<2x8x128xf32, #tpu.memory_space<vmem>>, vector<2x8x128xf32>,
    return
  }
}

</mosaic_0001>

<llo_original>
// kernel: transformer_forward.1
$region0: #{transformer_forward.1}
  #allocation0 [shape = 'u32[]', space=smem, size = 0x4, offset = 0x4, fixed_abs, tag = 'smem constant byte address 0x4 - core index']
  #allocation1 [shape = 'u32[144,128]{1,0:T(1,128)}', space=vmem, size = 0x12000, scoped, tag = 'internal scratch']
  %s0 = inlined_call_operand.vmem [shape: s32[16,1], index: 0, kind: input, shape index: {}]
  %s1 = inlined_call_operand.hbm [shape: f32[50,128], index: 1, kind: input, shape index: {}]
  %s2 = inlined_call_operand.hbm [shape: bf16[64,128], index: 2, kind: input, shape index: {}]
  %s3 = inlined_call_operand.hbm [shape: bf16[128,2176], index: 3, kind: input, shape index: {}]
  %s4 = inlined_call_operand.hbm [shape: bf16[512,256], index: 4, kind: input, shape index: {}]
  %s5 = inlined_call_operand.hbm [shape: f32[1,3456], index: 5, kind: input, shape index: {}]
  %s6 = inlined_call_operand.hbm [shape: f32[2,8,128], index: 6, kind: output, shape index: {}]
  %s7 = sld [smem:[#allocation0]]
  $region54: #{transformer_forward.1} parent=0
    _
  %s9 = ssub.s32 1, %s7
  %s10 = scalar_select 0, %s9, %s7
  $region1: #{transformer_forward.1} parent=0
    #allocation2 [shape = 'u8[28672]{0}', space=vmem, size = 0x7000, scoped, tag = 'input window, operand 1, single buffered']
    #allocation3 [shape = 's32[1]{0}', space=sflag, size = 0x4, scoped, tag = 'scoped memory for transformer_forward.1']
    #allocation4 [shape = 's32[1]{0}', space=sflag, size = 0x4, scoped, tag = 'scoped memory for transformer_forward.1']
    #allocation5 [shape = 'u8[16384]{0}', space=vmem, size = 0x4000, scoped, tag = 'input window, operand 2, single buffered']
    #allocation6 [shape = 's32[1]{0}', space=sflag, size = 0x4, scoped, tag = 'scoped memory for transformer_forward.1']
    #allocation7 [shape = 'u8[557056]{0}', space=vmem, size = 0x88000, scoped, tag = 'input window, operand 3, single buffered']
    #allocation8 [shape = 'u8[262144]{0}', space=vmem, size = 0x40000, scoped, tag = 'input window, operand 4, single buffered']
    #allocation9 [shape = 's32[1]{0}', space=sflag, size = 0x4, scoped, tag = 'scoped memory for transformer_forward.1']
    #allocation10 [shape = 'u8[13824]{0}', space=vmem, size = 0x3800, scoped, tag = 'input window, operand 5, single buffered']
    #allocation11 [shape = 'u8[8192]{0}', space=vmem, size = 0x2000, scoped, tag = 'output window, operand 0, single buffered']
    %11 = vsyncpa [#allocation3], 0
    %12 = vsyncpa [#allocation6], 0
    %13 = vsyncpa [#allocation9], 0
    %14 = vsyncpa [#allocation4], 0
    // Predicated region
    $region2: #{transformer_forward.1} parent=1 // pred_check
      _
    $region3: #{transformer_forward.1} parent=1 // pred_check_branch
      %16 = sbr.rel (0) target = $region5
    $region4: #{transformer_forward.1} parent=1 // pred_region
      _
    $region5: #{transformer_forward.1} parent=1 // pred_fallthru
      _
    // Predicated region
    $region6: #{transformer_forward.1} parent=1 // pred_check
      _
    $region7: #{transformer_forward.1} parent=1 // pred_check_branch
      %18 = sbr.rel (0) target = $region9
    $region8: #{transformer_forward.1} parent=1 // pred_region
      %s20 = ssub.s32 896, 896
      %21 = vsyncadd [#allocation3], %s20
      %s22 = sshll.u32 [#allocation2], 4
      %s23 = int_to_ptr.vmem [resolvable:$true] %s22
      %28 = dma.hbm_to_vmem [thread:$0]  %s1, 896, %s23, [#allocation3], 128, 128, 8
    $region9: #{transformer_forward.1} parent=1 // pred_fallthru
      _
    // Predicated region
    $region10: #{transformer_forward.1} parent=1 // pred_check
      _
    $region11: #{transformer_forward.1} parent=1 // pred_check_branch
      %30 = sbr.rel (0) target = $region13
    $region12: #{transformer_forward.1} parent=1 // pred_region
      %s32 = ssub.s32 512, 512
      %33 = vsyncadd [#allocation6], %s32
      %s34 = sshll.u32 [#allocation5], 4
      %s35 = int_to_ptr.vmem [resolvable:$true] %s34
      %40 = dma.hbm_to_vmem [thread:$0]  %s2, 512, %s35, [#allocation6], 64, 64, 4
    $region13: #{transformer_forward.1} parent=1 // pred_fallthru
      _
    // Predicated region
    $region14: #{transformer_forward.1} parent=1 // pred_check
      _
    $region15: #{transformer_forward.1} parent=1 // pred_check_branch
      %42 = sbr.rel (0) target = $region17
    $region16: #{transformer_forward.1} parent=1 // pred_region
      %s44 = ssub.s32 17408, 17408
      %45 = vsyncadd [#allocation6], %s44
      %s46 = sshll.u32 [#allocation7], 4
      %s47 = int_to_ptr.vmem [resolvable:$true] %s46
      %52 = dma.hbm_to_vmem [thread:$0]  %s3, 17408, %s47, [#allocation6], 1088, 1088, 68
    $region17: #{transformer_forward.1} parent=1 // pred_fallthru
      _
    // Predicated region
    $region18: #{transformer_forward.1} parent=1 // pred_check
      _
    $region19: #{transformer_forward.1} parent=1 // pred_check_branch
      %54 = sbr.rel (0) target = $region21
    $region20: #{transformer_forward.1} parent=1 // pred_region
      %s56 = ssub.s32 8192, 8192
      %57 = vsyncadd [#allocation9], %s56
      %s58 = sshll.u32 [#allocation8], 4
      %s59 = int_to_ptr.vmem [resolvable:$true] %s58
      %64 = dma.hbm_to_vmem [thread:$0]  %s4, 8192, %s59, [#allocation9], 128, 128, 8
    $region21: #{transformer_forward.1} parent=1 // pred_fallthru
      _
    // Predicated region
    $region22: #{transformer_forward.1} parent=1 // pred_check
      _
    $region23: #{transformer_forward.1} parent=1 // pred_check_branch
      %66 = sbr.rel (0) target = $region25
    $region24: #{transformer_forward.1} parent=1 // pred_region
      %s68 = ssub.s32 432, 432
      %69 = vsyncadd [#allocation9], %s68
      %s71 = sshll.u32 [#allocation10], 4
      %s72 = int_to_ptr.vmem [resolvable:$true] %s71
      %74 = dma.hbm_to_vmem [thread:$0]  %s5, 432, %s72, [#allocation9]
    $region25: #{transformer_forward.1} parent=1 // pred_fallthru
      _
    // Predicated region
    $region26: #{transformer_forward.1} parent=1 // pred_check
      _
    $region27: #{transformer_forward.1} parent=1 // pred_check_branch
      %76 = sbr.rel (0) target = $region29
    $region28: #{transformer_forward.1} parent=1 // pred_region
      %77 = dma.done [#allocation3], 896
    $region29: #{transformer_forward.1} parent=1 // pred_fallthru
      _
    // Predicated region
    $region30: #{transformer_forward.1} parent=1 // pred_check
      _
    $region31: #{transformer_forward.1} parent=1 // pred_check_branch
      %79 = sbr.rel (0) target = $region33
    $region32: #{transformer_forward.1} parent=1 // pred_region
      %80 = dma.done [#allocation6], 512
    $region33: #{transformer_forward.1} parent=1 // pred_fallthru
      _
    // Predicated region
    $region34: #{transformer_forward.1} parent=1 // pred_check
      _
    $region35: #{transformer_forward.1} parent=1 // pred_check_branch
      %82 = sbr.rel (0) target = $region37
    $region36: #{transformer_forward.1} parent=1 // pred_region
      %83 = dma.done [#allocation6], 17408
    $region37: #{transformer_forward.1} parent=1 // pred_fallthru
      _
    // Predicated region
    $region38: #{transformer_forward.1} parent=1 // pred_check
      _
    $region39: #{transformer_forward.1} parent=1 // pred_check_branch
      %85 = sbr.rel (0) target = $region41
    $region40: #{transformer_forward.1} parent=1 // pred_region
      %86 = dma.done [#allocation9], 8192
    $region41: #{transformer_forward.1} parent=1 // pred_fallthru
      _
    // Predicated region
    $region42: #{transformer_forward.1} parent=1 // pred_check
      _
    $region43: #{transformer_forward.1} parent=1 // pred_check_branch
      %88 = sbr.rel (0) target = $region45
    $region44: #{transformer_forward.1} parent=1 // pred_region
      %89 = dma.done [#allocation9], 432
    $region45: #{transformer_forward.1} parent=1 // pred_fallthru
      _
    %v91 = vld [vmem:[%s0] sm:$0xff]
    %v92 = vld [vmem:[%s0 + $0x8] sm:$0xff]
    %v93 = vlaneseq
    %v94 = vand.u32 %v93, 127
    %95 = vset.pattern.permute.xlu0 0
    %96 = vperm.xlu0 %95, %v91
    %v97 = vpop.permute.xlu0 %96
    %98 = vset.pattern.permute.xlu0 0
    %99 = vperm.xlu0 %98, %v92
    %v100 = vpop.permute.xlu0 %99
    %vm101 = vcmp.eq.s32.totalorder %v97, %v94
    %vm102 = vcmp.eq.s32.totalorder %v100, %v94
    %v103 = vsel %vm101, 1.0, 0.0
    %v104 = vsel %vm102, 1.0, 0.0
    %v105 = vpack.c.bf16 %v104, %v103
    %v106 = vld [vmem:[#allocation5] sm:$0xf]
    %v107 = vld [vmem:[#allocation5 + $0x4] sm:$0xf]
    %v108 = vld [vmem:[#allocation5 + $0x8] sm:$0xf]
    %v109 = vld [vmem:[#allocation5 + $0xc] sm:$0xf]
    %v110 = vld [vmem:[#allocation5 + $0x10] sm:$0xf]
    %v111 = vld [vmem:[#allocation5 + $0x14] sm:$0xf]
    %v112 = vld [vmem:[#allocation5 + $0x18] sm:$0xf]
    %v113 = vld [vmem:[#allocation5 + $0x1c] sm:$0xf]
    %v122 = vunpack.c.l.b16 %v106
    %v123 = vunpack.c.l.b16 %v107
    %v124 = vunpack.c.l.b16 %v108
    %v125 = vunpack.c.l.b16 %v109
    %v126 = vunpack.c.l.b16 %v110
    %v127 = vunpack.c.l.b16 %v111
    %v128 = vunpack.c.l.b16 %v112
    %v129 = vunpack.c.l.b16 %v113
    %v130 = vpack.c.b16 %v123, %v122
    %v131 = vpack.c.b16 %v125, %v124
    %v132 = vpack.c.b16 %v127, %v126
    %v133 = vpack.c.b16 %v129, %v128
    %vm138 = vcmask 523264
    %v140 = vsel %vm138, %v105, 0
    %142 = vmatprep.subr.bf16.mxu0 0
    %143 = vmatpush1.bf16.msra.mxu0 %v130
    %144 = vmatprep.subr.bf16.mxu0 0
    %145 = vmatpush1.bf16.msra.mxu0 %v131
    %146 = vmatprep.subr.bf16.mxu0 0
    %147 = vmatpush1.bf16.msra.mxu0 %v132
    %148 = vmatprep.subr.bf16.mxu0 0
    %149 = vmatpush1.bf16.msra.mxu0 %v133
    %150 = vmatprep.subr.bf16.mxu0 0
    %151 = vmatpush1.bf16.msra.mxu0 0
    %152 = vmatprep.subr.bf16.mxu0 0
    %153 = vmatpush1.bf16.msra.mxu0 0
    %154 = vmatprep.subr.bf16.mxu0 0
    %155 = vmatpush1.bf16.msra.mxu0 0
    %156 = vmatprep.subr.bf16.mxu0 0
    %157 = vmatpush1.bf16.msra.mxu0 0
    %158 = vmatprep.subr.bf16.mxu0 0
    %159 = vmatpush1.bf16.msra.mxu0 0
    %160 = vmatprep.subr.bf16.mxu0 0
    %161 = vmatpush1.bf16.msra.mxu0 0
    %162 = vmatprep.subr.bf16.mxu0 0
    %163 = vmatpush1.bf16.msra.mxu0 0
    %164 = vmatprep.subr.bf16.mxu0 0
    %165 = vmatpush1.bf16.msra.mxu0 0
    %166 = vmatprep.subr.bf16.mxu0 0
    %167 = vmatpush1.bf16.msra.mxu0 0
    %168 = vmatprep.subr.bf16.mxu0 0
    %169 = vmatpush1.bf16.msra.mxu0 0
    %170 = vmatprep.subr.bf16.mxu0 0
    %171 = vmatpush1.bf16.msra.mxu0 0
    %172 = vmatprep.subr.bf16.mxu0 0
    %173 = vmatpush1.bf16.msra.mxu0 0
    %174 = vmatprep.mubr.bf16.mxu0 0
    %175 = vmatmul.mubr.bf16.gmra.mrb[0].mxu0 %v140
    %v176 = vpop.f32.mrb[0].mxu0
    %v177 = vadd.f32 0.0, %v176
    %v178 = vpop.f32.mrb[0].mxu0
    %v179 = vpop.f32.mrb[0].mxu0
    %v180 = vadd.f32 0.0, %v179
    %v181 = vpop.f32.mrb[0].mxu0
    %182 = vdwg.mxu0
    %v183 = vld [vmem:[#allocation2] sm:$0xff]
    %v184 = vadd.f32 %v177, %v183
    %v185 = vadd.f32 %v180, %v183
    %v186 = vld [vmem:[#allocation7] sm:$0xff]
    %v187 = vld [vmem:[#allocation7 + $0x8] sm:$0xf]
    %v188 = vld [vmem:[#allocation7 + $0x44] sm:$0xff]
    %v189 = vld [vmem:[#allocation7 + $0x4c] sm:$0xf]
    %v190 = vld [vmem:[#allocation7 + $0x88] sm:$0xff]
    %v191 = vld [vmem:[#allocation7 + $0x90] sm:$0xf]
    %v192 = vld [vmem:[#allocation7 + $0xcc] sm:$0xff]
    %v193 = vld [vmem:[#allocation7 + $0xd4] sm:$0xf]
    %v194 = vld [vmem:[#allocation7 + $0x110] sm:$0xff]
    %v195 = vld [vmem:[#allocation7 + $0x118] sm:$0xf]
    %v196 = vld [vmem:[#allocation7 + $0x154] sm:$0xff]
    %v197 = vld [vmem:[#allocation7 + $0x15c] sm:$0xf]
    %v198 = vld [vmem:[#allocation7 + $0x198] sm:$0xff]
    %v199 = vld [vmem:[#allocation7 + $0x1a0] sm:$0xf]
    %v200 = vld [vmem:[#allocation7 + $0x1dc] sm:$0xff]
    %v201 = vld [vmem:[#allocation7 + $0x1e4] sm:$0xf]
    %v202 = vld [vmem:[#allocation7 + $0x220] sm:$0xff]
    %v203 = vld [vmem:[#allocation7 + $0x228] sm:$0xf]
    %v204 = vld [vmem:[#allocation7 + $0x264] sm:$0xff]
    %v205 = vld [vmem:[#allocation7 + $0x26c] sm:$0xf]
    %v206 = vld [vmem:[#allocation7 + $0x2a8] sm:$0xff]
    %v207 = vld [vmem:[#allocation7 + $0x2b0] sm:$0xf]
    %v208 = vld [vmem:[#allocation7 + $0x2ec] sm:$0xff]
    %v209 = vld [vmem:[#allocation7 + $0x2f4] sm:$0xf]
    %v210 = vld [vmem:[#allocation7 + $0x330] sm:$0xff]
    %v211 = vld [vmem:[#allocation7 + $0x338] sm:$0xf]
    %v212 = vld [vmem:[#allocation7 + $0x374] sm:$0xff]
    %v213 = vld [vmem:[#allocation7 + $0x37c] sm:$0xf]
    %v214 = vld [vmem:[#allocation7 + $0x3b8] sm:$0xff]
    %v215 = vld [vmem:[#allocation7 + $0x3c0] sm:$0xf]
    %v216 = vld [vmem:[#allocation7 + $0x3fc] sm:$0xff]
    %v217 = vld [vmem:[#allocation7 + $0x404] sm:$0xf]
    %v218 = vld [vmem:[#allocation7 + $0xc] sm:$0xf]
    %v219 = vld [vmem:[#allocation7 + $0x50] sm:$0xf]
    %v220 = vld [vmem:[#allocation7 + $0x94] sm:$0xf]
    %v221 = vld [vmem:[#allocation7 + $0xd8] sm:$0xf]
    %v222 = vld [vmem:[#allocation7 + $0x11c] sm:$0xf]
    %v223 = vld [vmem:[#allocation7 + $0x160] sm:$0xf]
    %v224 = vld [vmem:[#allocation7 + $0x1a4] sm:$0xf]
    %v225 = vld [vmem:[#allocation7 + $0x1e8] sm:$0xf]
    %v226 = vld [vmem:[#allocation7 + $0x22c] sm:$0xf]
    %v227 = vld [vmem:[#allocation7 + $0x270] sm:$0xf]
    %v228 = vld [vmem:[#allocation7 + $0x2b4] sm:$0xf]
    %v229 = vld [vmem:[#allocation7 + $0x2f8] sm:$0xf]
    %v230 = vld [vmem:[#allocation7 + $0x33c] sm:$0xf]
    %v231 = vld [vmem:[#allocation7 + $0x380] sm:$0xf]
    %v232 = vld [vmem:[#allocation7 + $0x3c4] sm:$0xf]
    %v233 = vld [vmem:[#allocation7 + $0x408] sm:$0xf]
    %v234 = vld [vmem:[#allocation7 + $0x10] sm:$0xff]
    %v235 = vld [vmem:[#allocation7 + $0x18] sm:$0xff]
    %v236 = vld [vmem:[#allocation7 + $0x54] sm:$0xff]
    %v237 = vld [vmem:[#allocation7 + $0x5c] sm:$0xff]
    %v238 = vld [vmem:[#allocation7 + $0x98] sm:$0xff]
    %v239 = vld [vmem:[#allocation7 + $0xa0] sm:$0xff]
    %v240 = vld [vmem:[#allocation7 + $0xdc] sm:$0xff]
    %v241 = vld [vmem:[#allocation7 + $0xe4] sm:$0xff]
    %v242 = vld [vmem:[#allocation7 + $0x120] sm:$0xff]
    %v243 = vld [vmem:[#allocation7 + $0x128] sm:$0xff]
    %v244 = vld [vmem:[#allocation7 + $0x164] sm:$0xff]
    %v245 = vld [vmem:[#allocation7 + $0x16c] sm:$0xff]
    %v246 = vld [vmem:[#allocation7 + $0x1a8] sm:$0xff]
    %v247 = vld [vmem:[#allocation7 + $0x1b0] sm:$0xff]
    %v248 = vld [vmem:[#allocation7 + $0x1ec] sm:$0xff]
    %v249 = vld [vmem:[#allocation7 + $0x1f4] sm:$0xff]
    %v250 = vld [vmem:[#allocation7 + $0x230] sm:$0xff]
    %v251 = vld [vmem:[#allocation7 + $0x238] sm:$0xff]
    %v252 = vld [vmem:[#allocation7 + $0x274] sm:$0xff]
    %v253 = vld [vmem:[#allocation7 + $0x27c] sm:$0xff]
    %v254 = vld [vmem:[#allocation7 + $0x2b8] sm:$0xff]
    %v255 = vld [vmem:[#allocation7 + $0x2c0] sm:$0xff]
    %v256 = vld [vmem:[#allocation7 + $0x2fc] sm:$0xff]
    %v257 = vld [vmem:[#allocation7 + $0x304] sm:$0xff]
    %v258 = vld [vmem:[#allocation7 + $0x340] sm:$0xff]
    %v259 = vld [vmem:[#allocation7 + $0x348] sm:$0xff]
    %v260 = vld [vmem:[#allocation7 + $0x384] sm:$0xff]
    %v261 = vld [vmem:[#allocation7 + $0x38c] sm:$0xff]
    %v262 = vld [vmem:[#allocation7 + $0x3c8] sm:$0xff]
    %v263 = vld [vmem:[#allocation7 + $0x3d0] sm:$0xff]
    %v264 = vld [vmem:[#allocation7 + $0x40c] sm:$0xff]
    %v265 = vld [vmem:[#allocation7 + $0x414] sm:$0xff]
    %v266 = vld [vmem:[#allocation10] sm:$0x7]
    %v267 = vld [vmem:[#allocation10 + $0x3] sm:$0x1]
    %v268 = vld [vmem:[#allocation10 + $0x4] sm:$0x1]
    %v269 = vld [vmem:[#allocation10 + $0x5] sm:$0x1]
    %v270 = vld [vmem:[#allocation10 + $0x6] sm:$0xf]
    %v271 = vld [vmem:[#allocation10 + $0xa] sm:$0x1]
    %v272 = vld [vmem:[#allocation10 + $0xb] sm:$0x1]
    %v273 = vld [vmem:[#allocation10 + $0xc] sm:$0x1]
    %v274 = vld [vmem:[#allocation8] sm:$0xf]
    %v275 = vld [vmem:[#allocation8 + $0x8] sm:$0xf]
    %v276 = vld [vmem:[#allocation8 + $0x10] sm:$0xf]
    %v277 = vld [vmem:[#allocation8 + $0x18] sm:$0xf]
    %v278 = vld [vmem:[#allocation8 + $0x20] sm:$0xf]
    %v279 = vld [vmem:[#allocation8 + $0x28] sm:$0xf]
    %v280 = vld [vmem:[#allocation8 + $0x30] sm:$0xf]
    %v281 = vld [vmem:[#allocation8 + $0x38] sm:$0xf]
    %v282 = vld [vmem:[#allocation8 + $0x40] sm:$0xf]
    %v283 = vld [vmem:[#allocation8 + $0x48] sm:$0xf]
    %v284 = vld [vmem:[#allocation8 + $0x50] sm:$0xf]
    %v285 = vld [vmem:[#allocation8 + $0x58] sm:$0xf]
    %v286 = vld [vmem:[#allocation8 + $0x60] sm:$0xf]
    %v287 = vld [vmem:[#allocation8 + $0x68] sm:$0xf]
    %v288 = vld [vmem:[#allocation8 + $0x70] sm:$0xf]
    %v289 = vld [vmem:[#allocation8 + $0x78] sm:$0xf]
    %v290 = vld [vmem:[#allocation8 + $0x80] sm:$0xf]
    %v291 = vld [vmem:[#allocation8 + $0x88] sm:$0xf]
    %v292 = vld [vmem:[#allocation8 + $0x90] sm:$0xf]
    %v293 = vld [vmem:[#allocation8 + $0x98] sm:$0xf]
    %v294 = vld [vmem:[#allocation8 + $0xa0] sm:$0xf]
    %v295 = vld [vmem:[#allocation8 + $0xa8] sm:$0xf]
    %v296 = vld [vmem:[#allocation8 + $0xb0] sm:$0xf]
    %v297 = vld [vmem:[#allocation8 + $0xb8] sm:$0xf]
    %v298 = vld [vmem:[#allocation8 + $0xc0] sm:$0xf]
    %v299 = vld [vmem:[#allocation8 + $0xc8] sm:$0xf]
    %v300 = vld [vmem:[#allocation8 + $0xd0] sm:$0xf]
    %v301 = vld [vmem:[#allocation8 + $0xd8] sm:$0xf]
    %v302 = vld [vmem:[#allocation8 + $0xe0] sm:$0xf]
    %v303 = vld [vmem:[#allocation8 + $0xe8] sm:$0xf]
    %v304 = vld [vmem:[#allocation8 + $0xf0] sm:$0xf]
    %v305 = vld [vmem:[#allocation8 + $0xf8] sm:$0xf]
    %v306 = vld [vmem:[#allocation8 + $0x100] sm:$0xf]
    %v307 = vld [vmem:[#allocation8 + $0x108] sm:$0xf]
    %v308 = vld [vmem:[#allocation8 + $0x110] sm:$0xf]
    %v309 = vld [vmem:[#allocation8 + $0x118] sm:$0xf]
    %v310 = vld [vmem:[#allocation8 + $0x120] sm:$0xf]
    %v311 = vld [vmem:[#allocation8 + $0x128] sm:$0xf]
    %v312 = vld [vmem:[#allocation8 + $0x130] sm:$0xf]
    %v313 = vld [vmem:[#allocation8 + $0x138] sm:$0xf]
    %v314 = vld [vmem:[#allocation8 + $0x140] sm:$0xf]
    %v315 = vld [vmem:[#allocation8 + $0x148] sm:$0xf]
    %v316 = vld [vmem:[#allocation8 + $0x150] sm:$0xf]
    %v317 = vld [vmem:[#allocation8 + $0x158] sm:$0xf]
    %v318 = vld [vmem:[#allocation8 + $0x160] sm:$0xf]
    %v319 = vld [vmem:[#allocation8 + $0x168] sm:$0xf]
    %v320 = vld [vmem:[#allocation8 + $0x170] sm:$0xf]
    %v321 = vld [vmem:[#allocation8 + $0x178] sm:$0xf]
    %v322 = vld [vmem:[#allocation8 + $0x180] sm:$0xf]
    %v323 = vld [vmem:[#allocation8 + $0x188] sm:$0xf]
    %v324 = vld [vmem:[#allocation8 + $0x190] sm:$0xf]
    %v325 = vld [vmem:[#allocation8 + $0x198] sm:$0xf]
    %v326 = vld [vmem:[#allocation8 + $0x1a0] sm:$0xf]
    %v327 = vld [vmem:[#allocation8 + $0x1a8] sm:$0xf]
    %v328 = vld [vmem:[#allocation8 + $0x1b0] sm:$0xf]
    %v329 = vld [vmem:[#allocation8 + $0x1b8] sm:$0xf]
    %v330 = vld [vmem:[#allocation8 + $0x1c0] sm:$0xf]
    %v331 = vld [vmem:[#allocation8 + $0x1c8] sm:$0xf]
    %v332 = vld [vmem:[#allocation8 + $0x1d0] sm:$0xf]
    %v333 = vld [vmem:[#allocation8 + $0x1d8] sm:$0xf]
    %v334 = vld [vmem:[#allocation8 + $0x1e0] sm:$0xf]
    %v335 = vld [vmem:[#allocation8 + $0x1e8] sm:$0xf]
    %v336 = vld [vmem:[#allocation8 + $0x1f0] sm:$0xf]
    %v337 = vld [vmem:[#allocation8 + $0x1f8] sm:$0xf]
    %v338 = vpack.c.bf16 %v185, %v184
    %v340 = vlaneseq
    %v341 = vshrl.u32 %v340, 7
    %v342 = vsub.s32 0, %v341
    %v343 = vrot.slane %v266, %v342
    %v344 = vlaneseq
    %v345 = vshrl.u32 %v344, 7
    %v346 = vsub.s32 1, %v345
    %v347 = vrot.slane %v266, %v346
    %v348 = vlaneseq
    %v349 = vshrl.u32 %v348, 7
    %v350 = vsub.s32 2, %v349
    %v351 = vrot.slane %v266, %v350
    %v387 = vunpack.c.l.b16 %v186
    %v388 = vunpack.c.h.b16 %v186
    %v389 = vunpack.c.l.b16 %v187
    %v390 = vunpack.c.l.b16 %v188
    %v391 = vunpack.c.h.b16 %v188
    %v392 = vunpack.c.l.b16 %v189
    %v393 = vunpack.c.l.b16 %v190
    %v394 = vunpack.c.h.b16 %v190
    %v395 = vunpack.c.l.b16 %v191
    %v396 = vunpack.c.l.b16 %v192
    %v397 = vunpack.c.h.b16 %v192
    %v398 = vunpack.c.l.b16 %v193
    %v399 = vunpack.c.l.b16 %v194
    %v400 = vunpack.c.h.b16 %v194
    %v401 = vunpack.c.l.b16 %v195
    %v402 = vunpack.c.l.b16 %v196
    %v403 = vunpack.c.h.b16 %v196
    %v404 = vunpack.c.l.b16 %v197
    %v405 = vunpack.c.l.b16 %v198
    %v406 = vunpack.c.h.b16 %v198
    %v407 = vunpack.c.l.b16 %v199
    %v408 = vunpack.c.l.b16 %v200
    %v409 = vunpack.c.h.b16 %v200
    %v410 = vunpack.c.l.b16 %v201
    %v411 = vunpack.c.l.b16 %v202
    %v412 = vunpack.c.h.b16 %v202
    %v413 = vunpack.c.l.b16 %v203
    %v414 = vunpack.c.l.b16 %v204
    %v415 = vunpack.c.h.b16 %v204
    %v416 = vunpack.c.l.b16 %v205
    %v417 = vunpack.c.l.b16 %v206
    %v418 = vunpack.c.h.b16 %v206
    %v419 = vunpack.c.l.b16 %v207
    %v420 = vunpack.c.l.b16 %v208
    %v421 = vunpack.c.h.b16 %v208
    %v422 = vunpack.c.l.b16 %v209
    %v423 = vunpack.c.l.b16 %v210
    %v424 = vunpack.c.h.b16 %v210
    %v425 = vunpack.c.l.b16 %v211
    %v426 = vunpack.c.l.b16 %v212
    %v427 = vunpack.c.h.b16 %v212
    %v428 = vunpack.c.l.b16 %v213
    %v429 = vunpack.c.l.b16 %v214
    %v430 = vunpack.c.h.b16 %v214
    %v431 = vunpack.c.l.b16 %v215
    %v432 = vunpack.c.l.b16 %v216
    %v433 = vunpack.c.h.b16 %v216
    %v434 = vunpack.c.l.b16 %v217
    %v435 = vpack.c.b16 %v390, %v387
    %v436 = vpack.c.b16 %v391, %v388
    %v437 = vpack.c.b16 %v392, %v389
    %v438 = vpack.c.b16 %v396, %v393
    %v439 = vpack.c.b16 %v397, %v394
    %v440 = vpack.c.b16 %v398, %v395
    %v441 = vpack.c.b16 %v402, %v399
    %v442 = vpack.c.b16 %v403, %v400
    %v443 = vpack.c.b16 %v404, %v401
    %v444 = vpack.c.b16 %v408, %v405
    %v445 = vpack.c.b16 %v409, %v406
    %v446 = vpack.c.b16 %v410, %v407
    %v447 = vpack.c.b16 %v414, %v411
    %v448 = vpack.c.b16 %v415, %v412
    %v449 = vpack.c.b16 %v416, %v413
    %v450 = vpack.c.b16 %v420, %v417
    %v451 = vpack.c.b16 %v421, %v418
    %v452 = vpack.c.b16 %v422, %v419
    %v453 = vpack.c.b16 %v426, %v423
    %v454 = vpack.c.b16 %v427, %v424
    %v455 = vpack.c.b16 %v428, %v425
    %v456 = vpack.c.b16 %v432, %v429
    %v457 = vpack.c.b16 %v433, %v430
    %v458 = vpack.c.b16 %v434, %v431
    %483 = vmatprep.subr.bf16.mxu0 %v436
    %484 = vmatpush1.bf16.msra.mxu0 %v435
    %485 = vmatprep.subr.bf16.mxu0 %v439
    %486 = vmatpush1.bf16.msra.mxu0 %v438
    %487 = vmatprep.subr.bf16.mxu0 %v442
    %488 = vmatpush1.bf16.msra.mxu0 %v441
    %489 = vmatprep.subr.bf16.mxu0 %v445
    %490 = vmatpush1.bf16.msra.mxu0 %v444
    %491 = vmatprep.subr.bf16.mxu0 %v448
    %492 = vmatpush1.bf16.msra.mxu0 %v447
    %493 = vmatprep.subr.bf16.mxu0 %v451
    %494 = vmatpush1.bf16.msra.mxu0 %v450
    %495 = vmatprep.subr.bf16.mxu0 %v454
    %496 = vmatpush1.bf16.msra.mxu0 %v453
    %497 = vmatprep.subr.bf16.mxu0 %v457
    %498 = vmatpush1.bf16.msra.mxu0 %v456
    %499 = vmatprep.subr.bf16.mxu0 0
    %500 = vmatpush1.bf16.msra.mxu0 0
    %501 = vmatprep.subr.bf16.mxu0 0
    %502 = vmatpush1.bf16.msra.mxu0 0
    %503 = vmatprep.subr.bf16.mxu0 0
    %504 = vmatpush1.bf16.msra.mxu0 0
    %505 = vmatprep.subr.bf16.mxu0 0
    %506 = vmatpush1.bf16.msra.mxu0 0
    %507 = vmatprep.subr.bf16.mxu0 0
    %508 = vmatpush1.bf16.msra.mxu0 0
    %509 = vmatprep.subr.bf16.mxu0 0
    %510 = vmatpush1.bf16.msra.mxu0 0
    %511 = vmatprep.subr.bf16.mxu0 0
    %512 = vmatpush1.bf16.msra.mxu0 0
    %513 = vmatprep.subr.bf16.mxu0 0
    %514 = vmatpush1.bf16.msra.mxu0 0
    %515 = vmatprep.mubr.bf16.mxu0 0
    %516 = vmatmul.mubr.bf16.gmra.mrb[0].mxu0 %v338
    %v517 = vpop.f32.mrb[0].mxu0
    %v518 = vadd.f32 %v343, %v517
    %v519 = vpop.f32.mrb[0].mxu0
    %v520 = vadd.f32 %v347, %v519
    %v521 = vpop.f32.mrb[0].mxu0
    %v522 = vadd.f32 %v343, %v521
    %v523 = vpop.f32.mrb[0].mxu0
    %v524 = vadd.f32 %v347, %v523
    %525 = vdwg.mxu0
    %526 = vmatprep.subr.bf16.mxu0 0
    %527 = vmatpush1.bf16.msra.mxu0 %v437
    %528 = vmatprep.subr.bf16.mxu0 0
    %529 = vmatpush1.bf16.msra.mxu0 %v440
    %530 = vmatprep.subr.bf16.mxu0 0
    %531 = vmatpush1.bf16.msra.mxu0 %v443
    %532 = vmatprep.subr.bf16.mxu0 0
    %533 = vmatpush1.bf16.msra.mxu0 %v446
    %534 = vmatprep.subr.bf16.mxu0 0
    %535 = vmatpush1.bf16.msra.mxu0 %v449
    %536 = vmatprep.subr.bf16.mxu0 0
    %537 = vmatpush1.bf16.msra.mxu0 %v452
    %538 = vmatprep.subr.bf16.mxu0 0
    %539 = vmatpush1.bf16.msra.mxu0 %v455
    %540 = vmatprep.subr.bf16.mxu0 0
    %541 = vmatpush1.bf16.msra.mxu0 %v458
    %542 = vmatprep.subr.bf16.mxu0 0
    %543 = vmatpush1.bf16.msra.mxu0 0
    %544 = vmatprep.subr.bf16.mxu0 0
    %545 = vmatpush1.bf16.msra.mxu0 0
    %546 = vmatprep.subr.bf16.mxu0 0
    %547 = vmatpush1.bf16.msra.mxu0 0
    %548 = vmatprep.subr.bf16.mxu0 0
    %549 = vmatpush1.bf16.msra.mxu0 0
    %550 = vmatprep.subr.bf16.mxu0 0
    %551 = vmatpush1.bf16.msra.mxu0 0
    %552 = vmatprep.subr.bf16.mxu0 0
    %553 = vmatpush1.bf16.msra.mxu0 0
    %554 = vmatprep.subr.bf16.mxu0 0
    %555 = vmatpush1.bf16.msra.mxu0 0
    %556 = vmatprep.subr.bf16.mxu0 0
    %557 = vmatpush1.bf16.msra.mxu0 0
    %558 = vmatprep.mubr.bf16.mxu0 0
    %559 = vmatmul.mubr.bf16.gmra.mrb[0].mxu0 %v338
    %v560 = vpop.f32.mrb[0].mxu0
    %v561 = vadd.f32 %v351, %v560
    %v562 = vpop.f32.mrb[0].mxu0
    %v563 = vpop.f32.mrb[0].mxu0
    %v564 = vadd.f32 %v351, %v563
    %v565 = vpop.f32.mrb[0].mxu0
    %566 = vdwg.mxu0
    %v567 = vmul.f32 %v518, 0.17677669
    %v568 = vmul.f32 %v522, 0.17677669
    %v569 = vpack.c.bf16 %v568, %v567
    %v570 = vpack.c.bf16 %v524, %v520
    %v571 = vpack.c.bf16 %v564, %v561
    %v573 = vunpack.c.l.b16 %v569
    %v574 = vunpack.c.h.b16 %v569
    %v575 = vpack.c.b16 %v573, %v573
    %v576 = vpack.c.b16 %v574, %v574
    %v578 = vunpack.c.l.b16 %v570
    %v579 = vunpack.c.h.b16 %v570
    %v580 = vpack.c.b16 %v578, %v578
    %v581 = vpack.c.b16 %v579, %v579
    %v583 = vunpack.c.l.b16 %v571
    %v584 = vunpack.c.h.b16 %v571
    %v585 = vpack.c.b16 %v583, %v583
    %v586 = vpack.c.b16 %v584, %v584
    %vm587 = vcmask 261120
    %v589 = vsel %vm587, %v575, 0
    %v592 = vsel %vm587, %v580, 0
    %594 = vmatprep.subr.bf16.mxu0 0
    %595 = vmatpush1.bf16.xpose.msra.mxu0 %v592
    %596 = vmatprep.subr.bf16.mxu0 0
    %597 = vmatpush1.bf16.xpose.msra.mxu0 0
    %598 = vmatprep.subr.bf16.mxu0 0
    %599 = vmatpush1.bf16.xpose.msra.mxu0 0
    %600 = vmatprep.subr.bf16.mxu0 0
    %601 = vmatpush1.bf16.xpose.msra.mxu0 0
    %602 = vmatprep.subr.bf16.mxu0 0
    %603 = vmatpush1.bf16.xpose.msra.mxu0 0
    %604 = vmatprep.subr.bf16.mxu0 0
    %605 = vmatpush1.bf16.xpose.msra.mxu0 0
    %606 = vmatprep.subr.bf16.mxu0 0
    %607 = vmatpush1.bf16.xpose.msra.mxu0 0
    %608 = vmatprep.subr.bf16.mxu0 0
    %609 = vmatpush1.bf16.xpose.msra.mxu0 0
    %610 = vmatprep.subr.bf16.mxu0 0
    %611 = vmatpush1.bf16.xpose.msra.mxu0 0
    %612 = vmatprep.subr.bf16.mxu0 0
    %613 = vmatpush1.bf16.xpose.msra.mxu0 0
    %614 = vmatprep.subr.bf16.mxu0 0
    %615 = vmatpush1.bf16.xpose.msra.mxu0 0
    %616 = vmatprep.subr.bf16.mxu0 0
    %617 = vmatpush1.bf16.xpose.msra.mxu0 0
    %618 = vmatprep.subr.bf16.mxu0 0
    %619 = vmatpush1.bf16.xpose.msra.mxu0 0
    %620 = vmatprep.subr.bf16.mxu0 0
    %621 = vmatpush1.bf16.xpose.msra.mxu0 0
    %622 = vmatprep.subr.bf16.mxu0 0
    %623 = vmatpush1.bf16.xpose.msra.mxu0 0
    %624 = vmatprep.subr.bf16.mxu0 0
    %625 = vmatpush1.bf16.xpose.msra.mxu0 0
    %626 = vmatprep.mubr.bf16.mxu0 0
    %627 = vmatmul.mubr.bf16.gmra.mrb[0].mxu0 %v589
    %v628 = vpop.f32.mrb[0].mxu0
    %v629 = vadd.f32 0.0, %v628
    %v630 = vpop.f32.mrb[0].mxu0
    %v631 = vpop.f32.mrb[0].mxu0
    %v632 = vpop.f32.mrb[0].mxu0
    %633 = vdwg.mxu0
    %v635 = vsel %vm587, %v576, 0
    %v638 = vsel %vm587, %v581, 0
    %640 = vmatprep.subr.bf16.mxu0 0
    %641 = vmatpush1.bf16.xpose.msra.mxu0 %v638
    %642 = vmatprep.subr.bf16.mxu0 0
    %643 = vmatpush1.bf16.xpose.msra.mxu0 0
    %644 = vmatprep.subr.bf16.mxu0 0
    %645 = vmatpush1.bf16.xpose.msra.mxu0 0
    %646 = vmatprep.subr.bf16.mxu0 0
    %647 = vmatpush1.bf16.xpose.msra.mxu0 0
    %648 = vmatprep.subr.bf16.mxu0 0
    %649 = vmatpush1.bf16.xpose.msra.mxu0 0
    %650 = vmatprep.subr.bf16.mxu0 0
    %651 = vmatpush1.bf16.xpose.msra.mxu0 0
    %652 = vmatprep.subr.bf16.mxu0 0
    %653 = vmatpush1.bf16.xpose.msra.mxu0 0
    %654 = vmatprep.subr.bf16.mxu0 0
    %655 = vmatpush1.bf16.xpose.msra.mxu0 0
    %656 = vmatprep.subr.bf16.mxu0 0
    %657 = vmatpush1.bf16.xpose.msra.mxu0 0
    %658 = vmatprep.subr.bf16.mxu0 0
    %659 = vmatpush1.bf16.xpose.msra.mxu0 0
    %660 = vmatprep.subr.bf16.mxu0 0
    %661 = vmatpush1.bf16.xpose.msra.mxu0 0
    %662 = vmatprep.subr.bf16.mxu0 0
    %663 = vmatpush1.bf16.xpose.msra.mxu0 0
    %664 = vmatprep.subr.bf16.mxu0 0
    %665 = vmatpush1.bf16.xpose.msra.mxu0 0
    %666 = vmatprep.subr.bf16.mxu0 0
    %667 = vmatpush1.bf16.xpose.msra.mxu0 0
    %668 = vmatprep.subr.bf16.mxu0 0
    %669 = vmatpush1.bf16.xpose.msra.mxu0 0
    %670 = vmatprep.subr.bf16.mxu0 0
    %671 = vmatpush1.bf16.xpose.msra.mxu0 0
    %672 = vmatprep.mubr.bf16.mxu0 0
    %673 = vmatmul.mubr.bf16.gmra.mrb[0].mxu0 %v635
    %v674 = vpop.f32.mrb[0].mxu0
    %v675 = vadd.f32 0.0, %v674
    %v676 = vpop.f32.mrb[0].mxu0
    %v677 = vpop.f32.mrb[0].mxu0
    %v678 = vpop.f32.mrb[0].mxu0
    %679 = vdwg.mxu0
    %vm680 = vcmask 64512
    %v681 = vsel %vm680, %v629, -inf
    %682 = vmax.xlane.f32.xlu0 %v681
    %v683 = vpop.xlane.xlu0 %682
    %v684 = vsel %vm680, %v675, -inf
    %685 = vmax.xlane.f32.xlu0 %v684
    %v686 = vpop.xlane.xlu0 %685
    %v687 = vsub.f32 %v629, %v683
    %v688 = vsub.f32 %v675, %v686
    %v689 = vmul.f32 %v687, 1.442695
    %v690 = vpow.pop %v689
    %v691 = vmul.f32 %v688, 1.442695
    %v692 = vpow.pop %v691
    %v693 = vsel %vm680, %v690, 0.0
    %694 = vadd.xlane.f32.xlu0 %v693
    %v695 = vpop.xlane.xlu0 %694
    %v696 = vsel %vm680, %v692, 0.0
    %697 = vadd.xlane.f32.xlu0 %v696
    %v698 = vpop.xlane.xlu0 %697
    %v699 = vrcp.pop %v695
    %v700 = vrcp.pop %v698
    %v701 = vmul.f32 %v690, %v699
    %v702 = vmul.f32 %v692, %v700
    %v703 = vpack.c.bf16 %v701, %v701
    %v704 = vpack.c.bf16 %v702, %v702
    %v706 = vsel %vm680, %v703, 0
    %vm708 = vcmask 1043456
    %v710 = vsel %vm708, %v585, 0
    %712 = vmatprep.subr.bf16.mxu0 0
    %713 = vmatpush1.bf16.msra.mxu0 %v710
    %714 = vmatprep.subr.bf16.mxu0 0
    %715 = vmatpush1.bf16.msra.mxu0 0
    %716 = vmatprep.subr.bf16.mxu0 0
    %717 = vmatpush1.bf16.msra.mxu0 0
    %718 = vmatprep.subr.bf16.mxu0 0
    %719 = vmatpush1.bf16.msra.mxu0 0
    %720 = vmatprep.subr.bf16.mxu0 0
    %721 = vmatpush1.bf16.msra.mxu0 0
    %722 = vmatprep.subr.bf16.mxu0 0
    %723 = vmatpush1.bf16.msra.mxu0 0
    %724 = vmatprep.subr.bf16.mxu0 0
    %725 = vmatpush1.bf16.msra.mxu0 0
    %726 = vmatprep.subr.bf16.mxu0 0
    %727 = vmatpush1.bf16.msra.mxu0 0
    %728 = vmatprep.subr.bf16.mxu0 0
    %729 = vmatpush1.bf16.msra.mxu0 0
    %730 = vmatprep.subr.bf16.mxu0 0
    %731 = vmatpush1.bf16.msra.mxu0 0
    %732 = vmatprep.subr.bf16.mxu0 0
    %733 = vmatpush1.bf16.msra.mxu0 0
    %734 = vmatprep.subr.bf16.mxu0 0
    %735 = vmatpush1.bf16.msra.mxu0 0
    %736 = vmatprep.subr.bf16.mxu0 0
    %737 = vmatpush1.bf16.msra.mxu0 0
    %738 = vmatprep.subr.bf16.mxu0 0
    %739 = vmatpush1.bf16.msra.mxu0 0
    %740 = vmatprep.subr.bf16.mxu0 0
    %741 = vmatpush1.bf16.msra.mxu0 0
    %742 = vmatprep.subr.bf16.mxu0 0
    %743 = vmatpush1.bf16.msra.mxu0 0
    %744 = vmatprep.mubr.bf16.mxu0 0
    %745 = vmatmul.mubr.bf16.gmra.mrb[0].mxu0 %v706
    %v746 = vpop.f32.mrb[0].mxu0
    %v747 = vadd.f32 0.0, %v746
    %v748 = vpop.f32.mrb[0].mxu0
    %v749 = vpop.f32.mrb[0].mxu0
    %v750 = vpop.f32.mrb[0].mxu0
    %751 = vdwg.mxu0
    %v753 = vsel %vm680, %v704, 0
    %v756 = vsel %vm708, %v586, 0
    %758 = vmatprep.subr.bf16.mxu0 0
    %759 = vmatpush1.bf16.msra.mxu0 %v756
    %760 = vmatprep.subr.bf16.mxu0 0
    %761 = vmatpush1.bf16.msra.mxu0 0
    %762 = vmatprep.subr.bf16.mxu0 0
    %763 = vmatpush1.bf16.msra.mxu0 0
    %764 = vmatprep.subr.bf16.mxu0 0
    %765 = vmatpush1.bf16.msra.mxu0 0
    %766 = vmatprep.subr.bf16.mxu0 0
    %767 = vmatpush1.bf16.msra.mxu0 0
    %768 = vmatprep.subr.bf16.mxu0 0
    %769 = vmatpush1.bf16.msra.mxu0 0
    %770 = vmatprep.subr.bf16.mxu0 0
    %771 = vmatpush1.bf16.msra.mxu0 0
    %772 = vmatprep.subr.bf16.mxu0 0
    %773 = vmatpush1.bf16.msra.mxu0 0
    %774 = vmatprep.subr.bf16.mxu0 0
    %775 = vmatpush1.bf16.msra.mxu0 0
    %776 = vmatprep.subr.bf16.mxu0 0
    %777 = vmatpush1.bf16.msra.mxu0 0
    %778 = vmatprep.subr.bf16.mxu0 0
    %779 = vmatpush1.bf16.msra.mxu0 0
    %780 = vmatprep.subr.bf16.mxu0 0
    %781 = vmatpush1.bf16.msra.mxu0 0
    %782 = vmatprep.subr.bf16.mxu0 0
    %783 = vmatpush1.bf16.msra.mxu0 0
    %784 = vmatprep.subr.bf16.mxu0 0
    %785 = vmatpush1.bf16.msra.mxu0 0
    %786 = vmatprep.subr.bf16.mxu0 0
    %787 = vmatpush1.bf16.msra.mxu0 0
    %788 = vmatprep.subr.bf16.mxu0 0
    %789 = vmatpush1.bf16.msra.mxu0 0
    %790 = vmatprep.mubr.bf16.mxu0 0
    %791 = vmatmul.mubr.bf16.gmra.mrb[0].mxu0 %v753
    %v792 = vpop.f32.mrb[0].mxu0
    %v793 = vadd.f32 0.0, %v792
    %v794 = vpop.f32.mrb[0].mxu0
    %v795 = vpop.f32.mrb[0].mxu0
    %v796 = vpop.f32.mrb[0].mxu0
    %797 = vdwg.mxu0
    %798 = vrot.lane.b32.xlu0 %v575, 96
    %v799 = vpop.permute.xlu0 %798
    %800 = vrot.lane.b32.xlu0 %v580, 96
    %v801 = vpop.permute.xlu0 %800
    %v803 = vsel %vm587, %v799, 0
    %v806 = vsel %vm587, %v801, 0
    %808 = vmatprep.subr.bf16.mxu0 0
    %809 = vmatpush1.bf16.xpose.msra.mxu0 %v806
    %810 = vmatprep.subr.bf16.mxu0 0
    %811 = vmatpush1.bf16.xpose.msra.mxu0 0
    %812 = vmatprep.subr.bf16.mxu0 0
    %813 = vmatpush1.bf16.xpose.msra.mxu0 0
    %814 = vmatprep.subr.bf16.mxu0 0
    %815 = vmatpush1.bf16.xpose.msra.mxu0 0
    %816 = vmatprep.subr.bf16.mxu0 0
    %817 = vmatpush1.bf16.xpose.msra.mxu0 0
    %818 = vmatprep.subr.bf16.mxu0 0
    %819 = vmatpush1.bf16.xpose.msra.mxu0 0
    %820 = vmatprep.subr.bf16.mxu0 0
    %821 = vmatpush1.bf16.xpose.msra.mxu0 0
    %822 = vmatprep.subr.bf16.mxu0 0
    %823 = vmatpush1.bf16.xpose.msra.mxu0 0
    %824 = vmatprep.subr.bf16.mxu0 0
    %825 = vmatpush1.bf16.xpose.msra.mxu0 0
    %826 = vmatprep.subr.bf16.mxu0 0
    %827 = vmatpush1.bf16.xpose.msra.mxu0 0
    %828 = vmatprep.subr.bf16.mxu0 0
    %829 = vmatpush1.bf16.xpose.msra.mxu0 0
    %830 = vmatprep.subr.bf16.mxu0 0
    %831 = vmatpush1.bf16.xpose.msra.mxu0 0
    %832 = vmatprep.subr.bf16.mxu0 0
    %833 = vmatpush1.bf16.xpose.msra.mxu0 0
    %834 = vmatprep.subr.bf16.mxu0 0
    %835 = vmatpush1.bf16.xpose.msra.mxu0 0
    %836 = vmatprep.subr.bf16.mxu0 0
    %837 = vmatpush1.bf16.xpose.msra.mxu0 0
    %838 = vmatprep.subr.bf16.mxu0 0
    %839 = vmatpush1.bf16.xpose.msra.mxu0 0
    %840 = vmatprep.mubr.bf16.mxu0 0
    %841 = vmatmul.mubr.bf16.gmra.mrb[0].mxu0 %v803
    %v842 = vpop.f32.mrb[0].mxu0
    %v843 = vadd.f32 0.0, %v842
    %v844 = vpop.f32.mrb[0].mxu0
    %v845 = vpop.f32.mrb[0].mxu0
    %v846 = vpop.f32.mrb[0].mxu0
    %847 = vdwg.mxu0
    %848 = vrot.lane.b32.xlu0 %v576, 96
    %v849 = vpop.permute.xlu0 %848
    %850 = vrot.lane.b32.xlu0 %v581, 96
    %v851 = vpop.permute.xlu0 %850
    %v853 = vsel %vm587, %v849, 0
    %v856 = vsel %vm587, %v851, 0
    %858 = vmatprep.subr.bf16.mxu0 0
    %859 = vmatpush1.bf16.xpose.msra.mxu0 %v856
    %860 = vmatprep.subr.bf16.mxu0 0
    %861 = vmatpush1.bf16.xpose.msra.mxu0 0
    %862 = vmatprep.subr.bf16.mxu0 0
    %863 = vmatpush1.bf16.xpose.msra.mxu0 0
    %864 = vmatprep.subr.bf16.mxu0 0
    %865 = vmatpush1.bf16.xpose.msra.mxu0 0
    %866 = vmatprep.subr.bf16.mxu0 0
    %867 = vmatpush1.bf16.xpose.msra.mxu0 0
    %868 = vmatprep.subr.bf16.mxu0 0
    %869 = vmatpush1.bf16.xpose.msra.mxu0 0
    %870 = vmatprep.subr.bf16.mxu0 0
    %871 = vmatpush1.bf16.xpose.msra.mxu0 0
    %872 = vmatprep.subr.bf16.mxu0 0
    %873 = vmatpush1.bf16.xpose.msra.mxu0 0
    %874 = vmatprep.subr.bf16.mxu0 0
    %875 = vmatpush1.bf16.xpose.msra.mxu0 0
    %876 = vmatprep.subr.bf16.mxu0 0
    %877 = vmatpush1.bf16.xpose.msra.mxu0 0
    %878 = vmatprep.subr.bf16.mxu0 0
    %879 = vmatpush1.bf16.xpose.msra.mxu0 0
    %880 = vmatprep.subr.bf16.mxu0 0
    %881 = vmatpush1.bf16.xpose.msra.mxu0 0
    %882 = vmatprep.subr.bf16.mxu0 0
    %883 = vmatpush1.bf16.xpose.msra.mxu0 0
    %884 = vmatprep.subr.bf16.mxu0 0
    %885 = vmatpush1.bf16.xpose.msra.mxu0 0
    %886 = vmatprep.subr.bf16.mxu0 0
    %887 = vmatpush1.bf16.xpose.msra.mxu0 0
    %888 = vmatprep.subr.bf16.mxu0 0
    %889 = vmatpush1.bf16.xpose.msra.mxu0 0
    %890 = vmatprep.mubr.bf16.mxu0 0
    %891 = vmatmul.mubr.bf16.gmra.mrb[0].mxu0 %v853
    %v892 = vpop.f32.mrb[0].mxu0
    %v893 = vadd.f32 0.0, %v892
    %v894 = vpop.f32.mrb[0].mxu0
    %v895 = vpop.f32.mrb[0].mxu0
    %v896 = vpop.f32.mrb[0].mxu0
    %897 = vdwg.mxu0
    %v898 = vsel %vm680, %v843, -inf
    %899 = vmax.xlane.f32.xlu0 %v898
    %v900 = vpop.xlane.xlu0 %899
    %v901 = vsel %vm680, %v893, -inf
    %902 = vmax.xlane.f32.xlu0 %v901
    %v903 = vpop.xlane.xlu0 %902
    %v904 = vsub.f32 %v843, %v900
    %v905 = vsub.f32 %v893, %v903
    %v906 = vmul.f32 %v904, 1.442695
    %v907 = vpow.pop %v906
    %v908 = vmul.f32 %v905, 1.442695
    %v909 = vpow.pop %v908
    %v910 = vsel %vm680, %v907, 0.0
    %911 = vadd.xlane.f32.xlu0 %v910
    %v912 = vpop.xlane.xlu0 %911
    %v913 = vsel %vm680, %v909, 0.0
    %914 = vadd.xlane.f32.xlu0 %v913
    %v915 = vpop.xlane.xlu0 %914
    %v916 = vrcp.pop %v912
    %v917 = vrcp.pop %v915
    %v918 = vmul.f32 %v907, %v916
    %v919 = vmul.f32 %v909, %v917
    %v920 = vpack.c.bf16 %v918, %v918
    %v921 = vpack.c.bf16 %v919, %v919
    %922 = vrot.lane.b32.xlu0 %v585, 96
    %v923 = vpop.permute.xlu0 %922
    %v925 = vsel %vm680, %v920, 0
    %v928 = vsel %vm708, %v923, 0
    %930 = vmatprep.subr.bf16.mxu0 0
    %931 = vmatpush1.bf16.msra.mxu0 %v928
    %932 = vmatprep.subr.bf16.mxu0 0
    %933 = vmatpush1.bf16.msra.mxu0 0
    %934 = vmatprep.subr.bf16.mxu0 0
    %935 = vmatpush1.bf16.msra.mxu0 0
    %936 = vmatprep.subr.bf16.mxu0 0
    %937 = vmatpush1.bf16.msra.mxu0 0
    %938 = vmatprep.subr.bf16.mxu0 0
    %939 = vmatpush1.bf16.msra.mxu0 0
    %940 = vmatprep.subr.bf16.mxu0 0
    %941 = vmatpush1.bf16.msra.mxu0 0
    %942 = vmatprep.subr.bf16.mxu0 0
    %943 = vmatpush1.bf16.msra.mxu0 0
    %944 = vmatprep.subr.bf16.mxu0 0
    %945 = vmatpush1.bf16.msra.mxu0 0
    %946 = vmatprep.subr.bf16.mxu0 0
    %947 = vmatpush1.bf16.msra.mxu0 0
    %948 = vmatprep.subr.bf16.mxu0 0
    %949 = vmatpush1.bf16.msra.mxu0 0
    %950 = vmatprep.subr.bf16.mxu0 0
    %951 = vmatpush1.bf16.msra.mxu0 0
    %952 = vmatprep.subr.bf16.mxu0 0
    %953 = vmatpush1.bf16.msra.mxu0 0
    %954 = vmatprep.subr.bf16.mxu0 0
    %955 = vmatpush1.bf16.msra.mxu0 0
    %956 = vmatprep.subr.bf16.mxu0 0
    %957 = vmatpush1.bf16.msra.mxu0 0
    %958 = vmatprep.subr.bf16.mxu0 0
    %959 = vmatpush1.bf16.msra.mxu0 0
    %960 = vmatprep.subr.bf16.mxu0 0
    %961 = vmatpush1.bf16.msra.mxu0 0
    %962 = vmatprep.mubr.bf16.mxu0 0
    %963 = vmatmul.mubr.bf16.gmra.mrb[0].mxu0 %v925
    %v964 = vpop.f32.mrb[0].mxu0
    %v965 = vadd.f32 0.0, %v964
    %v966 = vpop.f32.mrb[0].mxu0
    %v967 = vpop.f32.mrb[0].mxu0
    %v968 = vpop.f32.mrb[0].mxu0
    %969 = vdwg.mxu0
    %970 = vrot.lane.b32.xlu0 %v586, 96
    %v971 = vpop.permute.xlu0 %970
    %v973 = vsel %vm680, %v921, 0
    %v976 = vsel %vm708, %v971, 0
    %978 = vmatprep.subr.bf16.mxu0 0
    %979 = vmatpush1.bf16.msra.mxu0 %v976
    %980 = vmatprep.subr.bf16.mxu0 0
    %981 = vmatpush1.bf16.msra.mxu0 0
    %982 = vmatprep.subr.bf16.mxu0 0
    %983 = vmatpush1.bf16.msra.mxu0 0
    %984 = vmatprep.subr.bf16.mxu0 0
    %985 = vmatpush1.bf16.msra.mxu0 0
    %986 = vmatprep.subr.bf16.mxu0 0
    %987 = vmatpush1.bf16.msra.mxu0 0
    %988 = vmatprep.subr.bf16.mxu0 0
    %989 = vmatpush1.bf16.msra.mxu0 0
    %990 = vmatprep.subr.bf16.mxu0 0
    %991 = vmatpush1.bf16.msra.mxu0 0
    %992 = vmatprep.subr.bf16.mxu0 0
    %993 = vmatpush1.bf16.msra.mxu0 0
    %994 = vmatprep.subr.bf16.mxu0 0
    %995 = vmatpush1.bf16.msra.mxu0 0
    %996 = vmatprep.subr.bf16.mxu0 0
    %997 = vmatpush1.bf16.msra.mxu0 0
    %998 = vmatprep.subr.bf16.mxu0 0
    %999 = vmatpush1.bf16.msra.mxu0 0
    %1000 = vmatprep.subr.bf16.mxu0 0
    %1001 = vmatpush1.bf16.msra.mxu0 0
    %1002 = vmatprep.subr.bf16.mxu0 0
    %1003 = vmatpush1.bf16.msra.mxu0 0
    %1004 = vmatprep.subr.bf16.mxu0 0
    %1005 = vmatpush1.bf16.msra.mxu0 0
    %1006 = vmatprep.subr.bf16.mxu0 0
    %1007 = vmatpush1.bf16.msra.mxu0 0
    %1008 = vmatprep.subr.bf16.mxu0 0
    %1009 = vmatpush1.bf16.msra.mxu0 0
    %1010 = vmatprep.mubr.bf16.mxu0 0
    %1011 = vmatmul.mubr.bf16.gmra.mrb[0].mxu0 %v973
    %v1012 = vpop.f32.mrb[0].mxu0
    %v1013 = vadd.f32 0.0, %v1012
    %v1014 = vpop.f32.mrb[0].mxu0
    %v1015 = vpop.f32.mrb[0].mxu0
    %v1016 = vpop.f32.mrb[0].mxu0
    %1017 = vdwg.mxu0
    %1018 = vrot.lane.b32.xlu0 %v575, 64
    %v1019 = vpop.permute.xlu0 %1018
    %1020 = vrot.lane.b32.xlu0 %v580, 64
    %v1021 = vpop.permute.xlu0 %1020
    %v1023 = vsel %vm587, %v1019, 0
    %v1026 = vsel %vm587, %v1021, 0
    %1028 = vmatprep.subr.bf16.mxu0 0
    %1029 = vmatpush1.bf16.xpose.msra.mxu0 %v1026
    %1030 = vmatprep.subr.bf16.mxu0 0
    %1031 = vmatpush1.bf16.xpose.msra.mxu0 0
    %1032 = vmatprep.subr.bf16.mxu0 0
    %1033 = vmatpush1.bf16.xpose.msra.mxu0 0
    %1034 = vmatprep.subr.bf16.mxu0 0
    %1035 = vmatpush1.bf16.xpose.msra.mxu0 0
    %1036 = vmatprep.subr.bf16.mxu0 0
    %1037 = vmatpush1.bf16.xpose.msra.mxu0 0
    %1038 = vmatprep.subr.bf16.mxu0 0
    %1039 = vmatpush1.bf16.xpose.msra.mxu0 0
    %1040 = vmatprep.subr.bf16.mxu0 0
    %1041 = vmatpush1.bf16.xpose.msra.mxu0 0
    %1042 = vmatprep.subr.bf16.mxu0 0
    %1043 = vmatpush1.bf16.xpose.msra.mxu0 0
    %1044 = vmatprep.subr.bf16.mxu0 0
    %1045 = vmatpush1.bf16.xpose.msra.mxu0 0
    %1046 = vmatprep.subr.bf16.mxu0 0
    %1047 = vmatpush1.bf16.xpose.msra.mxu0 0
    %1048 = vmatprep.subr.bf16.mxu0 0
    %1049 = vmatpush1.bf16.xpose.msra.mxu0 0
    %1050 = vmatprep.subr.bf16.mxu0 0
    %1051 = vmatpush1.bf16.xpose.msra.mxu0 0
    %1052 = vmatprep.subr.bf16.mxu0 0
    %1053 = vmatpush1.bf16.xpose.msra.mxu0 0
    %1054 = vmatprep.subr.bf16.mxu0 0
    %1055 = vmatpush1.bf16.xpose.msra.mxu0 0
    %1056 = vmatprep.subr.bf16.mxu0 0
    %1057 = vmatpush1.bf16.xpose.msra.mxu0 0
    %1058 = vmatprep.subr.bf16.mxu0 0
    %1059 = vmatpush1.bf16.xpose.msra.mxu0 0
    %1060 = vmatprep.mubr.bf16.mxu0 0
    %1061 = vmatmul.mubr.bf16.gmra.mrb[0].mxu0 %v1023
    %v1062 = vpop.f32.mrb[0].mxu0
    %v1063 = vadd.f32 0.0, %v1062
    %v1064 = vpop.f32.mrb[0].mxu0
    %v1065 = vpop.f32.mrb[0].mxu0
    %v1066 = vpop.f32.mrb[0].mxu0
    %1067 = vdwg.mxu0
    %1068 = vrot.lane.b32.xlu0 %v576, 64
    %v1069 = vpop.permute.xlu0 %1068
    %1070 = vrot.lane.b32.xlu0 %v581, 64
    %v1071 = vpop.permute.xlu0 %1070
    %v1073 = vsel %vm587, %v1069, 0
    %v1076 = vsel %vm587, %v1071, 0
    %1078 = vmatprep.subr.bf16.mxu0 0
    %1079 = vmatpush1.bf16.xpose.msra.mxu0 %v1076
    %1080 = vmatprep.subr.bf16.mxu0 0
    %1081 = vmatpush1.bf16.xpose.msra.mxu0 0
    %1082 = vmatprep.subr.bf16.mxu0 0
    %1083 = vmatpush1.bf16.xpose.msra.mxu0 0
    %1084 = vmatprep.subr.bf16.mxu0 0
    %1085 = vmatpush1.bf16.xpose.msra.mxu0 0
    %1086 = vmatprep.subr.bf16.mxu0 0
    %1087 = vmatpush1.bf16.xpose.msra.mxu0 0
    %1088 = vmatprep.subr.bf16.mxu0 0
    %1089 = vmatpush1.bf16.xpose.msra.mxu0 0
    %1090 = vmatprep.subr.bf16.mxu0 0
    %1091 = vmatpush1.bf16.xpose.msra.mxu0 0
    %1092 = vmatprep.subr.bf16.mxu0 0
    %1093 = vmatpush1.bf16.xpose.msra.mxu0 0
    %1094 = vmatprep.subr.bf16.mxu0 0
    %1095 = vmatpush1.bf16.xpose.msra.mxu0 0
    %1096 = vmatprep.subr.bf16.mxu0 0
    %1097 = vmatpush1.bf16.xpose.msra.mxu0 0
    %1098 = vmatprep.subr.bf16.mxu0 0
    %1099 = vmatpush1.bf16.xpose.msra.mxu0 0
    %1100 = vmatprep.subr.bf16.mxu0 0
    %1101 = vmatpush1.bf16.xpose.msra.mxu0 0
    %1102 = vmatprep.subr.bf16.mxu0 0
    %1103 = vmatpush1.bf16.xpose.msra.mxu0 0
    %1104 = vmatprep.subr.bf16.mxu0 0
    %1105 = vmatpush1.bf16.xpose.msra.mxu0 0
    %1106 = vmatprep.subr.bf16.mxu0 0
    %1107 = vmatpush1.bf16.xpose.msra.mxu0 0
    %1108 = vmatprep.subr.bf16.mxu0 0
    %1109 = vmatpush1.bf16.xpose.msra.mxu0 0
    %1110 = vmatprep.mubr.bf16.mxu0 0
    %1111 = vmatmul.mubr.bf16.gmra.mrb[0].mxu0 %v1073
    %v1112 = vpop.f32.mrb[0].mxu0
    %v1113 = vadd.f32 0.0, %v1112
    %v1114 = vpop.f32.mrb[0].mxu0
    %v1115 = vpop.f32.mrb[0].mxu0
    %v1116 = vpop.f32.mrb[0].mxu0
    %1117 = vdwg.mxu0
    %v1118 = vsel %vm680, %v1063, -inf
    %1119 = vmax.xlane.f32.xlu0 %v1118
    %v1120 = vpop.xlane.xlu0 %1119
    %v1121 = vsel %vm680, %v1113, -inf
    %1122 = vmax.xlane.f32.xlu0 %v1121
    %v1123 = vpop.xlane.xlu0 %1122
    %v1124 = vsub.f32 %v1063, %v1120
    %v1125 = vsub.f32 %v1113, %v1123
    %v1126 = vmul.f32 %v1124, 1.442695
    %v1127 = vpow.pop %v1126
    %v1128 = vmul.f32 %v1125, 1.442695
    %v1129 = vpow.pop %v1128
    %v1130 = vsel %vm680, %v1127, 0.0
    %1131 = vadd.xlane.f32.xlu0 %v1130
    %v1132 = vpop.xlane.xlu0 %1131
    %v1133 = vsel %vm680, %v1129, 0.0
    %1134 = vadd.xlane.f32.xlu0 %v1133
    %v1135 = vpop.xlane.xlu0 %1134
    %v1136 = vrcp.pop %v1132
    %v1137 = vrcp.pop %v1135
    %v1138 = vmul.f32 %v1127, %v1136
    %v1139 = vmul.f32 %v1129, %v1137
    %v1140 = vpack.c.bf16 %v1138, %v1138
    %v1141 = vpack.c.bf16 %v1139, %v1139
    %1142 = vrot.lane.b32.xlu0 %v585, 64
    %v1143 = vpop.permute.xlu0 %1142
    %v1145 = vsel %vm680, %v1140, 0
    %v1148 = vsel %vm708, %v1143, 0
    %1150 = vmatprep.subr.bf16.mxu0 0
    %1151 = vmatpush1.bf16.msra.mxu0 %v1148
    %1152 = vmatprep.subr.bf16.mxu0 0
    %1153 = vmatpush1.bf16.msra.mxu0 0
    %1154 = vmatprep.subr.bf16.mxu0 0
    %1155 = vmatpush1.bf16.msra.mxu0 0
    %1156 = vmatprep.subr.bf16.mxu0 0
    %1157 = vmatpush1.bf16.msra.mxu0 0
    %1158 = vmatprep.subr.bf16.mxu0 0
    %1159 = vmatpush1.bf16.msra.mxu0 0
    %1160 = vmatprep.subr.bf16.mxu0 0
    %1161 = vmatpush1.bf16.msra.mxu0 0
    %1162 = vmatprep.subr.bf16.mxu0 0
    %1163 = vmatpush1.bf16.msra.mxu0 0
    %1164 = vmatprep.subr.bf16.mxu0 0
    %1165 = vmatpush1.bf16.msra.mxu0 0
    %1166 = vmatprep.subr.bf16.mxu0 0
    %1167 = vmatpush1.bf16.msra.mxu0 0
    %1168 = vmatprep.subr.bf16.mxu0 0
    %1169 = vmatpush1.bf16.msra.mxu0 0
    %1170 = vmatprep.subr.bf16.mxu0 0
    %1171 = vmatpush1.bf16.msra.mxu0 0
    %1172 = vmatprep.subr.bf16.mxu0 0
    %1173 = vmatpush1.bf16.msra.mxu0 0
    %1174 = vmatprep.subr.bf16.mxu0 0
    %1175 = vmatpush1.bf16.msra.mxu0 0
    %1176 = vmatprep.subr.bf16.mxu0 0
    %1177 = vmatpush1.bf16.msra.mxu0 0
    %1178 = vmatprep.subr.bf16.mxu0 0
    %1179 = vmatpush1.bf16.msra.mxu0 0
    %1180 = vmatprep.subr.bf16.mxu0 0
    %1181 = vmatpush1.bf16.msra.mxu0 0
    %1182 = vmatprep.mubr.bf16.mxu0 0
    %1183 = vmatmul.mubr.bf16.gmra.mrb[0].mxu0 %v1145
    %v1184 = vpop.f32.mrb[0].mxu0
    %v1185 = vadd.f32 0.0, %v1184
    %v1186 = vpop.f32.mrb[0].mxu0
    %v1187 = vpop.f32.mrb[0].mxu0
    %v1188 = vpop.f32.mrb[0].mxu0
    %1189 = vdwg.mxu0
    %1190 = vrot.lane.b32.xlu0 %v586, 64
    %v1191 = vpop.permute.xlu0 %1190
    %v1193 = vsel %vm680, %v1141, 0
    %v1196 = vsel %vm708, %v1191, 0
    %1198 = vmatprep.subr.bf16.mxu0 0
    %1199 = vmatpush1.bf16.msra.mxu0 %v1196
    %1200 = vmatprep.subr.bf16.mxu0 0
    %1201 = vmatpush1.bf16.msra.mxu0 0
    %1202 = vmatprep.subr.bf16.mxu0 0
    %1203 = vmatpush1.bf16.msra.mxu0 0
    %1204 = vmatprep.subr.bf16.mxu0 0
    %1205 = vmatpush1.bf16.msra.mxu0 0
    %1206 = vmatprep.subr.bf16.mxu0 0
    %1207 = vmatpush1.bf16.msra.mxu0 0
    %1208 = vmatprep.subr.bf16.mxu0 0
    %1209 = vmatpush1.bf16.msra.mxu0 0
    %1210 = vmatprep.subr.bf16.mxu0 0
    %1211 = vmatpush1.bf16.msra.mxu0 0
    %1212 = vmatprep.subr.bf16.mxu0 0
    %1213 = vmatpush1.bf16.msra.mxu0 0
    %1214 = vmatprep.subr.bf16.mxu0 0
    %1215 = vmatpush1.bf16.msra.mxu0 0
    %1216 = vmatprep.subr.bf16.mxu0 0
    %1217 = vmatpush1.bf16.msra.mxu0 0
    %1218 = vmatprep.subr.bf16.mxu0 0
    %1219 = vmatpush1.bf16.msra.mxu0 0
    %1220 = vmatprep.subr.bf16.mxu0 0
    %1221 = vmatpush1.bf16.msra.mxu0 0
    %1222 = vmatprep.subr.bf16.mxu0 0
    %1223 = vmatpush1.bf16.msra.mxu0 0
    %1224 = vmatprep.subr.bf16.mxu0 0
    %1225 = vmatpush1.bf16.msra.mxu0 0
    %1226 = vmatprep.subr.bf16.mxu0 0
    %1227 = vmatpush1.bf16.msra.mxu0 0
    %1228 = vmatprep.subr.bf16.mxu0 0
    %1229 = vmatpush1.bf16.msra.mxu0 0
    %1230 = vmatprep.mubr.bf16.mxu0 0
    %1231 = vmatmul.mubr.bf16.gmra.mrb[0].mxu0 %v1193
    %v1232 = vpop.f32.mrb[0].mxu0
    %v1233 = vadd.f32 0.0, %v1232
    %v1234 = vpop.f32.mrb[0].mxu0
    %v1235 = vpop.f32.mrb[0].mxu0
    %v1236 = vpop.f32.mrb[0].mxu0
    %1237 = vdwg.mxu0
    %1238 = vrot.lane.b32.xlu0 %v575, 32
    %v1239 = vpop.permute.xlu0 %1238
    %1240 = vrot.lane.b32.xlu0 %v580, 32
    %v1241 = vpop.permute.xlu0 %1240
    %v1243 = vsel %vm587, %v1239, 0
    %v1246 = vsel %vm587, %v1241, 0
    %1248 = vmatprep.subr.bf16.mxu0 0
    %1249 = vmatpush1.bf16.xpose.msra.mxu0 %v1246
    %1250 = vmatprep.subr.bf16.mxu0 0
    %1251 = vmatpush1.bf16.xpose.msra.mxu0 0
    %1252 = vmatprep.subr.bf16.mxu0 0
    %1253 = vmatpush1.bf16.xpose.msra.mxu0 0
    %1254 = vmatprep.subr.bf16.mxu0 0
    %1255 = vmatpush1.bf16.xpose.msra.mxu0 0
    %1256 = vmatprep.subr.bf16.mxu0 0
    %1257 = vmatpush1.bf16.xpose.msra.mxu0 0
    %1258 = vmatprep.subr.bf16.mxu0 0
    %1259 = vmatpush1.bf16.xpose.msra.mxu0 0
    %1260 = vmatprep.subr.bf16.mxu0 0
    %1261 = vmatpush1.bf16.xpose.msra.mxu0 0
    %1262 = vmatprep.subr.bf16.mxu0 0
    %1263 = vmatpush1.bf16.xpose.msra.mxu0 0
    %1264 = vmatprep.subr.bf16.mxu0 0
    %1265 = vmatpush1.bf16.xpose.msra.mxu0 0
    %1266 = vmatprep.subr.bf16.mxu0 0
    %1267 = vmatpush1.bf16.xpose.msra.mxu0 0
    %1268 = vmatprep.subr.bf16.mxu0 0
    %1269 = vmatpush1.bf16.xpose.msra.mxu0 0
    %1270 = vmatprep.subr.bf16.mxu0 0
    %1271 = vmatpush1.bf16.xpose.msra.mxu0 0
    %1272 = vmatprep.subr.bf16.mxu0 0
    %1273 = vmatpush1.bf16.xpose.msra.mxu0 0
    %1274 = vmatprep.subr.bf16.mxu0 0
    %1275 = vmatpush1.bf16.xpose.msra.mxu0 0
    %1276 = vmatprep.subr.bf16.mxu0 0
    %1277 = vmatpush1.bf16.xpose.msra.mxu0 0
    %1278 = vmatprep.subr.bf16.mxu0 0
    %1279 = vmatpush1.bf16.xpose.msra.mxu0 0
    %1280 = vmatprep.mubr.bf16.mxu0 0
    %1281 = vmatmul.mubr.bf16.gmra.mrb[0].mxu0 %v1243
    %v1282 = vpop.f32.mrb[0].mxu0
    %v1283 = vadd.f32 0.0, %v1282
    %v1284 = vpop.f32.mrb[0].mxu0
    %v1285 = vpop.f32.mrb[0].mxu0
    %v1286 = vpop.f32.mrb[0].mxu0
    %1287 = vdwg.mxu0
    %1288 = vrot.lane.b32.xlu0 %v576, 32
    %v1289 = vpop.permute.xlu0 %1288
    %1290 = vrot.lane.b32.xlu0 %v581, 32
    %v1291 = vpop.permute.xlu0 %1290
    %v1293 = vsel %vm587, %v1289, 0
    %v1296 = vsel %vm587, %v1291, 0
    %1298 = vmatprep.subr.bf16.mxu0 0
    %1299 = vmatpush1.bf16.xpose.msra.mxu0 %v1296
    %1300 = vmatprep.subr.bf16.mxu0 0
    %1301 = vmatpush1.bf16.xpose.msra.mxu0 0
    %1302 = vmatprep.subr.bf16.mxu0 0
    %1303 = vmatpush1.bf16.xpose.msra.mxu0 0
    %1304 = vmatprep.subr.bf16.mxu0 0
    %1305 = vmatpush1.bf16.xpose.msra.mxu0 0
    %1306 = vmatprep.subr.bf16.mxu0 0
    %1307 = vmatpush1.bf16.xpose.msra.mxu0 0
    %1308 = vmatprep.subr.bf16.mxu0 0
    %1309 = vmatpush1.bf16.xpose.msra.mxu0 0
    %1310 = vmatprep.subr.bf16.mxu0 0
    %1311 = vmatpush1.bf16.xpose.msra.mxu0 0
    %1312 = vmatprep.subr.bf16.mxu0 0
    %1313 = vmatpush1.bf16.xpose.msra.mxu0 0
    %1314 = vmatprep.subr.bf16.mxu0 0
    %1315 = vmatpush1.bf16.xpose.msra.mxu0 0
    %1316 = vmatprep.subr.bf16.mxu0 0
    %1317 = vmatpush1.bf16.xpose.msra.mxu0 0
    %1318 = vmatprep.subr.bf16.mxu0 0
    %1319 = vmatpush1.bf16.xpose.msra.mxu0 0
    %1320 = vmatprep.subr.bf16.mxu0 0
    %1321 = vmatpush1.bf16.xpose.msra.mxu0 0
    %1322 = vmatprep.subr.bf16.mxu0 0
    %1323 = vmatpush1.bf16.xpose.msra.mxu0 0
    %1324 = vmatprep.subr.bf16.mxu0 0
    %1325 = vmatpush1.bf16.xpose.msra.mxu0 0
    %1326 = vmatprep.subr.bf16.mxu0 0
    %1327 = vmatpush1.bf16.xpose.msra.mxu0 0
    %1328 = vmatprep.subr.bf16.mxu0 0
    %1329 = vmatpush1.bf16.xpose.msra.mxu0 0
    %1330 = vmatprep.mubr.bf16.mxu0 0
    %1331 = vmatmul.mubr.bf16.gmra.mrb[0].mxu0 %v1293
    %v1332 = vpop.f32.mrb[0].mxu0
    %v1333 = vadd.f32 0.0, %v1332
    %v1334 = vpop.f32.mrb[0].mxu0
    %v1335 = vpop.f32.mrb[0].mxu0
    %v1336 = vpop.f32.mrb[0].mxu0
    %1337 = vdwg.mxu0
    %v1338 = vsel %vm680, %v1283, -inf
    %1339 = vmax.xlane.f32.xlu0 %v1338
    %v1340 = vpop.xlane.xlu0 %1339
    %v1341 = vsel %vm680, %v1333, -inf
    %1342 = vmax.xlane.f32.xlu0 %v1341
    %v1343 = vpop.xlane.xlu0 %1342
    %v1344 = vsub.f32 %v1283, %v1340
    %v1345 = vsub.f32 %v1333, %v1343
    %v1346 = vmul.f32 %v1344, 1.442695
    %v1347 = vpow.pop %v1346
    %v1348 = vmul.f32 %v1345, 1.442695
    %v1349 = vpow.pop %v1348
    %v1350 = vsel %vm680, %v1347, 0.0
    %1351 = vadd.xlane.f32.xlu0 %v1350
    %v1352 = vpop.xlane.xlu0 %1351
    %v1353 = vsel %vm680, %v1349, 0.0
    %1354 = vadd.xlane.f32.xlu0 %v1353
    %v1355 = vpop.xlane.xlu0 %1354
    %v1356 = vrcp.pop %v1352
    %v1357 = vrcp.pop %v1355
    %v1358 = vmul.f32 %v1347, %v1356
    %v1359 = vmul.f32 %v1349, %v1357
    %v1360 = vpack.c.bf16 %v1358, %v1358
    %v1361 = vpack.c.bf16 %v1359, %v1359
    %1362 = vrot.lane.b32.xlu0 %v585, 32
    %v1363 = vpop.permute.xlu0 %1362
    %v1365 = vsel %vm680, %v1360, 0
    %v1368 = vsel %vm708, %v1363, 0
    %1370 = vmatprep.subr.bf16.mxu0 0
    %1371 = vmatpush1.bf16.msra.mxu0 %v1368
    %1372 = vmatprep.subr.bf16.mxu0 0
    %1373 = vmatpush1.bf16.msra.mxu0 0
    %1374 = vmatprep.subr.bf16.mxu0 0
    %1375 = vmatpush1.bf16.msra.mxu0 0
    %1376 = vmatprep.subr.bf16.mxu0 0
    %1377 = vmatpush1.bf16.msra.mxu0 0
    %1378 = vmatprep.subr.bf16.mxu0 0
    %1379 = vmatpush1.bf16.msra.mxu0 0
    %1380 = vmatprep.subr.bf16.mxu0 0
    %1381 = vmatpush1.bf16.msra.mxu0 0
    %1382 = vmatprep.subr.bf16.mxu0 0
    %1383 = vmatpush1.bf16.msra.mxu0 0
    %1384 = vmatprep.subr.bf16.mxu0 0
    %1385 = vmatpush1.bf16.msra.mxu0 0
    %1386 = vmatprep.subr.bf16.mxu0 0
    %1387 = vmatpush1.bf16.msra.mxu0 0
    %1388 = vmatprep.subr.bf16.mxu0 0
    %1389 = vmatpush1.bf16.msra.mxu0 0
    %1390 = vmatprep.subr.bf16.mxu0 0
    %1391 = vmatpush1.bf16.msra.mxu0 0
    %1392 = vmatprep.subr.bf16.mxu0 0
    %1393 = vmatpush1.bf16.msra.mxu0 0
    %1394 = vmatprep.subr.bf16.mxu0 0
    %1395 = vmatpush1.bf16.msra.mxu0 0
    %1396 = vmatprep.subr.bf16.mxu0 0
    %1397 = vmatpush1.bf16.msra.mxu0 0
    %1398 = vmatprep.subr.bf16.mxu0 0
    %1399 = vmatpush1.bf16.msra.mxu0 0
    %1400 = vmatprep.subr.bf16.mxu0 0
    %1401 = vmatpush1.bf16.msra.mxu0 0
    %1402 = vmatprep.mubr.bf16.mxu0 0
    %1403 = vmatmul.mubr.bf16.gmra.mrb[0].mxu0 %v1365
    %v1404 = vpop.f32.mrb[0].mxu0
    %v1405 = vadd.f32 0.0, %v1404
    %v1406 = vpop.f32.mrb[0].mxu0
    %v1407 = vpop.f32.mrb[0].mxu0
    %v1408 = vpop.f32.mrb[0].mxu0
    %1409 = vdwg.mxu0
    %1410 = vrot.lane.b32.xlu0 %v586, 32
    %v1411 = vpop.permute.xlu0 %1410
    %v1413 = vsel %vm680, %v1361, 0
    %v1416 = vsel %vm708, %v1411, 0
    %1418 = vmatprep.subr.bf16.mxu0 0
    %1419 = vmatpush1.bf16.msra.mxu0 %v1416
    %1420 = vmatprep.subr.bf16.mxu0 0
    %1421 = vmatpush1.bf16.msra.mxu0 0
    %1422 = vmatprep.subr.bf16.mxu0 0
    %1423 = vmatpush1.bf16.msra.mxu0 0
    %1424 = vmatprep.subr.bf16.mxu0 0
    %1425 = vmatpush1.bf16.msra.mxu0 0
    %1426 = vmatprep.subr.bf16.mxu0 0
    %1427 = vmatpush1.bf16.msra.mxu0 0
    %1428 = vmatprep.subr.bf16.mxu0 0
    %1429 = vmatpush1.bf16.msra.mxu0 0
    %1430 = vmatprep.subr.bf16.mxu0 0
    %1431 = vmatpush1.bf16.msra.mxu0 0
    %1432 = vmatprep.subr.bf16.mxu0 0
    %1433 = vmatpush1.bf16.msra.mxu0 0
    %1434 = vmatprep.subr.bf16.mxu0 0
    %1435 = vmatpush1.bf16.msra.mxu0 0
    %1436 = vmatprep.subr.bf16.mxu0 0
    %1437 = vmatpush1.bf16.msra.mxu0 0
    %1438 = vmatprep.subr.bf16.mxu0 0
    %1439 = vmatpush1.bf16.msra.mxu0 0
    %1440 = vmatprep.subr.bf16.mxu0 0
    %1441 = vmatpush1.bf16.msra.mxu0 0
    %1442 = vmatprep.subr.bf16.mxu0 0
    %1443 = vmatpush1.bf16.msra.mxu0 0
    %1444 = vmatprep.subr.bf16.mxu0 0
    %1445 = vmatpush1.bf16.msra.mxu0 0
    %1446 = vmatprep.subr.bf16.mxu0 0
    %1447 = vmatpush1.bf16.msra.mxu0 0
    %1448 = vmatprep.subr.bf16.mxu0 0
    %1449 = vmatpush1.bf16.msra.mxu0 0
    %1450 = vmatprep.mubr.bf16.mxu0 0
    %1451 = vmatmul.mubr.bf16.gmra.mrb[0].mxu0 %v1413
    %v1452 = vpop.f32.mrb[0].mxu0
    %v1453 = vadd.f32 0.0, %v1452
    %v1454 = vpop.f32.mrb[0].mxu0
    %v1455 = vpop.f32.mrb[0].mxu0
    %v1456 = vpop.f32.mrb[0].mxu0
    %1457 = vdwg.mxu0
    %1460 = vrot.lane.b32.xlu0 %v965, 32
    %v1461 = vpop.permute.xlu0 %1460
    %1462 = vrot.lane.b32.xlu0 %v1013, 32
    %v1463 = vpop.permute.xlu0 %1462
    %1468 = vrot.lane.b32.xlu0 %v1185, 64
    %v1469 = vpop.permute.xlu0 %1468
    %1470 = vrot.lane.b32.xlu0 %v1233, 64
    %v1471 = vpop.permute.xlu0 %1470
    %1476 = vrot.lane.b32.xlu0 %v1405, 96
    %v1477 = vpop.permute.xlu0 %1476
    %1478 = vrot.lane.b32.xlu0 %v1453, 96
    %v1479 = vpop.permute.xlu0 %1478
    %v1482 = vsel %vm587, %v747, %v1461
    %v1483 = vsel %vm587, %v793, %v1463
    %v1484 = vsel %vm138, %v1482, %v1469
    %v1485 = vsel %vm138, %v1483, %v1471
    %vm1486 = vcmask 785408
    %v1487 = vsel %vm1486, %v1484, %v1477
    %v1488 = vsel %vm1486, %v1485, %v1479
    %v1489 = vpack.c.bf16 %v1488, %v1487
    %v1491 = vlaneseq
    %v1492 = vshrl.u32 %v1491, 7
    %v1493 = vsub.s32 0, %v1492
    %v1494 = vrot.slane %v267, %v1493
    %v1512 = vunpack.c.l.b16 %v218
    %v1513 = vunpack.c.l.b16 %v219
    %v1514 = vunpack.c.l.b16 %v220
    %v1515 = vunpack.c.l.b16 %v221
    %v1516 = vunpack.c.l.b16 %v222
    %v1517 = vunpack.c.l.b16 %v223
    %v1518 = vunpack.c.l.b16 %v224
    %v1519 = vunpack.c.l.b16 %v225
    %v1520 = vunpack.c.l.b16 %v226
    %v1521 = vunpack.c.l.b16 %v227
    %v1522 = vunpack.c.l.b16 %v228
    %v1523 = vunpack.c.l.b16 %v229
    %v1524 = vunpack.c.l.b16 %v230
    %v1525 = vunpack.c.l.b16 %v231
    %v1526 = vunpack.c.l.b16 %v232
    %v1527 = vunpack.c.l.b16 %v233
    %v1528 = vpack.c.b16 %v1513, %v1512
    %v1529 = vpack.c.b16 %v1515, %v1514
    %v1530 = vpack.c.b16 %v1517, %v1516
    %v1531 = vpack.c.b16 %v1519, %v1518
    %v1532 = vpack.c.b16 %v1521, %v1520
    %v1533 = vpack.c.b16 %v1523, %v1522
    %v1534 = vpack.c.b16 %v1525, %v1524
    %v1535 = vpack.c.b16 %v1527, %v1526
    %1544 = vmatprep.subr.bf16.mxu0 0
    %1545 = vmatpush1.bf16.msra.mxu0 %v1528
    %1546 = vmatprep.subr.bf16.mxu0 0
    %1547 = vmatpush1.bf16.msra.mxu0 %v1529
    %1548 = vmatprep.subr.bf16.mxu0 0
    %1549 = vmatpush1.bf16.msra.mxu0 %v1530
    %1550 = vmatprep.subr.bf16.mxu0 0
    %1551 = vmatpush1.bf16.msra.mxu0 %v1531
    %1552 = vmatprep.subr.bf16.mxu0 0
    %1553 = vmatpush1.bf16.msra.mxu0 %v1532
    %1554 = vmatprep.subr.bf16.mxu0 0
    %1555 = vmatpush1.bf16.msra.mxu0 %v1533
    %1556 = vmatprep.subr.bf16.mxu0 0
    %1557 = vmatpush1.bf16.msra.mxu0 %v1534
    %1558 = vmatprep.subr.bf16.mxu0 0
    %1559 = vmatpush1.bf16.msra.mxu0 %v1535
    %1560 = vmatprep.subr.bf16.mxu0 0
    %1561 = vmatpush1.bf16.msra.mxu0 0
    %1562 = vmatprep.subr.bf16.mxu0 0
    %1563 = vmatpush1.bf16.msra.mxu0 0
    %1564 = vmatprep.subr.bf16.mxu0 0
    %1565 = vmatpush1.bf16.msra.mxu0 0
    %1566 = vmatprep.subr.bf16.mxu0 0
    %1567 = vmatpush1.bf16.msra.mxu0 0
    %1568 = vmatprep.subr.bf16.mxu0 0
    %1569 = vmatpush1.bf16.msra.mxu0 0
    %1570 = vmatprep.subr.bf16.mxu0 0
    %1571 = vmatpush1.bf16.msra.mxu0 0
    %1572 = vmatprep.subr.bf16.mxu0 0
    %1573 = vmatpush1.bf16.msra.mxu0 0
    %1574 = vmatprep.subr.bf16.mxu0 0
    %1575 = vmatpush1.bf16.msra.mxu0 0
    %1576 = vmatprep.mubr.bf16.mxu0 0
    %1577 = vmatmul.mubr.bf16.gmra.mrb[0].mxu0 %v1489
    %v1578 = vpop.f32.mrb[0].mxu0
    %v1579 = vadd.f32 %v1494, %v1578
    %v1580 = vpop.f32.mrb[0].mxu0
    %v1581 = vpop.f32.mrb[0].mxu0
    %v1582 = vadd.f32 %v1494, %v1581
    %v1583 = vpop.f32.mrb[0].mxu0
    %1584 = vdwg.mxu0
    %v1585 = vadd.f32 %v184, %v1579
    %v1586 = vadd.f32 %v185, %v1582
    %1587 = vadd.xlane.f32.xlu0 %v1585
    %v1588 = vpop.xlane.xlu0 %1587
    %1589 = vadd.xlane.f32.xlu0 %v1586
    %v1590 = vpop.xlane.xlu0 %1589
    %v1591 = vrcp.pop 128.0
    %v1592 = vmul.f32 %v1588, %v1591
    %v1593 = vmul.f32 %v1590, %v1591
    %v1594 = vsub.f32 %v1585, %v1592
    %v1595 = vsub.f32 %v1586, %v1593
    %v1596 = vmul.f32 %v1594, %v1594
    %v1597 = vmul.f32 %v1595, %v1595
    %1598 = vadd.xlane.f32.xlu0 %v1596
    %v1599 = vpop.xlane.xlu0 %1598
    %1600 = vadd.xlane.f32.xlu0 %v1597
    %v1601 = vpop.xlane.xlu0 %1600
    %v1602 = vmul.f32 %v1599, %v1591
    %v1603 = vmul.f32 %v1601, %v1591
    %v1604 = vadd.f32 %v1602, 1e-05
    %v1605 = vadd.f32 %v1603, 1e-05
    %v1606 = vrsqrt.pop %v1604
    %v1607 = vrsqrt.pop %v1605
    %v1608 = vmul.f32 %v1594, %v1606
    %v1609 = vmul.f32 %v1595, %v1607
    %v1611 = vlaneseq
    %v1612 = vshrl.u32 %v1611, 7
    %v1613 = vsub.s32 0, %v1612
    %v1614 = vrot.slane %v268, %v1613
    %v1616 = vmul.f32 %v1608, %v1614
    %v1617 = vmul.f32 %v1609, %v1614
    %v1619 = vlaneseq
    %v1620 = vshrl.u32 %v1619, 7
    %v1621 = vsub.s32 0, %v1620
    %v1622 = vrot.slane %v269, %v1621
    %v1624 = vadd.f32 %v1616, %v1622
    %v1625 = vadd.f32 %v1617, %v1622
    %v1626 = vpack.c.bf16 %v1625, %v1624
    %v1628 = vlaneseq
    %v1629 = vshrl.u32 %v1628, 7
    %v1630 = vsub.s32 0, %v1629
    %v1631 = vrot.slane %v270, %v1630
    %v1632 = vlaneseq
    %v1633 = vshrl.u32 %v1632, 7
    %v1634 = vsub.s32 1, %v1633
    %v1635 = vrot.slane %v270, %v1634
    %v1636 = vlaneseq
    %v1637 = vshrl.u32 %v1636, 7
    %v1638 = vsub.s32 2, %v1637
    %v1639 = vrot.slane %v270, %v1638
    %v1640 = vlaneseq
    %v1641 = vshrl.u32 %v1640, 7
    %v1642 = vsub.s32 3, %v1641
    %v1643 = vrot.slane %v270, %v1642
    %v1680 = vunpack.c.l.b16 %v234
    %v1681 = vunpack.c.h.b16 %v234
    %v1682 = vunpack.c.l.b16 %v235
    %v1683 = vunpack.c.h.b16 %v235
    %v1684 = vunpack.c.l.b16 %v236
    %v1685 = vunpack.c.h.b16 %v236
    %v1686 = vunpack.c.l.b16 %v237
    %v1687 = vunpack.c.h.b16 %v237
    %v1688 = vunpack.c.l.b16 %v238
    %v1689 = vunpack.c.h.b16 %v238
    %v1690 = vunpack.c.l.b16 %v239
    %v1691 = vunpack.c.h.b16 %v239
    %v1692 = vunpack.c.l.b16 %v240
    %v1693 = vunpack.c.h.b16 %v240
    %v1694 = vunpack.c.l.b16 %v241
    %v1695 = vunpack.c.h.b16 %v241
    %v1696 = vunpack.c.l.b16 %v242
    %v1697 = vunpack.c.h.b16 %v242
    %v1698 = vunpack.c.l.b16 %v243
    %v1699 = vunpack.c.h.b16 %v243
    %v1700 = vunpack.c.l.b16 %v244
    %v1701 = vunpack.c.h.b16 %v244
    %v1702 = vunpack.c.l.b16 %v245
    %v1703 = vunpack.c.h.b16 %v245
    %v1704 = vunpack.c.l.b16 %v246
    %v1705 = vunpack.c.h.b16 %v246
    %v1706 = vunpack.c.l.b16 %v247
    %v1707 = vunpack.c.h.b16 %v247
    %v1708 = vunpack.c.l.b16 %v248
    %v1709 = vunpack.c.h.b16 %v248
    %v1710 = vunpack.c.l.b16 %v249
    %v1711 = vunpack.c.h.b16 %v249
    %v1712 = vunpack.c.l.b16 %v250
    %v1713 = vunpack.c.h.b16 %v250
    %v1714 = vunpack.c.l.b16 %v251
    %v1715 = vunpack.c.h.b16 %v251
    %v1716 = vunpack.c.l.b16 %v252
    %v1717 = vunpack.c.h.b16 %v252
    %v1718 = vunpack.c.l.b16 %v253
    %v1719 = vunpack.c.h.b16 %v253
    %v1720 = vunpack.c.l.b16 %v254
    %v1721 = vunpack.c.h.b16 %v254
    %v1722 = vunpack.c.l.b16 %v255
    %v1723 = vunpack.c.h.b16 %v255
    %v1724 = vunpack.c.l.b16 %v256
    %v1725 = vunpack.c.h.b16 %v256
    %v1726 = vunpack.c.l.b16 %v257
    %v1727 = vunpack.c.h.b16 %v257
    %v1728 = vunpack.c.l.b16 %v258
    %v1729 = vunpack.c.h.b16 %v258
    %v1730 = vunpack.c.l.b16 %v259
    %v1731 = vunpack.c.h.b16 %v259
    %v1732 = vunpack.c.l.b16 %v260
    %v1733 = vunpack.c.h.b16 %v260
    %v1734 = vunpack.c.l.b16 %v261
    %v1735 = vunpack.c.h.b16 %v261
    %v1736 = vunpack.c.l.b16 %v262
    %v1737 = vunpack.c.h.b16 %v262
    %v1738 = vunpack.c.l.b16 %v263
    %v1739 = vunpack.c.h.b16 %v263
    %v1740 = vunpack.c.l.b16 %v264
    %v1741 = vunpack.c.h.b16 %v264
    %v1742 = vunpack.c.l.b16 %v265
    %v1743 = vunpack.c.h.b16 %v265
    %v1744 = vpack.c.b16 %v1684, %v1680
    %v1745 = vpack.c.b16 %v1685, %v1681
    %v1746 = vpack.c.b16 %v1686, %v1682
    %v1747 = vpack.c.b16 %v1687, %v1683
    %v1748 = vpack.c.b16 %v1692, %v1688
    %v1749 = vpack.c.b16 %v1693, %v1689
    %v1750 = vpack.c.b16 %v1694, %v1690
    %v1751 = vpack.c.b16 %v1695, %v1691
    %v1752 = vpack.c.b16 %v1700, %v1696
    %v1753 = vpack.c.b16 %v1701, %v1697
    %v1754 = vpack.c.b16 %v1702, %v1698
    %v1755 = vpack.c.b16 %v1703, %v1699
    %v1756 = vpack.c.b16 %v1708, %v1704
    %v1757 = vpack.c.b16 %v1709, %v1705
    %v1758 = vpack.c.b16 %v1710, %v1706
    %v1759 = vpack.c.b16 %v1711, %v1707
    %v1760 = vpack.c.b16 %v1716, %v1712
    %v1761 = vpack.c.b16 %v1717, %v1713
    %v1762 = vpack.c.b16 %v1718, %v1714
    %v1763 = vpack.c.b16 %v1719, %v1715
    %v1764 = vpack.c.b16 %v1724, %v1720
    %v1765 = vpack.c.b16 %v1725, %v1721
    %v1766 = vpack.c.b16 %v1726, %v1722
    %v1767 = vpack.c.b16 %v1727, %v1723
    %v1768 = vpack.c.b16 %v1732, %v1728
    %v1769 = vpack.c.b16 %v1733, %v1729
    %v1770 = vpack.c.b16 %v1734, %v1730
    %v1771 = vpack.c.b16 %v1735, %v1731
    %v1772 = vpack.c.b16 %v1740, %v1736
    %v1773 = vpack.c.b16 %v1741, %v1737
    %v1774 = vpack.c.b16 %v1742, %v1738
    %v1775 = vpack.c.b16 %v1743, %v1739
    %1808 = vmatprep.subr.bf16.mxu0 %v1745
    %1809 = vmatpush1.bf16.msra.mxu0 %v1744
    %1810 = vmatprep.subr.bf16.mxu0 %v1749
    %1811 = vmatpush1.bf16.msra.mxu0 %v1748
    %1812 = vmatprep.subr.bf16.mxu0 %v1753
    %1813 = vmatpush1.bf16.msra.mxu0 %v1752
    %1814 = vmatprep.subr.bf16.mxu0 %v1757
    %1815 = vmatpush1.bf16.msra.mxu0 %v1756
    %1816 = vmatprep.subr.bf16.mxu0 %v1761
    %1817 = vmatpush1.bf16.msra.mxu0 %v1760
    %1818 = vmatprep.subr.bf16.mxu0 %v1765
    %1819 = vmatpush1.bf16.msra.mxu0 %v1764
    %1820 = vmatprep.subr.bf16.mxu0 %v1769
    %1821 = vmatpush1.bf16.msra.mxu0 %v1768
    %1822 = vmatprep.subr.bf16.mxu0 %v1773
    %1823 = vmatpush1.bf16.msra.mxu0 %v1772
    %1824 = vmatprep.subr.bf16.mxu0 0
    %1825 = vmatpush1.bf16.msra.mxu0 0
    %1826 = vmatprep.subr.bf16.mxu0 0
    %1827 = vmatpush1.bf16.msra.mxu0 0
    %1828 = vmatprep.subr.bf16.mxu0 0
    %1829 = vmatpush1.bf16.msra.mxu0 0
    %1830 = vmatprep.subr.bf16.mxu0 0
    %1831 = vmatpush1.bf16.msra.mxu0 0
    %1832 = vmatprep.subr.bf16.mxu0 0
    %1833 = vmatpush1.bf16.msra.mxu0 0
    %1834 = vmatprep.subr.bf16.mxu0 0
    %1835 = vmatpush1.bf16.msra.mxu0 0
    %1836 = vmatprep.subr.bf16.mxu0 0
    %1837 = vmatpush1.bf16.msra.mxu0 0
    %1838 = vmatprep.subr.bf16.mxu0 0
    %1839 = vmatpush1.bf16.msra.mxu0 0
    %1840 = vmatprep.mubr.bf16.mxu0 0
    %1841 = vmatmul.mubr.bf16.gmra.mrb[0].mxu0 %v1626
    %v1842 = vpop.f32.mrb[0].mxu0
    %v1843 = vadd.f32 %v1631, %v1842
    %v1844 = vpop.f32.mrb[0].mxu0
    %v1845 = vadd.f32 %v1635, %v1844
    %v1846 = vpop.f32.mrb[0].mxu0
    %v1847 = vadd.f32 %v1631, %v1846
    %v1848 = vpop.f32.mrb[0].mxu0
    %v1849 = vadd.f32 %v1635, %v1848
    %1850 = vdwg.mxu0
    %1851 = vmatprep.subr.bf16.mxu0 %v1747
    %1852 = vmatpush1.bf16.msra.mxu0 %v1746
    %1853 = vmatprep.subr.bf16.mxu0 %v1751
    %1854 = vmatpush1.bf16.msra.mxu0 %v1750
    %1855 = vmatprep.subr.bf16.mxu0 %v1755
    %1856 = vmatpush1.bf16.msra.mxu0 %v1754
    %1857 = vmatprep.subr.bf16.mxu0 %v1759
    %1858 = vmatpush1.bf16.msra.mxu0 %v1758
    %1859 = vmatprep.subr.bf16.mxu0 %v1763
    %1860 = vmatpush1.bf16.msra.mxu0 %v1762
    %1861 = vmatprep.subr.bf16.mxu0 %v1767
    %1862 = vmatpush1.bf16.msra.mxu0 %v1766
    %1863 = vmatprep.subr.bf16.mxu0 %v1771
    %1864 = vmatpush1.bf16.msra.mxu0 %v1770
    %1865 = vmatprep.subr.bf16.mxu0 %v1775
    %1866 = vmatpush1.bf16.msra.mxu0 %v1774
    %1867 = vmatprep.subr.bf16.mxu0 0
    %1868 = vmatpush1.bf16.msra.mxu0 0
    %1869 = vmatprep.subr.bf16.mxu0 0
    %1870 = vmatpush1.bf16.msra.mxu0 0
    %1871 = vmatprep.subr.bf16.mxu0 0
    %1872 = vmatpush1.bf16.msra.mxu0 0
    %1873 = vmatprep.subr.bf16.mxu0 0
    %1874 = vmatpush1.bf16.msra.mxu0 0
    %1875 = vmatprep.subr.bf16.mxu0 0
    %1876 = vmatpush1.bf16.msra.mxu0 0
    %1877 = vmatprep.subr.bf16.mxu0 0
    %1878 = vmatpush1.bf16.msra.mxu0 0
    %1879 = vmatprep.subr.bf16.mxu0 0
    %1880 = vmatpush1.bf16.msra.mxu0 0
    %1881 = vmatprep.subr.bf16.mxu0 0
    %1882 = vmatpush1.bf16.msra.mxu0 0
    %1883 = vmatprep.mubr.bf16.mxu0 0
    %1884 = vmatmul.mubr.bf16.gmra.mrb[0].mxu0 %v1626
    %v1885 = vpop.f32.mrb[0].mxu0
    %v1886 = vadd.f32 %v1639, %v1885
    %v1887 = vpop.f32.mrb[0].mxu0
    %v1888 = vadd.f32 %v1643, %v1887
    %v1889 = vpop.f32.mrb[0].mxu0
    %v1890 = vadd.f32 %v1639, %v1889
    %v1891 = vpop.f32.mrb[0].mxu0
    %v1892 = vadd.f32 %v1643, %v1891
    %1893 = vdwg.mxu0
    %v1894 = vmax.f32 %v1843, 0.0
    %v1895 = vmax.f32 %v1845, 0.0
    %v1896 = vmax.f32 %v1886, 0.0
    %v1897 = vmax.f32 %v1888, 0.0
    %v1898 = vmax.f32 %v1847, 0.0
    %v1899 = vmax.f32 %v1849, 0.0
    %v1900 = vmax.f32 %v1890, 0.0
    %v1901 = vmax.f32 %v1892, 0.0
    %v1902 = vpack.c.bf16 %v1898, %v1894
    %v1903 = vpack.c.bf16 %v1899, %v1895
    %v1904 = vpack.c.bf16 %v1900, %v1896
    %v1905 = vpack.c.bf16 %v1901, %v1897
    %v1907 = vlaneseq
    %v1908 = vshrl.u32 %v1907, 7
    %v1909 = vsub.s32 0, %v1908
    %v1910 = vrot.slane %v271, %v1909
    %v1976 = vunpack.c.l.b16 %v274
    %v1977 = vunpack.c.l.b16 %v275
    %v1978 = vunpack.c.l.b16 %v276
    %v1979 = vunpack.c.l.b16 %v277
    %v1980 = vunpack.c.l.b16 %v278
    %v1981 = vunpack.c.l.b16 %v279
    %v1982 = vunpack.c.l.b16 %v280
    %v1983 = vunpack.c.l.b16 %v281
    %v1984 = vunpack.c.l.b16 %v282
    %v1985 = vunpack.c.l.b16 %v283
    %v1986 = vunpack.c.l.b16 %v284
    %v1987 = vunpack.c.l.b16 %v285
    %v1988 = vunpack.c.l.b16 %v286
    %v1989 = vunpack.c.l.b16 %v287
    %v1990 = vunpack.c.l.b16 %v288
    %v1991 = vunpack.c.l.b16 %v289
    %v1992 = vunpack.c.l.b16 %v290
    %v1993 = vunpack.c.l.b16 %v291
    %v1994 = vunpack.c.l.b16 %v292
    %v1995 = vunpack.c.l.b16 %v293
    %v1996 = vunpack.c.l.b16 %v294
    %v1997 = vunpack.c.l.b16 %v295
    %v1998 = vunpack.c.l.b16 %v296
    %v1999 = vunpack.c.l.b16 %v297
    %v2000 = vunpack.c.l.b16 %v298
    %v2001 = vunpack.c.l.b16 %v299
    %v2002 = vunpack.c.l.b16 %v300
    %v2003 = vunpack.c.l.b16 %v301
    %v2004 = vunpack.c.l.b16 %v302
    %v2005 = vunpack.c.l.b16 %v303
    %v2006 = vunpack.c.l.b16 %v304
    %v2007 = vunpack.c.l.b16 %v305
    %v2008 = vunpack.c.l.b16 %v306
    %v2009 = vunpack.c.l.b16 %v307
    %v2010 = vunpack.c.l.b16 %v308
    %v2011 = vunpack.c.l.b16 %v309
    %v2012 = vunpack.c.l.b16 %v310
    %v2013 = vunpack.c.l.b16 %v311
    %v2014 = vunpack.c.l.b16 %v312
    %v2015 = vunpack.c.l.b16 %v313
    %v2016 = vunpack.c.l.b16 %v314
    %v2017 = vunpack.c.l.b16 %v315
    %v2018 = vunpack.c.l.b16 %v316
    %v2019 = vunpack.c.l.b16 %v317
    %v2020 = vunpack.c.l.b16 %v318
    %v2021 = vunpack.c.l.b16 %v319
    %v2022 = vunpack.c.l.b16 %v320
    %v2023 = vunpack.c.l.b16 %v321
    %v2024 = vunpack.c.l.b16 %v322
    %v2025 = vunpack.c.l.b16 %v323
    %v2026 = vunpack.c.l.b16 %v324
    %v2027 = vunpack.c.l.b16 %v325
    %v2028 = vunpack.c.l.b16 %v326
    %v2029 = vunpack.c.l.b16 %v327
    %v2030 = vunpack.c.l.b16 %v328
    %v2031 = vunpack.c.l.b16 %v329
    %v2032 = vunpack.c.l.b16 %v330
    %v2033 = vunpack.c.l.b16 %v331
    %v2034 = vunpack.c.l.b16 %v332
    %v2035 = vunpack.c.l.b16 %v333
    %v2036 = vunpack.c.l.b16 %v334
    %v2037 = vunpack.c.l.b16 %v335
    %v2038 = vunpack.c.l.b16 %v336
    %v2039 = vunpack.c.l.b16 %v337
    %v2040 = vpack.c.b16 %v1977, %v1976
    %v2041 = vpack.c.b16 %v1979, %v1978
    %v2042 = vpack.c.b16 %v1981, %v1980
    %v2043 = vpack.c.b16 %v1983, %v1982
    %v2044 = vpack.c.b16 %v1985, %v1984
    %v2045 = vpack.c.b16 %v1987, %v1986
    %v2046 = vpack.c.b16 %v1989, %v1988
    %v2047 = vpack.c.b16 %v1991, %v1990
    %v2048 = vpack.c.b16 %v1993, %v1992
    %v2049 = vpack.c.b16 %v1995, %v1994
    %v2050 = vpack.c.b16 %v1997, %v1996
    %v2051 = vpack.c.b16 %v1999, %v1998
    %v2052 = vpack.c.b16 %v2001, %v2000
    %v2053 = vpack.c.b16 %v2003, %v2002
    %v2054 = vpack.c.b16 %v2005, %v2004
    %v2055 = vpack.c.b16 %v2007, %v2006
    %v2056 = vpack.c.b16 %v2009, %v2008
    %v2057 = vpack.c.b16 %v2011, %v2010
    %v2058 = vpack.c.b16 %v2013, %v2012
    %v2059 = vpack.c.b16 %v2015, %v2014
    %v2060 = vpack.c.b16 %v2017, %v2016
    %v2061 = vpack.c.b16 %v2019, %v2018
    %v2062 = vpack.c.b16 %v2021, %v2020
    %v2063 = vpack.c.b16 %v2023, %v2022
    %v2064 = vpack.c.b16 %v2025, %v2024
    %v2065 = vpack.c.b16 %v2027, %v2026
    %v2066 = vpack.c.b16 %v2029, %v2028
    %v2067 = vpack.c.b16 %v2031, %v2030
    %v2068 = vpack.c.b16 %v2033, %v2032
    %v2069 = vpack.c.b16 %v2035, %v2034
    %v2070 = vpack.c.b16 %v2037, %v2036
    %v2071 = vpack.c.b16 %v2039, %v2038
    %2104 = vmatprep.subr.bf16.mxu0 0
    %2105 = vmatpush1.bf16.msra.mxu0 %v2040
    %2106 = vmatprep.subr.bf16.mxu0 0
    %2107 = vmatpush1.bf16.msra.mxu0 %v2041
    %2108 = vmatprep.subr.bf16.mxu0 0
    %2109 = vmatpush1.bf16.msra.mxu0 %v2042
    %2110 = vmatprep.subr.bf16.mxu0 0
    %2111 = vmatpush1.bf16.msra.mxu0 %v2043
    %2112 = vmatprep.subr.bf16.mxu0 0
    %2113 = vmatpush1.bf16.msra.mxu0 %v2044
    %2114 = vmatprep.subr.bf16.mxu0 0
    %2115 = vmatpush1.bf16.msra.mxu0 %v2045
    %2116 = vmatprep.subr.bf16.mxu0 0
    %2117 = vmatpush1.bf16.msra.mxu0 %v2046
    %2118 = vmatprep.subr.bf16.mxu0 0
    %2119 = vmatpush1.bf16.msra.mxu0 %v2047
    %2120 = vmatprep.subr.bf16.mxu0 0
    %2121 = vmatpush1.bf16.msra.mxu0 %v2048
    %2122 = vmatprep.subr.bf16.mxu0 0
    %2123 = vmatpush1.bf16.msra.mxu0 %v2049
    %2124 = vmatprep.subr.bf16.mxu0 0
    %2125 = vmatpush1.bf16.msra.mxu0 %v2050
    %2126 = vmatprep.subr.bf16.mxu0 0
    %2127 = vmatpush1.bf16.msra.mxu0 %v2051
    %2128 = vmatprep.subr.bf16.mxu0 0
    %2129 = vmatpush1.bf16.msra.mxu0 %v2052
    %2130 = vmatprep.subr.bf16.mxu0 0
    %2131 = vmatpush1.bf16.msra.mxu0 %v2053
    %2132 = vmatprep.subr.bf16.mxu0 0
    %2133 = vmatpush1.bf16.msra.mxu0 %v2054
    %2134 = vmatprep.subr.bf16.mxu0 0
    %2135 = vmatpush1.bf16.msra.mxu0 %v2055
    %2136 = vmatprep.mubr.bf16.mxu0 %v1903
    %2137 = vmatmul.mubr.bf16.gmra.mrb[0].mxu0 %v1902
    %v2138 = vpop.f32.mrb[0].mxu0
    %v2139 = vadd.f32 %v1910, %v2138
    %v2140 = vpop.f32.mrb[0].mxu0
    %v2141 = vpop.f32.mrb[0].mxu0
    %v2142 = vadd.f32 %v1910, %v2141
    %v2143 = vpop.f32.mrb[0].mxu0
    %2144 = vdwg.mxu0
    %2145 = vmatprep.subr.bf16.mxu0 0
    %2146 = vmatpush1.bf16.msra.mxu0 %v2056
    %2147 = vmatprep.subr.bf16.mxu0 0
    %2148 = vmatpush1.bf16.msra.mxu0 %v2057
    %2149 = vmatprep.subr.bf16.mxu0 0
    %2150 = vmatpush1.bf16.msra.mxu0 %v2058
    %2151 = vmatprep.subr.bf16.mxu0 0
    %2152 = vmatpush1.bf16.msra.mxu0 %v2059
    %2153 = vmatprep.subr.bf16.mxu0 0
    %2154 = vmatpush1.bf16.msra.mxu0 %v2060
    %2155 = vmatprep.subr.bf16.mxu0 0
    %2156 = vmatpush1.bf16.msra.mxu0 %v2061
    %2157 = vmatprep.subr.bf16.mxu0 0
    %2158 = vmatpush1.bf16.msra.mxu0 %v2062
    %2159 = vmatprep.subr.bf16.mxu0 0
    %2160 = vmatpush1.bf16.msra.mxu0 %v2063
    %2161 = vmatprep.subr.bf16.mxu0 0
    %2162 = vmatpush1.bf16.msra.mxu0 %v2064
    %2163 = vmatprep.subr.bf16.mxu0 0
    %2164 = vmatpush1.bf16.msra.mxu0 %v2065
    %2165 = vmatprep.subr.bf16.mxu0 0
    %2166 = vmatpush1.bf16.msra.mxu0 %v2066
    %2167 = vmatprep.subr.bf16.mxu0 0
    %2168 = vmatpush1.bf16.msra.mxu0 %v2067
    %2169 = vmatprep.subr.bf16.mxu0 0
    %2170 = vmatpush1.bf16.msra.mxu0 %v2068
    %2171 = vmatprep.subr.bf16.mxu0 0
    %2172 = vmatpush1.bf16.msra.mxu0 %v2069
    %2173 = vmatprep.subr.bf16.mxu0 0
    %2174 = vmatpush1.bf16.msra.mxu0 %v2070
    %2175 = vmatprep.subr.bf16.mxu0 0
    %2176 = vmatpush1.bf16.msra.mxu0 %v2071
    %2177 = vmatprep.mubr.bf16.mxu0 %v1905
    %2178 = vmatmul.mubr.bf16.gmra.mrb[0].mxu0 %v1904
    %v2179 = vpop.f32.mrb[0].mxu0
    %v2180 = vadd.f32 %v2139, %v2179
    %v2181 = vpop.f32.mrb[0].mxu0
    %v2182 = vpop.f32.mrb[0].mxu0
    %v2183 = vadd.f32 %v2142, %v2182
    %v2184 = vpop.f32.mrb[0].mxu0
    %2185 = vdwg.mxu0
    %v2186 = vadd.f32 %v1624, %v2180
    %v2187 = vadd.f32 %v1625, %v2183
    %2188 = vadd.xlane.f32.xlu0 %v2186
    %v2189 = vpop.xlane.xlu0 %2188
    %2190 = vadd.xlane.f32.xlu0 %v2187
    %v2191 = vpop.xlane.xlu0 %2190
    %v2192 = vmul.f32 %v2189, %v1591
    %v2193 = vmul.f32 %v2191, %v1591
    %v2194 = vsub.f32 %v2186, %v2192
    %v2195 = vsub.f32 %v2187, %v2193
    %v2196 = vmul.f32 %v2194, %v2194
    %v2197 = vmul.f32 %v2195, %v2195
    %2198 = vadd.xlane.f32.xlu0 %v2196
    %v2199 = vpop.xlane.xlu0 %2198
    %2200 = vadd.xlane.f32.xlu0 %v2197
    %v2201 = vpop.xlane.xlu0 %2200
    %v2202 = vmul.f32 %v2199, %v1591
    %v2203 = vmul.f32 %v2201, %v1591
    %v2204 = vadd.f32 %v2202, 1e-05
    %v2205 = vadd.f32 %v2203, 1e-05
    %v2206 = vrsqrt.pop %v2204
    %v2207 = vrsqrt.pop %v2205
    %v2208 = vmul.f32 %v2194, %v2206
    %v2209 = vmul.f32 %v2195, %v2207
    %v2211 = vlaneseq
    %v2212 = vshrl.u32 %v2211, 7
    %v2213 = vsub.s32 0, %v2212
    %v2214 = vrot.slane %v272, %v2213
    %v2216 = vmul.f32 %v2208, %v2214
    %v2217 = vmul.f32 %v2209, %v2214
    %v2219 = vlaneseq
    %v2220 = vshrl.u32 %v2219, 7
    %v2221 = vsub.s32 0, %v2220
    %v2222 = vrot.slane %v273, %v2221
    %v2224 = vadd.f32 %v2216, %v2222
    %v2225 = vadd.f32 %v2217, %v2222
    %v2226 = vld [vmem:[#allocation7 + $0x20] sm:$0xff]
    %v2227 = vld [vmem:[#allocation7 + $0x28] sm:$0xf]
    %v2228 = vld [vmem:[#allocation7 + $0x64] sm:$0xff]
    %v2229 = vld [vmem:[#allocation7 + $0x6c] sm:$0xf]
    %v2230 = vld [vmem:[#allocation7 + $0xa8] sm:$0xff]
    %v2231 = vld [vmem:[#allocation7 + $0xb0] sm:$0xf]
    %v2232 = vld [vmem:[#allocation7 + $0xec] sm:$0xff]
    %v2233 = vld [vmem:[#allocation7 + $0xf4] sm:$0xf]
    %v2234 = vld [vmem:[#allocation7 + $0x130] sm:$0xff]
    %v2235 = vld [vmem:[#allocation7 + $0x138] sm:$0xf]
    %v2236 = vld [vmem:[#allocation7 + $0x174] sm:$0xff]
    %v2237 = vld [vmem:[#allocation7 + $0x17c] sm:$0xf]
    %v2238 = vld [vmem:[#allocation7 + $0x1b8] sm:$0xff]
    %v2239 = vld [vmem:[#allocation7 + $0x1c0] sm:$0xf]
    %v2240 = vld [vmem:[#allocation7 + $0x1fc] sm:$0xff]
    %v2241 = vld [vmem:[#allocation7 + $0x204] sm:$0xf]
    %v2242 = vld [vmem:[#allocation7 + $0x240] sm:$0xff]
    %v2243 = vld [vmem:[#allocation7 + $0x248] sm:$0xf]
    %v2244 = vld [vmem:[#allocation7 + $0x284] sm:$0xff]
    %v2245 = vld [vmem:[#allocation7 + $0x28c] sm:$0xf]
    %v2246 = vld [vmem:[#allocation7 + $0x2c8] sm:$0xff]
    %v2247 = vld [vmem:[#allocation7 + $0x2d0] sm:$0xf]
    %v2248 = vld [vmem:[#allocation7 + $0x30c] sm:$0xff]
    %v2249 = vld [vmem:[#allocation7 + $0x314] sm:$0xf]
    %v2250 = vld [vmem:[#allocation7 + $0x350] sm:$0xff]
    %v2251 = vld [vmem:[#allocation7 + $0x358] sm:$0xf]
    %v2252 = vld [vmem:[#allocation7 + $0x394] sm:$0xff]
    %v2253 = vld [vmem:[#allocation7 + $0x39c] sm:$0xf]
    %v2254 = vld [vmem:[#allocation7 + $0x3d8] sm:$0xff]
    %v2255 = vld [vmem:[#allocation7 + $0x3e0] sm:$0xf]
    %v2256 = vld [vmem:[#allocation7 + $0x41c] sm:$0xff]
    %v2257 = vld [vmem:[#allocation7 + $0x424] sm:$0xf]
    %v2258 = vld [vmem:[#allocation7 + $0x2c] sm:$0xf]
    %v2259 = vld [vmem:[#allocation7 + $0x70] sm:$0xf]
    %v2260 = vld [vmem:[#allocation7 + $0xb4] sm:$0xf]
    %v2261 = vld [vmem:[#allocation7 + $0xf8] sm:$0xf]
    %v2262 = vld [vmem:[#allocation7 + $0x13c] sm:$0xf]
    %v2263 = vld [vmem:[#allocation7 + $0x180] sm:$0xf]
    %v2264 = vld [vmem:[#allocation7 + $0x1c4] sm:$0xf]
    %v2265 = vld [vmem:[#allocation7 + $0x208] sm:$0xf]
    %v2266 = vld [vmem:[#allocation7 + $0x24c] sm:$0xf]
    %v2267 = vld [vmem:[#allocation7 + $0x290] sm:$0xf]
    %v2268 = vld [vmem:[#allocation7 + $0x2d4] sm:$0xf]
    %v2269 = vld [vmem:[#allocation7 + $0x318] sm:$0xf]
    %v2270 = vld [vmem:[#allocation7 + $0x35c] sm:$0xf]
    %v2271 = vld [vmem:[#allocation7 + $0x3a0] sm:$0xf]
    %v2272 = vld [vmem:[#allocation7 + $0x3e4] sm:$0xf]
    %v2273 = vld [vmem:[#allocation7 + $0x428] sm:$0xf]
    %v2274 = vld [vmem:[#allocation7 + $0x30] sm:$0xff]
    %v2275 = vld [vmem:[#allocation7 + $0x38] sm:$0xff]
    %v2276 = vld [vmem:[#allocation7 + $0x74] sm:$0xff]
    %v2277 = vld [vmem:[#allocation7 + $0x7c] sm:$0xff]
    %v2278 = vld [vmem:[#allocation7 + $0xb8] sm:$0xff]
    %v2279 = vld [vmem:[#allocation7 + $0xc0] sm:$0xff]
    %v2280 = vld [vmem:[#allocation7 + $0xfc] sm:$0xff]
    %v2281 = vld [vmem:[#allocation7 + $0x104] sm:$0xff]
    %v2282 = vld [vmem:[#allocation7 + $0x140] sm:$0xff]
    %v2283 = vld [vmem:[#allocation7 + $0x148] sm:$0xff]
    %v2284 = vld [vmem:[#allocation7 + $0x184] sm:$0xff]
    %v2285 = vld [vmem:[#allocation7 + $0x18c] sm:$0xff]
    %v2286 = vld [vmem:[#allocation7 + $0x1c8] sm:$0xff]
    %v2287 = vld [vmem:[#allocation7 + $0x1d0] sm:$0xff]
    %v2288 = vld [vmem:[#allocation7 + $0x20c] sm:$0xff]
    %v2289 = vld [vmem:[#allocation7 + $0x214] sm:$0xff]
    %v2290 = vld [vmem:[#allocation7 + $0x250] sm:$0xff]
    %v2291 = vld [vmem:[#allocation7 + $0x258] sm:$0xff]
    %v2292 = vld [vmem:[#allocation7 + $0x294] sm:$0xff]
    %v2293 = vld [vmem:[#allocation7 + $0x29c] sm:$0xff]
    %v2294 = vld [vmem:[#allocation7 + $0x2d8] sm:$0xff]
    %v2295 = vld [vmem:[#allocation7 + $0x2e0] sm:$0xff]
    %v2296 = vld [vmem:[#allocation7 + $0x31c] sm:$0xff]
    %v2297 = vld [vmem:[#allocation7 + $0x324] sm:$0xff]
    %v2298 = vld [vmem:[#allocation7 + $0x360] sm:$0xff]
    %v2299 = vld [vmem:[#allocation7 + $0x368] sm:$0xff]
    %v2300 = vld [vmem:[#allocation7 + $0x3a4] sm:$0xff]
    %v2301 = vld [vmem:[#allocation7 + $0x3ac] sm:$0xff]
    %v2302 = vld [vmem:[#allocation7 + $0x3e8] sm:$0xff]
    %v2303 = vld [vmem:[#allocation7 + $0x3f0] sm:$0xff]
    %v2304 = vld [vmem:[#allocation7 + $0x42c] sm:$0xff]
    %v2305 = vld [vmem:[#allocation7 + $0x434] sm:$0xff]
    %v2306 = vld [vmem:[#allocation10 + $0xd] sm:$0x7]
    %v2307 = vld [vmem:[#allocation10 + $0x10] sm:$0x1]
    %v2308 = vld [vmem:[#allocation10 + $0x11] sm:$0x1]
    %v2309 = vld [vmem:[#allocation10 + $0x12] sm:$0x1]
    %v2310 = vld [vmem:[#allocation10 + $0x13] sm:$0xf]
    %v2311 = vld [vmem:[#allocation10 + $0x17] sm:$0x1]
    %v2312 = vld [vmem:[#allocation10 + $0x18] sm:$0x1]
    %v2313 = vld [vmem:[#allocation10 + $0x19] sm:$0x1]
    %v2314 = vld [vmem:[#allocation8 + $0x4] sm:$0xf]
    %v2315 = vld [vmem:[#allocation8 + $0xc] sm:$0xf]
    %v2316 = vld [vmem:[#allocation8 + $0x14] sm:$0xf]
    %v2317 = vld [vmem:[#allocation8 + $0x1c] sm:$0xf]
    %v2318 = vld [vmem:[#allocation8 + $0x24] sm:$0xf]
    %v2319 = vld [vmem:[#allocation8 + $0x2c] sm:$0xf]
    %v2320 = vld [vmem:[#allocation8 + $0x34] sm:$0xf]
    %v2321 = vld [vmem:[#allocation8 + $0x3c] sm:$0xf]
    %v2322 = vld [vmem:[#allocation8 + $0x44] sm:$0xf]
    %v2323 = vld [vmem:[#allocation8 + $0x4c] sm:$0xf]
    %v2324 = vld [vmem:[#allocation8 + $0x54] sm:$0xf]
    %v2325 = vld [vmem:[#allocation8 + $0x5c] sm:$0xf]
    %v2326 = vld [vmem:[#allocation8 + $0x64] sm:$0xf]
    %v2327 = vld [vmem:[#allocation8 + $0x6c] sm:$0xf]
    %v2328 = vld [vmem:[#allocation8 + $0x74] sm:$0xf]
    %v2329 = vld [vmem:[#allocation8 + $0x7c] sm:$0xf]
    %v2330 = vld [vmem:[#allocation8 + $0x84] sm:$0xf]
    %v2331 = vld [vmem:[#allocation8 + $0x8c] sm:$0xf]
    %v2332 = vld [vmem:[#allocation8 + $0x94] sm:$0xf]
    %v2333 = vld [vmem:[#allocation8 + $0x9c] sm:$0xf]
    %v2334 = vld [vmem:[#allocation8 + $0xa4] sm:$0xf]
    %v2335 = vld [vmem:[#allocation8 + $0xac] sm:$0xf]
    %v2336 = vld [vmem:[#allocation8 + $0xb4] sm:$0xf]
    %v2337 = vld [vmem:[#allocation8 + $0xbc] sm:$0xf]
    %v2338 = vld [vmem:[#allocation8 + $0xc4] sm:$0xf]
    %v2339 = vld [vmem:[#allocation8 + $0xcc] sm:$0xf]
    %v2340 = vld [vmem:[#allocation8 + $0xd4] sm:$0xf]
    %v2341 = vld [vmem:[#allocation8 + $0xdc] sm:$0xf]
    %v2342 = vld [vmem:[#allocation8 + $0xe4] sm:$0xf]
    %v2343 = vld [vmem:[#allocation8 + $0xec] sm:$0xf]
    %v2344 = vld [vmem:[#allocation8 + $0xf4] sm:$0xf]
    %v2345 = vld [vmem:[#allocation8 + $0xfc] sm:$0xf]
    %v2346 = vld [vmem:[#allocation8 + $0x104] sm:$0xf]
    %v2347 = vld [vmem:[#allocation8 + $0x10c] sm:$0xf]
    %v2348 = vld [vmem:[#allocation8 + $0x114] sm:$0xf]
    %v2349 = vld [vmem:[#allocation8 + $0x11c] sm:$0xf]
    %v2350 = vld [vmem:[#allocation8 + $0x124] sm:$0xf]
    %v2351 = vld [vmem:[#allocation8 + $0x12c] sm:$0xf]
    %v2352 = vld [vmem:[#allocation8 + $0x134] sm:$0xf]
    %v2353 = vld [vmem:[#allocation8 + $0x13c] sm:$0xf]
    %v2354 = vld [vmem:[#allocation8 + $0x144] sm:$0xf]
    %v2355 = vld [vmem:[#allocation8 + $0x14c] sm:$0xf]
    %v2356 = vld [vmem:[#allocation8 + $0x154] sm:$0xf]
    %v2357 = vld [vmem:[#allocation8 + $0x15c] sm:$0xf]
    %v2358 = vld [vmem:[#allocation8 + $0x164] sm:$0xf]
    %v2359 = vld [vmem:[#allocation8 + $0x16c] sm:$0xf]
    %v2360 = vld [vmem:[#allocation8 + $0x174] sm:$0xf]
    %v2361 = vld [vmem:[#allocation8 + $0x17c] sm:$0xf]
    %v2362 = vld [vmem:[#allocation8 + $0x184] sm:$0xf]
    %v2363 = vld [vmem:[#allocation8 + $0x18c] sm:$0xf]
    %v2364 = vld [vmem:[#allocation8 + $0x194] sm:$0xf]
    %v2365 = vld [vmem:[#allocation8 + $0x19c] sm:$0xf]
    %v2366 = vld [vmem:[#allocation8 + $0x1a4] sm:$0xf]
    %v2367 = vld [vmem:[#allocation8 + $0x1ac] sm:$0xf]
    %v2368 = vld [vmem:[#allocation8 + $0x1b4] sm:$0xf]
    %v2369 = vld [vmem:[#allocation8 + $0x1bc] sm:$0xf]
    %v2370 = vld [vmem:[#allocation8 + $0x1c4] sm:$0xf]
    %v2371 = vld [vmem:[#allocation8 + $0x1cc] sm:$0xf]
    %v2372 = vld [vmem:[#allocation8 + $0x1d4] sm:$0xf]
    %v2373 = vld [vmem:[#allocation8 + $0x1dc] sm:$0xf]
    %v2374 = vld [vmem:[#allocation8 + $0x1e4] sm:$0xf]
    %v2375 = vld [vmem:[#allocation8 + $0x1ec] sm:$0xf]
    %v2376 = vld [vmem:[#allocation8 + $0x1f4] sm:$0xf]
    %v2377 = vld [vmem:[#allocation8 + $0x1fc] sm:$0xf]
    %v2378 = vpack.c.bf16 %v2225, %v2224
    %v2380 = vlaneseq
    %v2381 = vshrl.u32 %v2380, 7
    %v2382 = vsub.s32 0, %v2381
    %v2383 = vrot.slane %v2306, %v2382
    %v2384 = vlaneseq
    %v2385 = vshrl.u32 %v2384, 7
    %v2386 = vsub.s32 1, %v2385
    %v2387 = vrot.slane %v2306, %v2386
    %v2388 = vlaneseq
    %v2389 = vshrl.u32 %v2388, 7
    %v2390 = vsub.s32 2, %v2389
    %v2391 = vrot.slane %v2306, %v2390
    %v2427 = vunpack.c.l.b16 %v2226
    %v2428 = vunpack.c.h.b16 %v2226
    %v2429 = vunpack.c.l.b16 %v2227
    %v2430 = vunpack.c.l.b16 %v2228
    %v2431 = vunpack.c.h.b16 %v2228
    %v2432 = vunpack.c.l.b16 %v2229
    %v2433 = vunpack.c.l.b16 %v2230
    %v2434 = vunpack.c.h.b16 %v2230
    %v2435 = vunpack.c.l.b16 %v2231
    %v2436 = vunpack.c.l.b16 %v2232
    %v2437 = vunpack.c.h.b16 %v2232
    %v2438 = vunpack.c.l.b16 %v2233
    %v2439 = vunpack.c.l.b16 %v2234
    %v2440 = vunpack.c.h.b16 %v2234
    %v2441 = vunpack.c.l.b16 %v2235
    %v2442 = vunpack.c.l.b16 %v2236
    %v2443 = vunpack.c.h.b16 %v2236
    %v2444 = vunpack.c.l.b16 %v2237
    %v2445 = vunpack.c.l.b16 %v2238
    %v2446 = vunpack.c.h.b16 %v2238
    %v2447 = vunpack.c.l.b16 %v2239
    %v2448 = vunpack.c.l.b16 %v2240
    %v2449 = vunpack.c.h.b16 %v2240
    %v2450 = vunpack.c.l.b16 %v2241
    %v2451 = vunpack.c.l.b16 %v2242
    %v2452 = vunpack.c.h.b16 %v2242
    %v2453 = vunpack.c.l.b16 %v2243
    %v2454 = vunpack.c.l.b16 %v2244
    %v2455 = vunpack.c.h.b16 %v2244
    %v2456 = vunpack.c.l.b16 %v2245
    %v2457 = vunpack.c.l.b16 %v2246
    %v2458 = vunpack.c.h.b16 %v2246
    %v2459 = vunpack.c.l.b16 %v2247
    %v2460 = vunpack.c.l.b16 %v2248
    %v2461 = vunpack.c.h.b16 %v2248
    %v2462 = vunpack.c.l.b16 %v2249
    %v2463 = vunpack.c.l.b16 %v2250
    %v2464 = vunpack.c.h.b16 %v2250
    %v2465 = vunpack.c.l.b16 %v2251
    %v2466 = vunpack.c.l.b16 %v2252
    %v2467 = vunpack.c.h.b16 %v2252
    %v2468 = vunpack.c.l.b16 %v2253
    %v2469 = vunpack.c.l.b16 %v2254
    %v2470 = vunpack.c.h.b16 %v2254
    %v2471 = vunpack.c.l.b16 %v2255
    %v2472 = vunpack.c.l.b16 %v2256
    %v2473 = vunpack.c.h.b16 %v2256
    %v2474 = vunpack.c.l.b16 %v2257
    %v2475 = vpack.c.b16 %v2430, %v2427
    %v2476 = vpack.c.b16 %v2431, %v2428
    %v2477 = vpack.c.b16 %v2432, %v2429
    %v2478 = vpack.c.b16 %v2436, %v2433
    %v2479 = vpack.c.b16 %v2437, %v2434
    %v2480 = vpack.c.b16 %v2438, %v2435
    %v2481 = vpack.c.b16 %v2442, %v2439
    %v2482 = vpack.c.b16 %v2443, %v2440
    %v2483 = vpack.c.b16 %v2444, %v2441
    %v2484 = vpack.c.b16 %v2448, %v2445
    %v2485 = vpack.c.b16 %v2449, %v2446
    %v2486 = vpack.c.b16 %v2450, %v2447
    %v2487 = vpack.c.b16 %v2454, %v2451
    %v2488 = vpack.c.b16 %v2455, %v2452
    %v2489 = vpack.c.b16 %v2456, %v2453
    %v2490 = vpack.c.b16 %v2460, %v2457
    %v2491 = vpack.c.b16 %v2461, %v2458
    %v2492 = vpack.c.b16 %v2462, %v2459
    %v2493 = vpack.c.b16 %v2466, %v2463
    %v2494 = vpack.c.b16 %v2467, %v2464
    %v2495 = vpack.c.b16 %v2468, %v2465
    %v2496 = vpack.c.b16 %v2472, %v2469
    %v2497 = vpack.c.b16 %v2473, %v2470
    %v2498 = vpack.c.b16 %v2474, %v2471
    %2523 = vmatprep.subr.bf16.mxu0 %v2476
    %2524 = vmatpush1.bf16.msra.mxu0 %v2475
    %2525 = vmatprep.subr.bf16.mxu0 %v2479
    %2526 = vmatpush1.bf16.msra.mxu0 %v2478
    %2527 = vmatprep.subr.bf16.mxu0 %v2482
    %2528 = vmatpush1.bf16.msra.mxu0 %v2481
    %2529 = vmatprep.subr.bf16.mxu0 %v2485
    %2530 = vmatpush1.bf16.msra.mxu0 %v2484
    %2531 = vmatprep.subr.bf16.mxu0 %v2488
    %2532 = vmatpush1.bf16.msra.mxu0 %v2487
    %2533 = vmatprep.subr.bf16.mxu0 %v2491
    %2534 = vmatpush1.bf16.msra.mxu0 %v2490
    %2535 = vmatprep.subr.bf16.mxu0 %v2494
    %2536 = vmatpush1.bf16.msra.mxu0 %v2493
    %2537 = vmatprep.subr.bf16.mxu0 %v2497
    %2538 = vmatpush1.bf16.msra.mxu0 %v2496
    %2539 = vmatprep.subr.bf16.mxu0 0
    %2540 = vmatpush1.bf16.msra.mxu0 0
    %2541 = vmatprep.subr.bf16.mxu0 0
    %2542 = vmatpush1.bf16.msra.mxu0 0
    %2543 = vmatprep.subr.bf16.mxu0 0
    %2544 = vmatpush1.bf16.msra.mxu0 0
    %2545 = vmatprep.subr.bf16.mxu0 0
    %2546 = vmatpush1.bf16.msra.mxu0 0
    %2547 = vmatprep.subr.bf16.mxu0 0
    %2548 = vmatpush1.bf16.msra.mxu0 0
    %2549 = vmatprep.subr.bf16.mxu0 0
    %2550 = vmatpush1.bf16.msra.mxu0 0
    %2551 = vmatprep.subr.bf16.mxu0 0
    %2552 = vmatpush1.bf16.msra.mxu0 0
    %2553 = vmatprep.subr.bf16.mxu0 0
    %2554 = vmatpush1.bf16.msra.mxu0 0
    %2555 = vmatprep.mubr.bf16.mxu0 0
    %2556 = vmatmul.mubr.bf16.gmra.mrb[0].mxu0 %v2378
    %v2557 = vpop.f32.mrb[0].mxu0
    %v2558 = vadd.f32 %v2383, %v2557
    %v2559 = vpop.f32.mrb[0].mxu0
    %v2560 = vadd.f32 %v2387, %v2559
    %v2561 = vpop.f32.mrb[0].mxu0
    %v2562 = vadd.f32 %v2383, %v2561
    %v2563 = vpop.f32.mrb[0].mxu0
    %v2564 = vadd.f32 %v2387, %v2563
    %2565 = vdwg.mxu0
    %2566 = vmatprep.subr.bf16.mxu0 0
    %2567 = vmatpush1.bf16.msra.mxu0 %v2477
    %2568 = vmatprep.subr.bf16.mxu0 0
    %2569 = vmatpush1.bf16.msra.mxu0 %v2480
    %2570 = vmatprep.subr.bf16.mxu0 0
    %2571 = vmatpush1.bf16.msra.mxu0 %v2483
    %2572 = vmatprep.subr.bf16.mxu0 0
    %2573 = vmatpush1.bf16.msra.mxu0 %v2486
    %2574 = vmatprep.subr.bf16.mxu0 0
    %2575 = vmatpush1.bf16.msra.mxu0 %v2489
    %2576 = vmatprep.subr.bf16.mxu0 0
    %2577 = vmatpush1.bf16.msra.mxu0 %v2492
    %2578 = vmatprep.subr.bf16.mxu0 0
    %2579 = vmatpush1.bf16.msra.mxu0 %v2495
    %2580 = vmatprep.subr.bf16.mxu0 0
    %2581 = vmatpush1.bf16.msra.mxu0 %v2498
    %2582 = vmatprep.subr.bf16.mxu0 0
    %2583 = vmatpush1.bf16.msra.mxu0 0
    %2584 = vmatprep.subr.bf16.mxu0 0
    %2585 = vmatpush1.bf16.msra.mxu0 0
    %2586 = vmatprep.subr.bf16.mxu0 0
    %2587 = vmatpush1.bf16.msra.mxu0 0
    %2588 = vmatprep.subr.bf16.mxu0 0
    %2589 = vmatpush1.bf16.msra.mxu0 0
    %2590 = vmatprep.subr.bf16.mxu0 0
    %2591 = vmatpush1.bf16.msra.mxu0 0
    %2592 = vmatprep.subr.bf16.mxu0 0
    %2593 = vmatpush1.bf16.msra.mxu0 0
    %2594 = vmatprep.subr.bf16.mxu0 0
    %2595 = vmatpush1.bf16.msra.mxu0 0
    %2596 = vmatprep.subr.bf16.mxu0 0
    %2597 = vmatpush1.bf16.msra.mxu0 0
    %2598 = vmatprep.mubr.bf16.mxu0 0
    %2599 = vmatmul.mubr.bf16.gmra.mrb[0].mxu0 %v2378
    %v2600 = vpop.f32.mrb[0].mxu0
    %v2601 = vadd.f32 %v2391, %v2600
    %v2602 = vpop.f32.mrb[0].mxu0
    %v2603 = vpop.f32.mrb[0].mxu0
    %v2604 = vadd.f32 %v2391, %v2603
    %v2605 = vpop.f32.mrb[0].mxu0
    %2606 = vdwg.mxu0
    %v2607 = vmul.f32 %v2558, 0.17677669
    %v2608 = vmul.f32 %v2562, 0.17677669
    %v2609 = vpack.c.bf16 %v2608, %v2607
    %v2610 = vpack.c.bf16 %v2564, %v2560
    %v2611 = vpack.c.bf16 %v2604, %v2601
    %v2613 = vunpack.c.l.b16 %v2609
    %v2614 = vunpack.c.h.b16 %v2609
    %v2615 = vpack.c.b16 %v2613, %v2613
    %v2616 = vpack.c.b16 %v2614, %v2614
    %v2618 = vunpack.c.l.b16 %v2610
    %v2619 = vunpack.c.h.b16 %v2610
    %v2620 = vpack.c.b16 %v2618, %v2618
    %v2621 = vpack.c.b16 %v2619, %v2619
    %v2623 = vunpack.c.l.b16 %v2611
    %v2624 = vunpack.c.h.b16 %v2611
    %v2625 = vpack.c.b16 %v2623, %v2623
    %v2626 = vpack.c.b16 %v2624, %v2624
    %v2628 = vsel %vm587, %v2615, 0
    %v2631 = vsel %vm587, %v2620, 0
    %2633 = vmatprep.subr.bf16.mxu0 0
    %2634 = vmatpush1.bf16.xpose.msra.mxu0 %v2631
    %2635 = vmatprep.subr.bf16.mxu0 0
    %2636 = vmatpush1.bf16.xpose.msra.mxu0 0
    %2637 = vmatprep.subr.bf16.mxu0 0
    %2638 = vmatpush1.bf16.xpose.msra.mxu0 0
    %2639 = vmatprep.subr.bf16.mxu0 0
    %2640 = vmatpush1.bf16.xpose.msra.mxu0 0
    %2641 = vmatprep.subr.bf16.mxu0 0
    %2642 = vmatpush1.bf16.xpose.msra.mxu0 0
    %2643 = vmatprep.subr.bf16.mxu0 0
    %2644 = vmatpush1.bf16.xpose.msra.mxu0 0
    %2645 = vmatprep.subr.bf16.mxu0 0
    %2646 = vmatpush1.bf16.xpose.msra.mxu0 0
    %2647 = vmatprep.subr.bf16.mxu0 0
    %2648 = vmatpush1.bf16.xpose.msra.mxu0 0
    %2649 = vmatprep.subr.bf16.mxu0 0
    %2650 = vmatpush1.bf16.xpose.msra.mxu0 0
    %2651 = vmatprep.subr.bf16.mxu0 0
    %2652 = vmatpush1.bf16.xpose.msra.mxu0 0
    %2653 = vmatprep.subr.bf16.mxu0 0
    %2654 = vmatpush1.bf16.xpose.msra.mxu0 0
    %2655 = vmatprep.subr.bf16.mxu0 0
    %2656 = vmatpush1.bf16.xpose.msra.mxu0 0
    %2657 = vmatprep.subr.bf16.mxu0 0
    %2658 = vmatpush1.bf16.xpose.msra.mxu0 0
    %2659 = vmatprep.subr.bf16.mxu0 0
    %2660 = vmatpush1.bf16.xpose.msra.mxu0 0
    %2661 = vmatprep.subr.bf16.mxu0 0
    %2662 = vmatpush1.bf16.xpose.msra.mxu0 0
    %2663 = vmatprep.subr.bf16.mxu0 0
    %2664 = vmatpush1.bf16.xpose.msra.mxu0 0
    %2665 = vmatprep.mubr.bf16.mxu0 0
    %2666 = vmatmul.mubr.bf16.gmra.mrb[0].mxu0 %v2628
    %v2667 = vpop.f32.mrb[0].mxu0
    %v2668 = vadd.f32 0.0, %v2667
    %v2669 = vpop.f32.mrb[0].mxu0
    %v2670 = vpop.f32.mrb[0].mxu0
    %v2671 = vpop.f32.mrb[0].mxu0
    %2672 = vdwg.mxu0
    %v2674 = vsel %vm587, %v2616, 0
    %v2677 = vsel %vm587, %v2621, 0
    %2679 = vmatprep.subr.bf16.mxu0 0
    %2680 = vmatpush1.bf16.xpose.msra.mxu0 %v2677
    %2681 = vmatprep.subr.bf16.mxu0 0
    %2682 = vmatpush1.bf16.xpose.msra.mxu0 0
    %2683 = vmatprep.subr.bf16.mxu0 0
    %2684 = vmatpush1.bf16.xpose.msra.mxu0 0
    %2685 = vmatprep.subr.bf16.mxu0 0
    %2686 = vmatpush1.bf16.xpose.msra.mxu0 0
    %2687 = vmatprep.subr.bf16.mxu0 0
    %2688 = vmatpush1.bf16.xpose.msra.mxu0 0
    %2689 = vmatprep.subr.bf16.mxu0 0
    %2690 = vmatpush1.bf16.xpose.msra.mxu0 0
    %2691 = vmatprep.subr.bf16.mxu0 0
    %2692 = vmatpush1.bf16.xpose.msra.mxu0 0
    %2693 = vmatprep.subr.bf16.mxu0 0
    %2694 = vmatpush1.bf16.xpose.msra.mxu0 0
    %2695 = vmatprep.subr.bf16.mxu0 0
    %2696 = vmatpush1.bf16.xpose.msra.mxu0 0
    %2697 = vmatprep.subr.bf16.mxu0 0
    %2698 = vmatpush1.bf16.xpose.msra.mxu0 0
    %2699 = vmatprep.subr.bf16.mxu0 0
    %2700 = vmatpush1.bf16.xpose.msra.mxu0 0
    %2701 = vmatprep.subr.bf16.mxu0 0
    %2702 = vmatpush1.bf16.xpose.msra.mxu0 0
    %2703 = vmatprep.subr.bf16.mxu0 0
    %2704 = vmatpush1.bf16.xpose.msra.mxu0 0
    %2705 = vmatprep.subr.bf16.mxu0 0
    %2706 = vmatpush1.bf16.xpose.msra.mxu0 0
    %2707 = vmatprep.subr.bf16.mxu0 0
    %2708 = vmatpush1.bf16.xpose.msra.mxu0 0
    %2709 = vmatprep.subr.bf16.mxu0 0
    %2710 = vmatpush1.bf16.xpose.msra.mxu0 0
    %2711 = vmatprep.mubr.bf16.mxu0 0
    %2712 = vmatmul.mubr.bf16.gmra.mrb[0].mxu0 %v2674
    %v2713 = vpop.f32.mrb[0].mxu0
    %v2714 = vadd.f32 0.0, %v2713
    %v2715 = vpop.f32.mrb[0].mxu0
    %v2716 = vpop.f32.mrb[0].mxu0
    %v2717 = vpop.f32.mrb[0].mxu0
    %2718 = vdwg.mxu0
    %v2719 = vsel %vm680, %v2668, -inf
    %2720 = vmax.xlane.f32.xlu0 %v2719
    %v2721 = vpop.xlane.xlu0 %2720
    %v2722 = vsel %vm680, %v2714, -inf
    %2723 = vmax.xlane.f32.xlu0 %v2722
    %v2724 = vpop.xlane.xlu0 %2723
    %v2725 = vsub.f32 %v2668, %v2721
    %v2726 = vsub.f32 %v2714, %v2724
    %v2727 = vmul.f32 %v2725, 1.442695
    %v2728 = vpow.pop %v2727
    %v2729 = vmul.f32 %v2726, 1.442695
    %v2730 = vpow.pop %v2729
    %v2731 = vsel %vm680, %v2728, 0.0
    %2732 = vadd.xlane.f32.xlu0 %v2731
    %v2733 = vpop.xlane.xlu0 %2732
    %v2734 = vsel %vm680, %v2730, 0.0
    %2735 = vadd.xlane.f32.xlu0 %v2734
    %v2736 = vpop.xlane.xlu0 %2735
    %v2737 = vrcp.pop %v2733
    %v2738 = vrcp.pop %v2736
    %v2739 = vmul.f32 %v2728, %v2737
    %v2740 = vmul.f32 %v2730, %v2738
    %v2741 = vpack.c.bf16 %v2739, %v2739
    %v2742 = vpack.c.bf16 %v2740, %v2740
    %v2744 = vsel %vm680, %v2741, 0
    %v2747 = vsel %vm708, %v2625, 0
    %2749 = vmatprep.subr.bf16.mxu0 0
    %2750 = vmatpush1.bf16.msra.mxu0 %v2747
    %2751 = vmatprep.subr.bf16.mxu0 0
    %2752 = vmatpush1.bf16.msra.mxu0 0
    %2753 = vmatprep.subr.bf16.mxu0 0
    %2754 = vmatpush1.bf16.msra.mxu0 0
    %2755 = vmatprep.subr.bf16.mxu0 0
    %2756 = vmatpush1.bf16.msra.mxu0 0
    %2757 = vmatprep.subr.bf16.mxu0 0
    %2758 = vmatpush1.bf16.msra.mxu0 0
    %2759 = vmatprep.subr.bf16.mxu0 0
    %2760 = vmatpush1.bf16.msra.mxu0 0
    %2761 = vmatprep.subr.bf16.mxu0 0
    %2762 = vmatpush1.bf16.msra.mxu0 0
    %2763 = vmatprep.subr.bf16.mxu0 0
    %2764 = vmatpush1.bf16.msra.mxu0 0
    %2765 = vmatprep.subr.bf16.mxu0 0
    %2766 = vmatpush1.bf16.msra.mxu0 0
    %2767 = vmatprep.subr.bf16.mxu0 0
    %2768 = vmatpush1.bf16.msra.mxu0 0
    %2769 = vmatprep.subr.bf16.mxu0 0
    %2770 = vmatpush1.bf16.msra.mxu0 0
    %2771 = vmatprep.subr.bf16.mxu0 0
    %2772 = vmatpush1.bf16.msra.mxu0 0
    %2773 = vmatprep.subr.bf16.mxu0 0
    %2774 = vmatpush1.bf16.msra.mxu0 0
    %2775 = vmatprep.subr.bf16.mxu0 0
    %2776 = vmatpush1.bf16.msra.mxu0 0
    %2777 = vmatprep.subr.bf16.mxu0 0
    %2778 = vmatpush1.bf16.msra.mxu0 0
    %2779 = vmatprep.subr.bf16.mxu0 0
    %2780 = vmatpush1.bf16.msra.mxu0 0
    %2781 = vmatprep.mubr.bf16.mxu0 0
    %2782 = vmatmul.mubr.bf16.gmra.mrb[0].mxu0 %v2744
    %v2783 = vpop.f32.mrb[0].mxu0
    %v2784 = vadd.f32 0.0, %v2783
    %v2785 = vpop.f32.mrb[0].mxu0
    %v2786 = vpop.f32.mrb[0].mxu0
    %v2787 = vpop.f32.mrb[0].mxu0
    %2788 = vdwg.mxu0
    %v2790 = vsel %vm680, %v2742, 0
    %v2793 = vsel %vm708, %v2626, 0
    %2795 = vmatprep.subr.bf16.mxu0 0
    %2796 = vmatpush1.bf16.msra.mxu0 %v2793
    %2797 = vmatprep.subr.bf16.mxu0 0
    %2798 = vmatpush1.bf16.msra.mxu0 0
    %2799 = vmatprep.subr.bf16.mxu0 0
    %2800 = vmatpush1.bf16.msra.mxu0 0
    %2801 = vmatprep.subr.bf16.mxu0 0
    %2802 = vmatpush1.bf16.msra.mxu0 0
    %2803 = vmatprep.subr.bf16.mxu0 0
    %2804 = vmatpush1.bf16.msra.mxu0 0
    %2805 = vmatprep.subr.bf16.mxu0 0
    %2806 = vmatpush1.bf16.msra.mxu0 0
    %2807 = vmatprep.subr.bf16.mxu0 0
    %2808 = vmatpush1.bf16.msra.mxu0 0
    %2809 = vmatprep.subr.bf16.mxu0 0
    %2810 = vmatpush1.bf16.msra.mxu0 0
    %2811 = vmatprep.subr.bf16.mxu0 0
    %2812 = vmatpush1.bf16.msra.mxu0 0
    %2813 = vmatprep.subr.bf16.mxu0 0
    %2814 = vmatpush1.bf16.msra.mxu0 0
    %2815 = vmatprep.subr.bf16.mxu0 0
    %2816 = vmatpush1.bf16.msra.mxu0 0
    %2817 = vmatprep.subr.bf16.mxu0 0
    %2818 = vmatpush1.bf16.msra.mxu0 0
    %2819 = vmatprep.subr.bf16.mxu0 0
    %2820 = vmatpush1.bf16.msra.mxu0 0
    %2821 = vmatprep.subr.bf16.mxu0 0
    %2822 = vmatpush1.bf16.msra.mxu0 0
    %2823 = vmatprep.subr.bf16.mxu0 0
    %2824 = vmatpush1.bf16.msra.mxu0 0
    %2825 = vmatprep.subr.bf16.mxu0 0
    %2826 = vmatpush1.bf16.msra.mxu0 0
    %2827 = vmatprep.mubr.bf16.mxu0 0
    %2828 = vmatmul.mubr.bf16.gmra.mrb[0].mxu0 %v2790
    %v2829 = vpop.f32.mrb[0].mxu0
    %v2830 = vadd.f32 0.0, %v2829
    %v2831 = vpop.f32.mrb[0].mxu0
    %v2832 = vpop.f32.mrb[0].mxu0
    %v2833 = vpop.f32.mrb[0].mxu0
    %2834 = vdwg.mxu0
    %2835 = vrot.lane.b32.xlu0 %v2615, 96
    %v2836 = vpop.permute.xlu0 %2835
    %2837 = vrot.lane.b32.xlu0 %v2620, 96
    %v2838 = vpop.permute.xlu0 %2837
    %v2840 = vsel %vm587, %v2836, 0
    %v2843 = vsel %vm587, %v2838, 0
    %2845 = vmatprep.subr.bf16.mxu0 0
    %2846 = vmatpush1.bf16.xpose.msra.mxu0 %v2843
    %2847 = vmatprep.subr.bf16.mxu0 0
    %2848 = vmatpush1.bf16.xpose.msra.mxu0 0
    %2849 = vmatprep.subr.bf16.mxu0 0
    %2850 = vmatpush1.bf16.xpose.msra.mxu0 0
    %2851 = vmatprep.subr.bf16.mxu0 0
    %2852 = vmatpush1.bf16.xpose.msra.mxu0 0
    %2853 = vmatprep.subr.bf16.mxu0 0
    %2854 = vmatpush1.bf16.xpose.msra.mxu0 0
    %2855 = vmatprep.subr.bf16.mxu0 0
    %2856 = vmatpush1.bf16.xpose.msra.mxu0 0
    %2857 = vmatprep.subr.bf16.mxu0 0
    %2858 = vmatpush1.bf16.xpose.msra.mxu0 0
    %2859 = vmatprep.subr.bf16.mxu0 0
    %2860 = vmatpush1.bf16.xpose.msra.mxu0 0
    %2861 = vmatprep.subr.bf16.mxu0 0
    %2862 = vmatpush1.bf16.xpose.msra.mxu0 0
    %2863 = vmatprep.subr.bf16.mxu0 0
    %2864 = vmatpush1.bf16.xpose.msra.mxu0 0
    %2865 = vmatprep.subr.bf16.mxu0 0
    %2866 = vmatpush1.bf16.xpose.msra.mxu0 0
    %2867 = vmatprep.subr.bf16.mxu0 0
    %2868 = vmatpush1.bf16.xpose.msra.mxu0 0
    %2869 = vmatprep.subr.bf16.mxu0 0
    %2870 = vmatpush1.bf16.xpose.msra.mxu0 0
    %2871 = vmatprep.subr.bf16.mxu0 0
    %2872 = vmatpush1.bf16.xpose.msra.mxu0 0
    %2873 = vmatprep.subr.bf16.mxu0 0
    %2874 = vmatpush1.bf16.xpose.msra.mxu0 0
    %2875 = vmatprep.subr.bf16.mxu0 0
    %2876 = vmatpush1.bf16.xpose.msra.mxu0 0
    %2877 = vmatprep.mubr.bf16.mxu0 0
    %2878 = vmatmul.mubr.bf16.gmra.mrb[0].mxu0 %v2840
    %v2879 = vpop.f32.mrb[0].mxu0
    %v2880 = vadd.f32 0.0, %v2879
    %v2881 = vpop.f32.mrb[0].mxu0
    %v2882 = vpop.f32.mrb[0].mxu0
    %v2883 = vpop.f32.mrb[0].mxu0
    %2884 = vdwg.mxu0
    %2885 = vrot.lane.b32.xlu0 %v2616, 96
    %v2886 = vpop.permute.xlu0 %2885
    %2887 = vrot.lane.b32.xlu0 %v2621, 96
    %v2888 = vpop.permute.xlu0 %2887
    %v2890 = vsel %vm587, %v2886, 0
    %v2893 = vsel %vm587, %v2888, 0
    %2895 = vmatprep.subr.bf16.mxu0 0
    %2896 = vmatpush1.bf16.xpose.msra.mxu0 %v2893
    %2897 = vmatprep.subr.bf16.mxu0 0
    %2898 = vmatpush1.bf16.xpose.msra.mxu0 0
    %2899 = vmatprep.subr.bf16.mxu0 0
    %2900 = vmatpush1.bf16.xpose.msra.mxu0 0
    %2901 = vmatprep.subr.bf16.mxu0 0
    %2902 = vmatpush1.bf16.xpose.msra.mxu0 0
    %2903 = vmatprep.subr.bf16.mxu0 0
    %2904 = vmatpush1.bf16.xpose.msra.mxu0 0
    %2905 = vmatprep.subr.bf16.mxu0 0
    %2906 = vmatpush1.bf16.xpose.msra.mxu0 0
    %2907 = vmatprep.subr.bf16.mxu0 0
    %2908 = vmatpush1.bf16.xpose.msra.mxu0 0
    %2909 = vmatprep.subr.bf16.mxu0 0
    %2910 = vmatpush1.bf16.xpose.msra.mxu0 0
    %2911 = vmatprep.subr.bf16.mxu0 0
    %2912 = vmatpush1.bf16.xpose.msra.mxu0 0
    %2913 = vmatprep.subr.bf16.mxu0 0
    %2914 = vmatpush1.bf16.xpose.msra.mxu0 0
    %2915 = vmatprep.subr.bf16.mxu0 0
    %2916 = vmatpush1.bf16.xpose.msra.mxu0 0
    %2917 = vmatprep.subr.bf16.mxu0 0
    %2918 = vmatpush1.bf16.xpose.msra.mxu0 0
    %2919 = vmatprep.subr.bf16.mxu0 0
    %2920 = vmatpush1.bf16.xpose.msra.mxu0 0
    %2921 = vmatprep.subr.bf16.mxu0 0
    %2922 = vmatpush1.bf16.xpose.msra.mxu0 0
    %2923 = vmatprep.subr.bf16.mxu0 0
    %2924 = vmatpush1.bf16.xpose.msra.mxu0 0
    %2925 = vmatprep.subr.bf16.mxu0 0
    %2926 = vmatpush1.bf16.xpose.msra.mxu0 0
    %2927 = vmatprep.mubr.bf16.mxu0 0
    %2928 = vmatmul.mubr.bf16.gmra.mrb[0].mxu0 %v2890
    %v2929 = vpop.f32.mrb[0].mxu0
    %v2930 = vadd.f32 0.0, %v2929
    %v2931 = vpop.f32.mrb[0].mxu0
    %v2932 = vpop.f32.mrb[0].mxu0
    %v2933 = vpop.f32.mrb[0].mxu0
    %2934 = vdwg.mxu0
    %v2935 = vsel %vm680, %v2880, -inf
    %2936 = vmax.xlane.f32.xlu0 %v2935
    %v2937 = vpop.xlane.xlu0 %2936
    %v2938 = vsel %vm680, %v2930, -inf
    %2939 = vmax.xlane.f32.xlu0 %v2938
    %v2940 = vpop.xlane.xlu0 %2939
    %v2941 = vsub.f32 %v2880, %v2937
    %v2942 = vsub.f32 %v2930, %v2940
    %v2943 = vmul.f32 %v2941, 1.442695
    %v2944 = vpow.pop %v2943
    %v2945 = vmul.f32 %v2942, 1.442695
    %v2946 = vpow.pop %v2945
    %v2947 = vsel %vm680, %v2944, 0.0
    %2948 = vadd.xlane.f32.xlu0 %v2947
    %v2949 = vpop.xlane.xlu0 %2948
    %v2950 = vsel %vm680, %v2946, 0.0
    %2951 = vadd.xlane.f32.xlu0 %v2950
    %v2952 = vpop.xlane.xlu0 %2951
    %v2953 = vrcp.pop %v2949
    %v2954 = vrcp.pop %v2952
    %v2955 = vmul.f32 %v2944, %v2953
    %v2956 = vmul.f32 %v2946, %v2954
    %v2957 = vpack.c.bf16 %v2955, %v2955
    %v2958 = vpack.c.bf16 %v2956, %v2956
    %2959 = vrot.lane.b32.xlu0 %v2625, 96
    %v2960 = vpop.permute.xlu0 %2959
    %v2962 = vsel %vm680, %v2957, 0
    %v2965 = vsel %vm708, %v2960, 0
    %2967 = vmatprep.subr.bf16.mxu0 0
    %2968 = vmatpush1.bf16.msra.mxu0 %v2965
    %2969 = vmatprep.subr.bf16.mxu0 0
    %2970 = vmatpush1.bf16.msra.mxu0 0
    %2971 = vmatprep.subr.bf16.mxu0 0
    %2972 = vmatpush1.bf16.msra.mxu0 0
    %2973 = vmatprep.subr.bf16.mxu0 0
    %2974 = vmatpush1.bf16.msra.mxu0 0
    %2975 = vmatprep.subr.bf16.mxu0 0
    %2976 = vmatpush1.bf16.msra.mxu0 0
    %2977 = vmatprep.subr.bf16.mxu0 0
    %2978 = vmatpush1.bf16.msra.mxu0 0
    %2979 = vmatprep.subr.bf16.mxu0 0
    %2980 = vmatpush1.bf16.msra.mxu0 0
    %2981 = vmatprep.subr.bf16.mxu0 0
    %2982 = vmatpush1.bf16.msra.mxu0 0
    %2983 = vmatprep.subr.bf16.mxu0 0
    %2984 = vmatpush1.bf16.msra.mxu0 0
    %2985 = vmatprep.subr.bf16.mxu0 0
    %2986 = vmatpush1.bf16.msra.mxu0 0
    %2987 = vmatprep.subr.bf16.mxu0 0
    %2988 = vmatpush1.bf16.msra.mxu0 0
    %2989 = vmatprep.subr.bf16.mxu0 0
    %2990 = vmatpush1.bf16.msra.mxu0 0
    %2991 = vmatprep.subr.bf16.mxu0 0
    %2992 = vmatpush1.bf16.msra.mxu0 0
    %2993 = vmatprep.subr.bf16.mxu0 0
    %2994 = vmatpush1.bf16.msra.mxu0 0
    %2995 = vmatprep.subr.bf16.mxu0 0
    %2996 = vmatpush1.bf16.msra.mxu0 0
    %2997 = vmatprep.subr.bf16.mxu0 0
    %2998 = vmatpush1.bf16.msra.mxu0 0
    %2999 = vmatprep.mubr.bf16.mxu0 0
    %3000 = vmatmul.mubr.bf16.gmra.mrb[0].mxu0 %v2962
    %v3001 = vpop.f32.mrb[0].mxu0
    %v3002 = vadd.f32 0.0, %v3001
    %v3003 = vpop.f32.mrb[0].mxu0
    %v3004 = vpop.f32.mrb[0].mxu0
    %v3005 = vpop.f32.mrb[0].mxu0
    %3006 = vdwg.mxu0
    %3007 = vrot.lane.b32.xlu0 %v2626, 96
    %v3008 = vpop.permute.xlu0 %3007
    %v3010 = vsel %vm680, %v2958, 0
    %v3013 = vsel %vm708, %v3008, 0
    %3015 = vmatprep.subr.bf16.mxu0 0
    %3016 = vmatpush1.bf16.msra.mxu0 %v3013
    %3017 = vmatprep.subr.bf16.mxu0 0
    %3018 = vmatpush1.bf16.msra.mxu0 0
    %3019 = vmatprep.subr.bf16.mxu0 0
    %3020 = vmatpush1.bf16.msra.mxu0 0
    %3021 = vmatprep.subr.bf16.mxu0 0
    %3022 = vmatpush1.bf16.msra.mxu0 0
    %3023 = vmatprep.subr.bf16.mxu0 0
    %3024 = vmatpush1.bf16.msra.mxu0 0
    %3025 = vmatprep.subr.bf16.mxu0 0
    %3026 = vmatpush1.bf16.msra.mxu0 0
    %3027 = vmatprep.subr.bf16.mxu0 0
    %3028 = vmatpush1.bf16.msra.mxu0 0
    %3029 = vmatprep.subr.bf16.mxu0 0
    %3030 = vmatpush1.bf16.msra.mxu0 0
    %3031 = vmatprep.subr.bf16.mxu0 0
    %3032 = vmatpush1.bf16.msra.mxu0 0
    %3033 = vmatprep.subr.bf16.mxu0 0
    %3034 = vmatpush1.bf16.msra.mxu0 0
    %3035 = vmatprep.subr.bf16.mxu0 0
    %3036 = vmatpush1.bf16.msra.mxu0 0
    %3037 = vmatprep.subr.bf16.mxu0 0
    %3038 = vmatpush1.bf16.msra.mxu0 0
    %3039 = vmatprep.subr.bf16.mxu0 0
    %3040 = vmatpush1.bf16.msra.mxu0 0
    %3041 = vmatprep.subr.bf16.mxu0 0
    %3042 = vmatpush1.bf16.msra.mxu0 0
    %3043 = vmatprep.subr.bf16.mxu0 0
    %3044 = vmatpush1.bf16.msra.mxu0 0
    %3045 = vmatprep.subr.bf16.mxu0 0
    %3046 = vmatpush1.bf16.msra.mxu0 0
    %3047 = vmatprep.mubr.bf16.mxu0 0
    %3048 = vmatmul.mubr.bf16.gmra.mrb[0].mxu0 %v3010
    %v3049 = vpop.f32.mrb[0].mxu0
    %v3050 = vadd.f32 0.0, %v3049
    %v3051 = vpop.f32.mrb[0].mxu0
    %v3052 = vpop.f32.mrb[0].mxu0
    %v3053 = vpop.f32.mrb[0].mxu0
    %3054 = vdwg.mxu0
    %3055 = vrot.lane.b32.xlu0 %v2615, 64
    %v3056 = vpop.permute.xlu0 %3055
    %3057 = vrot.lane.b32.xlu0 %v2620, 64
    %v3058 = vpop.permute.xlu0 %3057
    %v3060 = vsel %vm587, %v3056, 0
    %v3063 = vsel %vm587, %v3058, 0
    %3065 = vmatprep.subr.bf16.mxu0 0
    %3066 = vmatpush1.bf16.xpose.msra.mxu0 %v3063
    %3067 = vmatprep.subr.bf16.mxu0 0
    %3068 = vmatpush1.bf16.xpose.msra.mxu0 0
    %3069 = vmatprep.subr.bf16.mxu0 0
    %3070 = vmatpush1.bf16.xpose.msra.mxu0 0
    %3071 = vmatprep.subr.bf16.mxu0 0
    %3072 = vmatpush1.bf16.xpose.msra.mxu0 0
    %3073 = vmatprep.subr.bf16.mxu0 0
    %3074 = vmatpush1.bf16.xpose.msra.mxu0 0
    %3075 = vmatprep.subr.bf16.mxu0 0
    %3076 = vmatpush1.bf16.xpose.msra.mxu0 0
    %3077 = vmatprep.subr.bf16.mxu0 0
    %3078 = vmatpush1.bf16.xpose.msra.mxu0 0
    %3079 = vmatprep.subr.bf16.mxu0 0
    %3080 = vmatpush1.bf16.xpose.msra.mxu0 0
    %3081 = vmatprep.subr.bf16.mxu0 0
    %3082 = vmatpush1.bf16.xpose.msra.mxu0 0
    %3083 = vmatprep.subr.bf16.mxu0 0
    %3084 = vmatpush1.bf16.xpose.msra.mxu0 0
    %3085 = vmatprep.subr.bf16.mxu0 0
    %3086 = vmatpush1.bf16.xpose.msra.mxu0 0
    %3087 = vmatprep.subr.bf16.mxu0 0
    %3088 = vmatpush1.bf16.xpose.msra.mxu0 0
    %3089 = vmatprep.subr.bf16.mxu0 0
    %3090 = vmatpush1.bf16.xpose.msra.mxu0 0
    %3091 = vmatprep.subr.bf16.mxu0 0
    %3092 = vmatpush1.bf16.xpose.msra.mxu0 0
    %3093 = vmatprep.subr.bf16.mxu0 0
    %3094 = vmatpush1.bf16.xpose.msra.mxu0 0
    %3095 = vmatprep.subr.bf16.mxu0 0
    %3096 = vmatpush1.bf16.xpose.msra.mxu0 0
    %3097 = vmatprep.mubr.bf16.mxu0 0
    %3098 = vmatmul.mubr.bf16.gmra.mrb[0].mxu0 %v3060
    %v3099 = vpop.f32.mrb[0].mxu0
    %v3100 = vadd.f32 0.0, %v3099
    %v3101 = vpop.f32.mrb[0].mxu0
    %v3102 = vpop.f32.mrb[0].mxu0
    %v3103 = vpop.f32.mrb[0].mxu0
    %3104 = vdwg.mxu0
    %3105 = vrot.lane.b32.xlu0 %v2616, 64
    %v3106 = vpop.permute.xlu0 %3105
    %3107 = vrot.lane.b32.xlu0 %v2621, 64
    %v3108 = vpop.permute.xlu0 %3107
    %v3110 = vsel %vm587, %v3106, 0
    %v3113 = vsel %vm587, %v3108, 0
    %3115 = vmatprep.subr.bf16.mxu0 0
    %3116 = vmatpush1.bf16.xpose.msra.mxu0 %v3113
    %3117 = vmatprep.subr.bf16.mxu0 0
    %3118 = vmatpush1.bf16.xpose.msra.mxu0 0
    %3119 = vmatprep.subr.bf16.mxu0 0
    %3120 = vmatpush1.bf16.xpose.msra.mxu0 0
    %3121 = vmatprep.subr.bf16.mxu0 0
    %3122 = vmatpush1.bf16.xpose.msra.mxu0 0
    %3123 = vmatprep.subr.bf16.mxu0 0
    %3124 = vmatpush1.bf16.xpose.msra.mxu0 0
    %3125 = vmatprep.subr.bf16.mxu0 0
    %3126 = vmatpush1.bf16.xpose.msra.mxu0 0
    %3127 = vmatprep.subr.bf16.mxu0 0
    %3128 = vmatpush1.bf16.xpose.msra.mxu0 0
    %3129 = vmatprep.subr.bf16.mxu0 0
    %3130 = vmatpush1.bf16.xpose.msra.mxu0 0
    %3131 = vmatprep.subr.bf16.mxu0 0
    %3132 = vmatpush1.bf16.xpose.msra.mxu0 0
    %3133 = vmatprep.subr.bf16.mxu0 0
    %3134 = vmatpush1.bf16.xpose.msra.mxu0 0
    %3135 = vmatprep.subr.bf16.mxu0 0
    %3136 = vmatpush1.bf16.xpose.msra.mxu0 0
    %3137 = vmatprep.subr.bf16.mxu0 0
    %3138 = vmatpush1.bf16.xpose.msra.mxu0 0
    %3139 = vmatprep.subr.bf16.mxu0 0
    %3140 = vmatpush1.bf16.xpose.msra.mxu0 0
    %3141 = vmatprep.subr.bf16.mxu0 0
    %3142 = vmatpush1.bf16.xpose.msra.mxu0 0
    %3143 = vmatprep.subr.bf16.mxu0 0
    %3144 = vmatpush1.bf16.xpose.msra.mxu0 0
    %3145 = vmatprep.subr.bf16.mxu0 0
    %3146 = vmatpush1.bf16.xpose.msra.mxu0 0
    %3147 = vmatprep.mubr.bf16.mxu0 0
    %3148 = vmatmul.mubr.bf16.gmra.mrb[0].mxu0 %v3110
    %v3149 = vpop.f32.mrb[0].mxu0
    %v3150 = vadd.f32 0.0, %v3149
    %v3151 = vpop.f32.mrb[0].mxu0
    %v3152 = vpop.f32.mrb[0].mxu0
    %v3153 = vpop.f32.mrb[0].mxu0
    %3154 = vdwg.mxu0
    %v3155 = vsel %vm680, %v3100, -inf
    %3156 = vmax.xlane.f32.xlu0 %v3155
    %v3157 = vpop.xlane.xlu0 %3156
    %v3158 = vsel %vm680, %v3150, -inf
    %3159 = vmax.xlane.f32.xlu0 %v3158
    %v3160 = vpop.xlane.xlu0 %3159
    %v3161 = vsub.f32 %v3100, %v3157
    %v3162 = vsub.f32 %v3150, %v3160
    %v3163 = vmul.f32 %v3161, 1.442695
    %v3164 = vpow.pop %v3163
    %v3165 = vmul.f32 %v3162, 1.442695
    %v3166 = vpow.pop %v3165
    %v3167 = vsel %vm680, %v3164, 0.0
    %3168 = vadd.xlane.f32.xlu0 %v3167
    %v3169 = vpop.xlane.xlu0 %3168
    %v3170 = vsel %vm680, %v3166, 0.0
    %3171 = vadd.xlane.f32.xlu0 %v3170
    %v3172 = vpop.xlane.xlu0 %3171
    %v3173 = vrcp.pop %v3169
    %v3174 = vrcp.pop %v3172
    %v3175 = vmul.f32 %v3164, %v3173
    %v3176 = vmul.f32 %v3166, %v3174
    %v3177 = vpack.c.bf16 %v3175, %v3175
    %v3178 = vpack.c.bf16 %v3176, %v3176
    %3179 = vrot.lane.b32.xlu0 %v2625, 64
    %v3180 = vpop.permute.xlu0 %3179
    %v3182 = vsel %vm680, %v3177, 0
    %v3185 = vsel %vm708, %v3180, 0
    %3187 = vmatprep.subr.bf16.mxu0 0
    %3188 = vmatpush1.bf16.msra.mxu0 %v3185
    %3189 = vmatprep.subr.bf16.mxu0 0
    %3190 = vmatpush1.bf16.msra.mxu0 0
    %3191 = vmatprep.subr.bf16.mxu0 0
    %3192 = vmatpush1.bf16.msra.mxu0 0
    %3193 = vmatprep.subr.bf16.mxu0 0
    %3194 = vmatpush1.bf16.msra.mxu0 0
    %3195 = vmatprep.subr.bf16.mxu0 0
    %3196 = vmatpush1.bf16.msra.mxu0 0
    %3197 = vmatprep.subr.bf16.mxu0 0
    %3198 = vmatpush1.bf16.msra.mxu0 0
    %3199 = vmatprep.subr.bf16.mxu0 0
    %3200 = vmatpush1.bf16.msra.mxu0 0
    %3201 = vmatprep.subr.bf16.mxu0 0
    %3202 = vmatpush1.bf16.msra.mxu0 0
    %3203 = vmatprep.subr.bf16.mxu0 0
    %3204 = vmatpush1.bf16.msra.mxu0 0
    %3205 = vmatprep.subr.bf16.mxu0 0
    %3206 = vmatpush1.bf16.msra.mxu0 0
    %3207 = vmatprep.subr.bf16.mxu0 0
    %3208 = vmatpush1.bf16.msra.mxu0 0
    %3209 = vmatprep.subr.bf16.mxu0 0
    %3210 = vmatpush1.bf16.msra.mxu0 0
    %3211 = vmatprep.subr.bf16.mxu0 0
    %3212 = vmatpush1.bf16.msra.mxu0 0
    %3213 = vmatprep.subr.bf16.mxu0 0
    %3214 = vmatpush1.bf16.msra.mxu0 0
    %3215 = vmatprep.subr.bf16.mxu0 0
    %3216 = vmatpush1.bf16.msra.mxu0 0
    %3217 = vmatprep.subr.bf16.mxu0 0
    %3218 = vmatpush1.bf16.msra.mxu0 0
    %3219 = vmatprep.mubr.bf16.mxu0 0
    %3220 = vmatmul.mubr.bf16.gmra.mrb[0].mxu0 %v3182
    %v3221 = vpop.f32.mrb[0].mxu0
    %v3222 = vadd.f32 0.0, %v3221
    %v3223 = vpop.f32.mrb[0].mxu0
    %v3224 = vpop.f32.mrb[0].mxu0
    %v3225 = vpop.f32.mrb[0].mxu0
    %3226 = vdwg.mxu0
    %3227 = vrot.lane.b32.xlu0 %v2626, 64
    %v3228 = vpop.permute.xlu0 %3227
    %v3230 = vsel %vm680, %v3178, 0
    %v3233 = vsel %vm708, %v3228, 0
    %3235 = vmatprep.subr.bf16.mxu0 0
    %3236 = vmatpush1.bf16.msra.mxu0 %v3233
    %3237 = vmatprep.subr.bf16.mxu0 0
    %3238 = vmatpush1.bf16.msra.mxu0 0
    %3239 = vmatprep.subr.bf16.mxu0 0
    %3240 = vmatpush1.bf16.msra.mxu0 0
    %3241 = vmatprep.subr.bf16.mxu0 0
    %3242 = vmatpush1.bf16.msra.mxu0 0
    %3243 = vmatprep.subr.bf16.mxu0 0
    %3244 = vmatpush1.bf16.msra.mxu0 0
    %3245 = vmatprep.subr.bf16.mxu0 0
    %3246 = vmatpush1.bf16.msra.mxu0 0
    %3247 = vmatprep.subr.bf16.mxu0 0
    %3248 = vmatpush1.bf16.msra.mxu0 0
    %3249 = vmatprep.subr.bf16.mxu0 0
    %3250 = vmatpush1.bf16.msra.mxu0 0
    %3251 = vmatprep.subr.bf16.mxu0 0
    %3252 = vmatpush1.bf16.msra.mxu0 0
    %3253 = vmatprep.subr.bf16.mxu0 0
    %3254 = vmatpush1.bf16.msra.mxu0 0
    %3255 = vmatprep.subr.bf16.mxu0 0
    %3256 = vmatpush1.bf16.msra.mxu0 0
    %3257 = vmatprep.subr.bf16.mxu0 0
    %3258 = vmatpush1.bf16.msra.mxu0 0
    %3259 = vmatprep.subr.bf16.mxu0 0
    %3260 = vmatpush1.bf16.msra.mxu0 0
    %3261 = vmatprep.subr.bf16.mxu0 0
    %3262 = vmatpush1.bf16.msra.mxu0 0
    %3263 = vmatprep.subr.bf16.mxu0 0
    %3264 = vmatpush1.bf16.msra.mxu0 0
    %3265 = vmatprep.subr.bf16.mxu0 0
    %3266 = vmatpush1.bf16.msra.mxu0 0
    %3267 = vmatprep.mubr.bf16.mxu0 0
    %3268 = vmatmul.mubr.bf16.gmra.mrb[0].mxu0 %v3230
    %v3269 = vpop.f32.mrb[0].mxu0
    %v3270 = vadd.f32 0.0, %v3269
    %v3271 = vpop.f32.mrb[0].mxu0
    %v3272 = vpop.f32.mrb[0].mxu0
    %v3273 = vpop.f32.mrb[0].mxu0
    %3274 = vdwg.mxu0
    %3275 = vrot.lane.b32.xlu0 %v2615, 32
    %v3276 = vpop.permute.xlu0 %3275
    %3277 = vrot.lane.b32.xlu0 %v2620, 32
    %v3278 = vpop.permute.xlu0 %3277
    %v3280 = vsel %vm587, %v3276, 0
    %v3283 = vsel %vm587, %v3278, 0
    %3285 = vmatprep.subr.bf16.mxu0 0
    %3286 = vmatpush1.bf16.xpose.msra.mxu0 %v3283
    %3287 = vmatprep.subr.bf16.mxu0 0
    %3288 = vmatpush1.bf16.xpose.msra.mxu0 0
    %3289 = vmatprep.subr.bf16.mxu0 0
    %3290 = vmatpush1.bf16.xpose.msra.mxu0 0
    %3291 = vmatprep.subr.bf16.mxu0 0
    %3292 = vmatpush1.bf16.xpose.msra.mxu0 0
    %3293 = vmatprep.subr.bf16.mxu0 0
    %3294 = vmatpush1.bf16.xpose.msra.mxu0 0
    %3295 = vmatprep.subr.bf16.mxu0 0
    %3296 = vmatpush1.bf16.xpose.msra.mxu0 0
    %3297 = vmatprep.subr.bf16.mxu0 0
    %3298 = vmatpush1.bf16.xpose.msra.mxu0 0
    %3299 = vmatprep.subr.bf16.mxu0 0
    %3300 = vmatpush1.bf16.xpose.msra.mxu0 0
    %3301 = vmatprep.subr.bf16.mxu0 0
    %3302 = vmatpush1.bf16.xpose.msra.mxu0 0
    %3303 = vmatprep.subr.bf16.mxu0 0
    %3304 = vmatpush1.bf16.xpose.msra.mxu0 0
    %3305 = vmatprep.subr.bf16.mxu0 0
    %3306 = vmatpush1.bf16.xpose.msra.mxu0 0
    %3307 = vmatprep.subr.bf16.mxu0 0
    %3308 = vmatpush1.bf16.xpose.msra.mxu0 0
    %3309 = vmatprep.subr.bf16.mxu0 0
    %3310 = vmatpush1.bf16.xpose.msra.mxu0 0
    %3311 = vmatprep.subr.bf16.mxu0 0
    %3312 = vmatpush1.bf16.xpose.msra.mxu0 0
    %3313 = vmatprep.subr.bf16.mxu0 0
    %3314 = vmatpush1.bf16.xpose.msra.mxu0 0
    %3315 = vmatprep.subr.bf16.mxu0 0
    %3316 = vmatpush1.bf16.xpose.msra.mxu0 0
    %3317 = vmatprep.mubr.bf16.mxu0 0
    %3318 = vmatmul.mubr.bf16.gmra.mrb[0].mxu0 %v3280
    %v3319 = vpop.f32.mrb[0].mxu0
    %v3320 = vadd.f32 0.0, %v3319
    %v3321 = vpop.f32.mrb[0].mxu0
    %v3322 = vpop.f32.mrb[0].mxu0
    %v3323 = vpop.f32.mrb[0].mxu0
    %3324 = vdwg.mxu0
    %3325 = vrot.lane.b32.xlu0 %v2616, 32
    %v3326 = vpop.permute.xlu0 %3325
    %3327 = vrot.lane.b32.xlu0 %v2621, 32
    %v3328 = vpop.permute.xlu0 %3327
    %v3330 = vsel %vm587, %v3326, 0
    %v3333 = vsel %vm587, %v3328, 0
    %3335 = vmatprep.subr.bf16.mxu0 0
    %3336 = vmatpush1.bf16.xpose.msra.mxu0 %v3333
    %3337 = vmatprep.subr.bf16.mxu0 0
    %3338 = vmatpush1.bf16.xpose.msra.mxu0 0
    %3339 = vmatprep.subr.bf16.mxu0 0
    %3340 = vmatpush1.bf16.xpose.msra.mxu0 0
    %3341 = vmatprep.subr.bf16.mxu0 0
    %3342 = vmatpush1.bf16.xpose.msra.mxu0 0
    %3343 = vmatprep.subr.bf16.mxu0 0
    %3344 = vmatpush1.bf16.xpose.msra.mxu0 0
    %3345 = vmatprep.subr.bf16.mxu0 0
    %3346 = vmatpush1.bf16.xpose.msra.mxu0 0
    %3347 = vmatprep.subr.bf16.mxu0 0
    %3348 = vmatpush1.bf16.xpose.msra.mxu0 0
    %3349 = vmatprep.subr.bf16.mxu0 0
    %3350 = vmatpush1.bf16.xpose.msra.mxu0 0
    %3351 = vmatprep.subr.bf16.mxu0 0
    %3352 = vmatpush1.bf16.xpose.msra.mxu0 0
    %3353 = vmatprep.subr.bf16.mxu0 0
    %3354 = vmatpush1.bf16.xpose.msra.mxu0 0
    %3355 = vmatprep.subr.bf16.mxu0 0
    %3356 = vmatpush1.bf16.xpose.msra.mxu0 0
    %3357 = vmatprep.subr.bf16.mxu0 0
    %3358 = vmatpush1.bf16.xpose.msra.mxu0 0
    %3359 = vmatprep.subr.bf16.mxu0 0
    %3360 = vmatpush1.bf16.xpose.msra.mxu0 0
    %3361 = vmatprep.subr.bf16.mxu0 0
    %3362 = vmatpush1.bf16.xpose.msra.mxu0 0
    %3363 = vmatprep.subr.bf16.mxu0 0
    %3364 = vmatpush1.bf16.xpose.msra.mxu0 0
    %3365 = vmatprep.subr.bf16.mxu0 0
    %3366 = vmatpush1.bf16.xpose.msra.mxu0 0
    %3367 = vmatprep.mubr.bf16.mxu0 0
    %3368 = vmatmul.mubr.bf16.gmra.mrb[0].mxu0 %v3330
    %v3369 = vpop.f32.mrb[0].mxu0
    %v3370 = vadd.f32 0.0, %v3369
    %v3371 = vpop.f32.mrb[0].mxu0
    %v3372 = vpop.f32.mrb[0].mxu0
    %v3373 = vpop.f32.mrb[0].mxu0
    %3374 = vdwg.mxu0
    %v3375 = vsel %vm680, %v3320, -inf
    %3376 = vmax.xlane.f32.xlu0 %v3375
    %v3377 = vpop.xlane.xlu0 %3376
    %v3378 = vsel %vm680, %v3370, -inf
    %3379 = vmax.xlane.f32.xlu0 %v3378
    %v3380 = vpop.xlane.xlu0 %3379
    %v3381 = vsub.f32 %v3320, %v3377
    %v3382 = vsub.f32 %v3370, %v3380
    %v3383 = vmul.f32 %v3381, 1.442695
    %v3384 = vpow.pop %v3383
    %v3385 = vmul.f32 %v3382, 1.442695
    %v3386 = vpow.pop %v3385
    %v3387 = vsel %vm680, %v3384, 0.0
    %3388 = vadd.xlane.f32.xlu0 %v3387
    %v3389 = vpop.xlane.xlu0 %3388
    %v3390 = vsel %vm680, %v3386, 0.0
    %3391 = vadd.xlane.f32.xlu0 %v3390
    %v3392 = vpop.xlane.xlu0 %3391
    %v3393 = vrcp.pop %v3389
    %v3394 = vrcp.pop %v3392
    %v3395 = vmul.f32 %v3384, %v3393
    %v3396 = vmul.f32 %v3386, %v3394
    %v3397 = vpack.c.bf16 %v3395, %v3395
    %v3398 = vpack.c.bf16 %v3396, %v3396
    %3399 = vrot.lane.b32.xlu0 %v2625, 32
    %v3400 = vpop.permute.xlu0 %3399
    %v3402 = vsel %vm680, %v3397, 0
    %v3405 = vsel %vm708, %v3400, 0
    %3407 = vmatprep.subr.bf16.mxu0 0
    %3408 = vmatpush1.bf16.msra.mxu0 %v3405
    %3409 = vmatprep.subr.bf16.mxu0 0
    %3410 = vmatpush1.bf16.msra.mxu0 0
    %3411 = vmatprep.subr.bf16.mxu0 0
    %3412 = vmatpush1.bf16.msra.mxu0 0
    %3413 = vmatprep.subr.bf16.mxu0 0
    %3414 = vmatpush1.bf16.msra.mxu0 0
    %3415 = vmatprep.subr.bf16.mxu0 0
    %3416 = vmatpush1.bf16.msra.mxu0 0
    %3417 = vmatprep.subr.bf16.mxu0 0
    %3418 = vmatpush1.bf16.msra.mxu0 0
    %3419 = vmatprep.subr.bf16.mxu0 0
    %3420 = vmatpush1.bf16.msra.mxu0 0
    %3421 = vmatprep.subr.bf16.mxu0 0
    %3422 = vmatpush1.bf16.msra.mxu0 0
    %3423 = vmatprep.subr.bf16.mxu0 0
    %3424 = vmatpush1.bf16.msra.mxu0 0
    %3425 = vmatprep.subr.bf16.mxu0 0
    %3426 = vmatpush1.bf16.msra.mxu0 0
    %3427 = vmatprep.subr.bf16.mxu0 0
    %3428 = vmatpush1.bf16.msra.mxu0 0
    %3429 = vmatprep.subr.bf16.mxu0 0
    %3430 = vmatpush1.bf16.msra.mxu0 0
    %3431 = vmatprep.subr.bf16.mxu0 0
    %3432 = vmatpush1.bf16.msra.mxu0 0
    %3433 = vmatprep.subr.bf16.mxu0 0
    %3434 = vmatpush1.bf16.msra.mxu0 0
    %3435 = vmatprep.subr.bf16.mxu0 0
    %3436 = vmatpush1.bf16.msra.mxu0 0
    %3437 = vmatprep.subr.bf16.mxu0 0
    %3438 = vmatpush1.bf16.msra.mxu0 0
    %3439 = vmatprep.mubr.bf16.mxu0 0
    %3440 = vmatmul.mubr.bf16.gmra.mrb[0].mxu0 %v3402
    %v3441 = vpop.f32.mrb[0].mxu0
    %v3442 = vadd.f32 0.0, %v3441
    %v3443 = vpop.f32.mrb[0].mxu0
    %v3444 = vpop.f32.mrb[0].mxu0
    %v3445 = vpop.f32.mrb[0].mxu0
    %3446 = vdwg.mxu0
    %3447 = vrot.lane.b32.xlu0 %v2626, 32
    %v3448 = vpop.permute.xlu0 %3447
    %v3450 = vsel %vm680, %v3398, 0
    %v3453 = vsel %vm708, %v3448, 0
    %3455 = vmatprep.subr.bf16.mxu0 0
    %3456 = vmatpush1.bf16.msra.mxu0 %v3453
    %3457 = vmatprep.subr.bf16.mxu0 0
    %3458 = vmatpush1.bf16.msra.mxu0 0
    %3459 = vmatprep.subr.bf16.mxu0 0
    %3460 = vmatpush1.bf16.msra.mxu0 0
    %3461 = vmatprep.subr.bf16.mxu0 0
    %3462 = vmatpush1.bf16.msra.mxu0 0
    %3463 = vmatprep.subr.bf16.mxu0 0
    %3464 = vmatpush1.bf16.msra.mxu0 0
    %3465 = vmatprep.subr.bf16.mxu0 0
    %3466 = vmatpush1.bf16.msra.mxu0 0
    %3467 = vmatprep.subr.bf16.mxu0 0
    %3468 = vmatpush1.bf16.msra.mxu0 0
    %3469 = vmatprep.subr.bf16.mxu0 0
    %3470 = vmatpush1.bf16.msra.mxu0 0
    %3471 = vmatprep.subr.bf16.mxu0 0
    %3472 = vmatpush1.bf16.msra.mxu0 0
    %3473 = vmatprep.subr.bf16.mxu0 0
    %3474 = vmatpush1.bf16.msra.mxu0 0
    %3475 = vmatprep.subr.bf16.mxu0 0
    %3476 = vmatpush1.bf16.msra.mxu0 0
    %3477 = vmatprep.subr.bf16.mxu0 0
    %3478 = vmatpush1.bf16.msra.mxu0 0
    %3479 = vmatprep.subr.bf16.mxu0 0
    %3480 = vmatpush1.bf16.msra.mxu0 0
    %3481 = vmatprep.subr.bf16.mxu0 0
    %3482 = vmatpush1.bf16.msra.mxu0 0
    %3483 = vmatprep.subr.bf16.mxu0 0
    %3484 = vmatpush1.bf16.msra.mxu0 0
    %3485 = vmatprep.subr.bf16.mxu0 0
    %3486 = vmatpush1.bf16.msra.mxu0 0
    %3487 = vmatprep.mubr.bf16.mxu0 0
    %3488 = vmatmul.mubr.bf16.gmra.mrb[0].mxu0 %v3450
    %v3489 = vpop.f32.mrb[0].mxu0
    %v3490 = vadd.f32 0.0, %v3489
    %v3491 = vpop.f32.mrb[0].mxu0
    %v3492 = vpop.f32.mrb[0].mxu0
    %v3493 = vpop.f32.mrb[0].mxu0
    %3494 = vdwg.mxu0
    %3497 = vrot.lane.b32.xlu0 %v3002, 32
    %v3498 = vpop.permute.xlu0 %3497
    %3499 = vrot.lane.b32.xlu0 %v3050, 32
    %v3500 = vpop.permute.xlu0 %3499
    %3505 = vrot.lane.b32.xlu0 %v3222, 64
    %v3506 = vpop.permute.xlu0 %3505
    %3507 = vrot.lane.b32.xlu0 %v3270, 64
    %v3508 = vpop.permute.xlu0 %3507
    %3513 = vrot.lane.b32.xlu0 %v3442, 96
    %v3514 = vpop.permute.xlu0 %3513
    %3515 = vrot.lane.b32.xlu0 %v3490, 96
    %v3516 = vpop.permute.xlu0 %3515
    %v3519 = vsel %vm587, %v2784, %v3498
    %v3520 = vsel %vm587, %v2830, %v3500
    %v3521 = vsel %vm138, %v3519, %v3506
    %v3522 = vsel %vm138, %v3520, %v3508
    %v3523 = vsel %vm1486, %v3521, %v3514
    %v3524 = vsel %vm1486, %v3522, %v3516
    %v3525 = vpack.c.bf16 %v3524, %v3523
    %v3527 = vlaneseq
    %v3528 = vshrl.u32 %v3527, 7
    %v3529 = vsub.s32 0, %v3528
    %v3530 = vrot.slane %v2307, %v3529
    %v3548 = vunpack.c.l.b16 %v2258
    %v3549 = vunpack.c.l.b16 %v2259
    %v3550 = vunpack.c.l.b16 %v2260
    %v3551 = vunpack.c.l.b16 %v2261
    %v3552 = vunpack.c.l.b16 %v2262
    %v3553 = vunpack.c.l.b16 %v2263
    %v3554 = vunpack.c.l.b16 %v2264
    %v3555 = vunpack.c.l.b16 %v2265
    %v3556 = vunpack.c.l.b16 %v2266
    %v3557 = vunpack.c.l.b16 %v2267
    %v3558 = vunpack.c.l.b16 %v2268
    %v3559 = vunpack.c.l.b16 %v2269
    %v3560 = vunpack.c.l.b16 %v2270
    %v3561 = vunpack.c.l.b16 %v2271
    %v3562 = vunpack.c.l.b16 %v2272
    %v3563 = vunpack.c.l.b16 %v2273
    %v3564 = vpack.c.b16 %v3549, %v3548
    %v3565 = vpack.c.b16 %v3551, %v3550
    %v3566 = vpack.c.b16 %v3553, %v3552
    %v3567 = vpack.c.b16 %v3555, %v3554
    %v3568 = vpack.c.b16 %v3557, %v3556
    %v3569 = vpack.c.b16 %v3559, %v3558
    %v3570 = vpack.c.b16 %v3561, %v3560
    %v3571 = vpack.c.b16 %v3563, %v3562
    %3580 = vmatprep.subr.bf16.mxu0 0
    %3581 = vmatpush1.bf16.msra.mxu0 %v3564
    %3582 = vmatprep.subr.bf16.mxu0 0
    %3583 = vmatpush1.bf16.msra.mxu0 %v3565
    %3584 = vmatprep.subr.bf16.mxu0 0
    %3585 = vmatpush1.bf16.msra.mxu0 %v3566
    %3586 = vmatprep.subr.bf16.mxu0 0
    %3587 = vmatpush1.bf16.msra.mxu0 %v3567
    %3588 = vmatprep.subr.bf16.mxu0 0
    %3589 = vmatpush1.bf16.msra.mxu0 %v3568
    %3590 = vmatprep.subr.bf16.mxu0 0
    %3591 = vmatpush1.bf16.msra.mxu0 %v3569
    %3592 = vmatprep.subr.bf16.mxu0 0
    %3593 = vmatpush1.bf16.msra.mxu0 %v3570
    %3594 = vmatprep.subr.bf16.mxu0 0
    %3595 = vmatpush1.bf16.msra.mxu0 %v3571
    %3596 = vmatprep.subr.bf16.mxu0 0
    %3597 = vmatpush1.bf16.msra.mxu0 0
    %3598 = vmatprep.subr.bf16.mxu0 0
    %3599 = vmatpush1.bf16.msra.mxu0 0
    %3600 = vmatprep.subr.bf16.mxu0 0
    %3601 = vmatpush1.bf16.msra.mxu0 0
    %3602 = vmatprep.subr.bf16.mxu0 0
    %3603 = vmatpush1.bf16.msra.mxu0 0
    %3604 = vmatprep.subr.bf16.mxu0 0
    %3605 = vmatpush1.bf16.msra.mxu0 0
    %3606 = vmatprep.subr.bf16.mxu0 0
    %3607 = vmatpush1.bf16.msra.mxu0 0
    %3608 = vmatprep.subr.bf16.mxu0 0
    %3609 = vmatpush1.bf16.msra.mxu0 0
    %3610 = vmatprep.subr.bf16.mxu0 0
    %3611 = vmatpush1.bf16.msra.mxu0 0
    %3612 = vmatprep.mubr.bf16.mxu0 0
    %3613 = vmatmul.mubr.bf16.gmra.mrb[0].mxu0 %v3525
    %v3614 = vpop.f32.mrb[0].mxu0
    %v3615 = vadd.f32 %v3530, %v3614
    %v3616 = vpop.f32.mrb[0].mxu0
    %v3617 = vpop.f32.mrb[0].mxu0
    %v3618 = vadd.f32 %v3530, %v3617
    %v3619 = vpop.f32.mrb[0].mxu0
    %3620 = vdwg.mxu0
    %v3621 = vadd.f32 %v2224, %v3615
    %v3622 = vadd.f32 %v2225, %v3618
    %3623 = vadd.xlane.f32.xlu0 %v3621
    %v3624 = vpop.xlane.xlu0 %3623
    %3625 = vadd.xlane.f32.xlu0 %v3622
    %v3626 = vpop.xlane.xlu0 %3625
    %v3627 = vmul.f32 %v3624, %v1591
    %v3628 = vmul.f32 %v3626, %v1591
    %v3629 = vsub.f32 %v3621, %v3627
    %v3630 = vsub.f32 %v3622, %v3628
    %v3631 = vmul.f32 %v3629, %v3629
    %v3632 = vmul.f32 %v3630, %v3630
    %3633 = vadd.xlane.f32.xlu0 %v3631
    %v3634 = vpop.xlane.xlu0 %3633
    %3635 = vadd.xlane.f32.xlu0 %v3632
    %v3636 = vpop.xlane.xlu0 %3635
    %v3637 = vmul.f32 %v3634, %v1591
    %v3638 = vmul.f32 %v3636, %v1591
    %v3639 = vadd.f32 %v3637, 1e-05
    %v3640 = vadd.f32 %v3638, 1e-05
    %v3641 = vrsqrt.pop %v3639
    %v3642 = vrsqrt.pop %v3640
    %v3643 = vmul.f32 %v3629, %v3641
    %v3644 = vmul.f32 %v3630, %v3642
    %v3646 = vlaneseq
    %v3647 = vshrl.u32 %v3646, 7
    %v3648 = vsub.s32 0, %v3647
    %v3649 = vrot.slane %v2308, %v3648
    %v3651 = vmul.f32 %v3643, %v3649
    %v3652 = vmul.f32 %v3644, %v3649
    %v3654 = vlaneseq
    %v3655 = vshrl.u32 %v3654, 7
    %v3656 = vsub.s32 0, %v3655
    %v3657 = vrot.slane %v2309, %v3656
    %v3659 = vadd.f32 %v3651, %v3657
    %v3660 = vadd.f32 %v3652, %v3657
    %v3661 = vpack.c.bf16 %v3660, %v3659
    %v3663 = vlaneseq
    %v3664 = vshrl.u32 %v3663, 7
    %v3665 = vsub.s32 0, %v3664
    %v3666 = vrot.slane %v2310, %v3665
    %v3667 = vlaneseq
    %v3668 = vshrl.u32 %v3667, 7
    %v3669 = vsub.s32 1, %v3668
    %v3670 = vrot.slane %v2310, %v3669
    %v3671 = vlaneseq
    %v3672 = vshrl.u32 %v3671, 7
    %v3673 = vsub.s32 2, %v3672
    %v3674 = vrot.slane %v2310, %v3673
    %v3675 = vlaneseq
    %v3676 = vshrl.u32 %v3675, 7
    %v3677 = vsub.s32 3, %v3676
    %v3678 = vrot.slane %v2310, %v3677
    %v3715 = vunpack.c.l.b16 %v2274
    %v3716 = vunpack.c.h.b16 %v2274
    %v3717 = vunpack.c.l.b16 %v2275
    %v3718 = vunpack.c.h.b16 %v2275
    %v3719 = vunpack.c.l.b16 %v2276
    %v3720 = vunpack.c.h.b16 %v2276
    %v3721 = vunpack.c.l.b16 %v2277
    %v3722 = vunpack.c.h.b16 %v2277
    %v3723 = vunpack.c.l.b16 %v2278
    %v3724 = vunpack.c.h.b16 %v2278
    %v3725 = vunpack.c.l.b16 %v2279
    %v3726 = vunpack.c.h.b16 %v2279
    %v3727 = vunpack.c.l.b16 %v2280
    %v3728 = vunpack.c.h.b16 %v2280
    %v3729 = vunpack.c.l.b16 %v2281
    %v3730 = vunpack.c.h.b16 %v2281
    %v3731 = vunpack.c.l.b16 %v2282
    %v3732 = vunpack.c.h.b16 %v2282
    %v3733 = vunpack.c.l.b16 %v2283
    %v3734 = vunpack.c.h.b16 %v2283
    %v3735 = vunpack.c.l.b16 %v2284
    %v3736 = vunpack.c.h.b16 %v2284
    %v3737 = vunpack.c.l.b16 %v2285
    %v3738 = vunpack.c.h.b16 %v2285
    %v3739 = vunpack.c.l.b16 %v2286
    %v3740 = vunpack.c.h.b16 %v2286
    %v3741 = vunpack.c.l.b16 %v2287
    %v3742 = vunpack.c.h.b16 %v2287
    %v3743 = vunpack.c.l.b16 %v2288
    %v3744 = vunpack.c.h.b16 %v2288
    %v3745 = vunpack.c.l.b16 %v2289
    %v3746 = vunpack.c.h.b16 %v2289
    %v3747 = vunpack.c.l.b16 %v2290
    %v3748 = vunpack.c.h.b16 %v2290
    %v3749 = vunpack.c.l.b16 %v2291
    %v3750 = vunpack.c.h.b16 %v2291
    %v3751 = vunpack.c.l.b16 %v2292
    %v3752 = vunpack.c.h.b16 %v2292
    %v3753 = vunpack.c.l.b16 %v2293
    %v3754 = vunpack.c.h.b16 %v2293
    %v3755 = vunpack.c.l.b16 %v2294
    %v3756 = vunpack.c.h.b16 %v2294
    %v3757 = vunpack.c.l.b16 %v2295
    %v3758 = vunpack.c.h.b16 %v2295
    %v3759 = vunpack.c.l.b16 %v2296
    %v3760 = vunpack.c.h.b16 %v2296
    %v3761 = vunpack.c.l.b16 %v2297
    %v3762 = vunpack.c.h.b16 %v2297
    %v3763 = vunpack.c.l.b16 %v2298
    %v3764 = vunpack.c.h.b16 %v2298
    %v3765 = vunpack.c.l.b16 %v2299
    %v3766 = vunpack.c.h.b16 %v2299
    %v3767 = vunpack.c.l.b16 %v2300
    %v3768 = vunpack.c.h.b16 %v2300
    %v3769 = vunpack.c.l.b16 %v2301
    %v3770 = vunpack.c.h.b16 %v2301
    %v3771 = vunpack.c.l.b16 %v2302
    %v3772 = vunpack.c.h.b16 %v2302
    %v3773 = vunpack.c.l.b16 %v2303
    %v3774 = vunpack.c.h.b16 %v2303
    %v3775 = vunpack.c.l.b16 %v2304
    %v3776 = vunpack.c.h.b16 %v2304
    %v3777 = vunpack.c.l.b16 %v2305
    %v3778 = vunpack.c.h.b16 %v2305
    %v3779 = vpack.c.b16 %v3719, %v3715
    %v3780 = vpack.c.b16 %v3720, %v3716
    %v3781 = vpack.c.b16 %v3721, %v3717
    %v3782 = vpack.c.b16 %v3722, %v3718
    %v3783 = vpack.c.b16 %v3727, %v3723
    %v3784 = vpack.c.b16 %v3728, %v3724
    %v3785 = vpack.c.b16 %v3729, %v3725
    %v3786 = vpack.c.b16 %v3730, %v3726
    %v3787 = vpack.c.b16 %v3735, %v3731
    %v3788 = vpack.c.b16 %v3736, %v3732
    %v3789 = vpack.c.b16 %v3737, %v3733
    %v3790 = vpack.c.b16 %v3738, %v3734
    %v3791 = vpack.c.b16 %v3743, %v3739
    %v3792 = vpack.c.b16 %v3744, %v3740
    %v3793 = vpack.c.b16 %v3745, %v3741
    %v3794 = vpack.c.b16 %v3746, %v3742
    %v3795 = vpack.c.b16 %v3751, %v3747
    %v3796 = vpack.c.b16 %v3752, %v3748
    %v3797 = vpack.c.b16 %v3753, %v3749
    %v3798 = vpack.c.b16 %v3754, %v3750
    %v3799 = vpack.c.b16 %v3759, %v3755
    %v3800 = vpack.c.b16 %v3760, %v3756
    %v3801 = vpack.c.b16 %v3761, %v3757
    %v3802 = vpack.c.b16 %v3762, %v3758
    %v3803 = vpack.c.b16 %v3767, %v3763
    %v3804 = vpack.c.b16 %v3768, %v3764
    %v3805 = vpack.c.b16 %v3769, %v3765
    %v3806 = vpack.c.b16 %v3770, %v3766
    %v3807 = vpack.c.b16 %v3775, %v3771
    %v3808 = vpack.c.b16 %v3776, %v3772
    %v3809 = vpack.c.b16 %v3777, %v3773
    %v3810 = vpack.c.b16 %v3778, %v3774
    %3843 = vmatprep.subr.bf16.mxu0 %v3780
    %3844 = vmatpush1.bf16.msra.mxu0 %v3779
    %3845 = vmatprep.subr.bf16.mxu0 %v3784
    %3846 = vmatpush1.bf16.msra.mxu0 %v3783
    %3847 = vmatprep.subr.bf16.mxu0 %v3788
    %3848 = vmatpush1.bf16.msra.mxu0 %v3787
    %3849 = vmatprep.subr.bf16.mxu0 %v3792
    %3850 = vmatpush1.bf16.msra.mxu0 %v3791
    %3851 = vmatprep.subr.bf16.mxu0 %v3796
    %3852 = vmatpush1.bf16.msra.mxu0 %v3795
    %3853 = vmatprep.subr.bf16.mxu0 %v3800
    %3854 = vmatpush1.bf16.msra.mxu0 %v3799
    %3855 = vmatprep.subr.bf16.mxu0 %v3804
    %3856 = vmatpush1.bf16.msra.mxu0 %v3803
    %3857 = vmatprep.subr.bf16.mxu0 %v3808
    %3858 = vmatpush1.bf16.msra.mxu0 %v3807
    %3859 = vmatprep.subr.bf16.mxu0 0
    %3860 = vmatpush1.bf16.msra.mxu0 0
    %3861 = vmatprep.subr.bf16.mxu0 0
    %3862 = vmatpush1.bf16.msra.mxu0 0
    %3863 = vmatprep.subr.bf16.mxu0 0
    %3864 = vmatpush1.bf16.msra.mxu0 0
    %3865 = vmatprep.subr.bf16.mxu0 0
    %3866 = vmatpush1.bf16.msra.mxu0 0
    %3867 = vmatprep.subr.bf16.mxu0 0
    %3868 = vmatpush1.bf16.msra.mxu0 0
    %3869 = vmatprep.subr.bf16.mxu0 0
    %3870 = vmatpush1.bf16.msra.mxu0 0
    %3871 = vmatprep.subr.bf16.mxu0 0
    %3872 = vmatpush1.bf16.msra.mxu0 0
    %3873 = vmatprep.subr.bf16.mxu0 0
    %3874 = vmatpush1.bf16.msra.mxu0 0
    %3875 = vmatprep.mubr.bf16.mxu0 0
    %3876 = vmatmul.mubr.bf16.gmra.mrb[0].mxu0 %v3661
    %v3877 = vpop.f32.mrb[0].mxu0
    %v3878 = vadd.f32 %v3666, %v3877
    %v3879 = vpop.f32.mrb[0].mxu0
    %v3880 = vadd.f32 %v3670, %v3879
    %v3881 = vpop.f32.mrb[0].mxu0
    %v3882 = vadd.f32 %v3666, %v3881
    %v3883 = vpop.f32.mrb[0].mxu0
    %v3884 = vadd.f32 %v3670, %v3883
    %3885 = vdwg.mxu0
    %3886 = vmatprep.subr.bf16.mxu0 %v3782
    %3887 = vmatpush1.bf16.msra.mxu0 %v3781
    %3888 = vmatprep.subr.bf16.mxu0 %v3786
    %3889 = vmatpush1.bf16.msra.mxu0 %v3785
    %3890 = vmatprep.subr.bf16.mxu0 %v3790
    %3891 = vmatpush1.bf16.msra.mxu0 %v3789
    %3892 = vmatprep.subr.bf16.mxu0 %v3794
    %3893 = vmatpush1.bf16.msra.mxu0 %v3793
    %3894 = vmatprep.subr.bf16.mxu0 %v3798
    %3895 = vmatpush1.bf16.msra.mxu0 %v3797
    %3896 = vmatprep.subr.bf16.mxu0 %v3802
    %3897 = vmatpush1.bf16.msra.mxu0 %v3801
    %3898 = vmatprep.subr.bf16.mxu0 %v3806
    %3899 = vmatpush1.bf16.msra.mxu0 %v3805
    %3900 = vmatprep.subr.bf16.mxu0 %v3810
    %3901 = vmatpush1.bf16.msra.mxu0 %v3809
    %3902 = vmatprep.subr.bf16.mxu0 0
    %3903 = vmatpush1.bf16.msra.mxu0 0
    %3904 = vmatprep.subr.bf16.mxu0 0
    %3905 = vmatpush1.bf16.msra.mxu0 0
    %3906 = vmatprep.subr.bf16.mxu0 0
    %3907 = vmatpush1.bf16.msra.mxu0 0
    %3908 = vmatprep.subr.bf16.mxu0 0
    %3909 = vmatpush1.bf16.msra.mxu0 0
    %3910 = vmatprep.subr.bf16.mxu0 0
    %3911 = vmatpush1.bf16.msra.mxu0 0
    %3912 = vmatprep.subr.bf16.mxu0 0
    %3913 = vmatpush1.bf16.msra.mxu0 0
    %3914 = vmatprep.subr.bf16.mxu0 0
    %3915 = vmatpush1.bf16.msra.mxu0 0
    %3916 = vmatprep.subr.bf16.mxu0 0
    %3917 = vmatpush1.bf16.msra.mxu0 0
    %3918 = vmatprep.mubr.bf16.mxu0 0
    %3919 = vmatmul.mubr.bf16.gmra.mrb[0].mxu0 %v3661
    %v3920 = vpop.f32.mrb[0].mxu0
    %v3921 = vadd.f32 %v3674, %v3920
    %v3922 = vpop.f32.mrb[0].mxu0
    %v3923 = vadd.f32 %v3678, %v3922
    %v3924 = vpop.f32.mrb[0].mxu0
    %v3925 = vadd.f32 %v3674, %v3924
    %v3926 = vpop.f32.mrb[0].mxu0
    %v3927 = vadd.f32 %v3678, %v3926
    %3928 = vdwg.mxu0
    %v3929 = vmax.f32 %v3878, 0.0
    %v3930 = vmax.f32 %v3880, 0.0
    %v3931 = vmax.f32 %v3921, 0.0
    %v3932 = vmax.f32 %v3923, 0.0
    %v3933 = vmax.f32 %v3882, 0.0
    %v3934 = vmax.f32 %v3884, 0.0
    %v3935 = vmax.f32 %v3925, 0.0
    %v3936 = vmax.f32 %v3927, 0.0
    %v3937 = vpack.c.bf16 %v3933, %v3929
    %v3938 = vpack.c.bf16 %v3934, %v3930
    %v3939 = vpack.c.bf16 %v3935, %v3931
    %v3940 = vpack.c.bf16 %v3936, %v3932
    %v3942 = vlaneseq
    %v3943 = vshrl.u32 %v3942, 7
    %v3944 = vsub.s32 0, %v3943
    %v3945 = vrot.slane %v2311, %v3944
    %v4011 = vunpack.c.l.b16 %v2314
    %v4012 = vunpack.c.l.b16 %v2315
    %v4013 = vunpack.c.l.b16 %v2316
    %v4014 = vunpack.c.l.b16 %v2317
    %v4015 = vunpack.c.l.b16 %v2318
    %v4016 = vunpack.c.l.b16 %v2319
    %v4017 = vunpack.c.l.b16 %v2320
    %v4018 = vunpack.c.l.b16 %v2321
    %v4019 = vunpack.c.l.b16 %v2322
    %v4020 = vunpack.c.l.b16 %v2323
    %v4021 = vunpack.c.l.b16 %v2324
    %v4022 = vunpack.c.l.b16 %v2325
    %v4023 = vunpack.c.l.b16 %v2326
    %v4024 = vunpack.c.l.b16 %v2327
    %v4025 = vunpack.c.l.b16 %v2328
    %v4026 = vunpack.c.l.b16 %v2329
    %v4027 = vunpack.c.l.b16 %v2330
    %v4028 = vunpack.c.l.b16 %v2331
    %v4029 = vunpack.c.l.b16 %v2332
    %v4030 = vunpack.c.l.b16 %v2333
    %v4031 = vunpack.c.l.b16 %v2334
    %v4032 = vunpack.c.l.b16 %v2335
    %v4033 = vunpack.c.l.b16 %v2336
    %v4034 = vunpack.c.l.b16 %v2337
    %v4035 = vunpack.c.l.b16 %v2338
    %v4036 = vunpack.c.l.b16 %v2339
    %v4037 = vunpack.c.l.b16 %v2340
    %v4038 = vunpack.c.l.b16 %v2341
    %v4039 = vunpack.c.l.b16 %v2342
    %v4040 = vunpack.c.l.b16 %v2343
    %v4041 = vunpack.c.l.b16 %v2344
    %v4042 = vunpack.c.l.b16 %v2345
    %v4043 = vunpack.c.l.b16 %v2346
    %v4044 = vunpack.c.l.b16 %v2347
    %v4045 = vunpack.c.l.b16 %v2348
    %v4046 = vunpack.c.l.b16 %v2349
    %v4047 = vunpack.c.l.b16 %v2350
    %v4048 = vunpack.c.l.b16 %v2351
    %v4049 = vunpack.c.l.b16 %v2352
    %v4050 = vunpack.c.l.b16 %v2353
    %v4051 = vunpack.c.l.b16 %v2354
    %v4052 = vunpack.c.l.b16 %v2355
    %v4053 = vunpack.c.l.b16 %v2356
    %v4054 = vunpack.c.l.b16 %v2357
    %v4055 = vunpack.c.l.b16 %v2358
    %v4056 = vunpack.c.l.b16 %v2359
    %v4057 = vunpack.c.l.b16 %v2360
    %v4058 = vunpack.c.l.b16 %v2361
    %v4059 = vunpack.c.l.b16 %v2362
    %v4060 = vunpack.c.l.b16 %v2363
    %v4061 = vunpack.c.l.b16 %v2364
    %v4062 = vunpack.c.l.b16 %v2365
    %v4063 = vunpack.c.l.b16 %v2366
    %v4064 = vunpack.c.l.b16 %v2367
    %v4065 = vunpack.c.l.b16 %v2368
    %v4066 = vunpack.c.l.b16 %v2369
    %v4067 = vunpack.c.l.b16 %v2370
    %v4068 = vunpack.c.l.b16 %v2371
    %v4069 = vunpack.c.l.b16 %v2372
    %v4070 = vunpack.c.l.b16 %v2373
    %v4071 = vunpack.c.l.b16 %v2374
    %v4072 = vunpack.c.l.b16 %v2375
    %v4073 = vunpack.c.l.b16 %v2376
    %v4074 = vunpack.c.l.b16 %v2377
    %v4075 = vpack.c.b16 %v4012, %v4011
    %v4076 = vpack.c.b16 %v4014, %v4013
    %v4077 = vpack.c.b16 %v4016, %v4015
    %v4078 = vpack.c.b16 %v4018, %v4017
    %v4079 = vpack.c.b16 %v4020, %v4019
    %v4080 = vpack.c.b16 %v4022, %v4021
    %v4081 = vpack.c.b16 %v4024, %v4023
    %v4082 = vpack.c.b16 %v4026, %v4025
    %v4083 = vpack.c.b16 %v4028, %v4027
    %v4084 = vpack.c.b16 %v4030, %v4029
    %v4085 = vpack.c.b16 %v4032, %v4031
    %v4086 = vpack.c.b16 %v4034, %v4033
    %v4087 = vpack.c.b16 %v4036, %v4035
    %v4088 = vpack.c.b16 %v4038, %v4037
    %v4089 = vpack.c.b16 %v4040, %v4039
    %v4090 = vpack.c.b16 %v4042, %v4041
    %v4091 = vpack.c.b16 %v4044, %v4043
    %v4092 = vpack.c.b16 %v4046, %v4045
    %v4093 = vpack.c.b16 %v4048, %v4047
    %v4094 = vpack.c.b16 %v4050, %v4049
    %v4095 = vpack.c.b16 %v4052, %v4051
    %v4096 = vpack.c.b16 %v4054, %v4053
    %v4097 = vpack.c.b16 %v4056, %v4055
    %v4098 = vpack.c.b16 %v4058, %v4057
    %v4099 = vpack.c.b16 %v4060, %v4059
    %v4100 = vpack.c.b16 %v4062, %v4061
    %v4101 = vpack.c.b16 %v4064, %v4063
    %v4102 = vpack.c.b16 %v4066, %v4065
    %v4103 = vpack.c.b16 %v4068, %v4067
    %v4104 = vpack.c.b16 %v4070, %v4069
    %v4105 = vpack.c.b16 %v4072, %v4071
    %v4106 = vpack.c.b16 %v4074, %v4073
    %4139 = vmatprep.subr.bf16.mxu0 0
    %4140 = vmatpush1.bf16.msra.mxu0 %v4075
    %4141 = vmatprep.subr.bf16.mxu0 0
    %4142 = vmatpush1.bf16.msra.mxu0 %v4076
    %4143 = vmatprep.subr.bf16.mxu0 0
    %4144 = vmatpush1.bf16.msra.mxu0 %v4077
    %4145 = vmatprep.subr.bf16.mxu0 0
    %4146 = vmatpush1.bf16.msra.mxu0 %v4078
    %4147 = vmatprep.subr.bf16.mxu0 0
    %4148 = vmatpush1.bf16.msra.mxu0 %v4079
    %4149 = vmatprep.subr.bf16.mxu0 0
    %4150 = vmatpush1.bf16.msra.mxu0 %v4080
    %4151 = vmatprep.subr.bf16.mxu0 0
    %4152 = vmatpush1.bf16.msra.mxu0 %v4081
    %4153 = vmatprep.subr.bf16.mxu0 0
    %4154 = vmatpush1.bf16.msra.mxu0 %v4082
    %4155 = vmatprep.subr.bf16.mxu0 0
    %4156 = vmatpush1.bf16.msra.mxu0 %v4083
    %4157 = vmatprep.subr.bf16.mxu0 0
    %4158 = vmatpush1.bf16.msra.mxu0 %v4084
    %4159 = vmatprep.subr.bf16.mxu0 0
    %4160 = vmatpush1.bf16.msra.mxu0 %v4085
    %4161 = vmatprep.subr.bf16.mxu0 0
    %4162 = vmatpush1.bf16.msra.mxu0 %v4086
    %4163 = vmatprep.subr.bf16.mxu0 0
    %4164 = vmatpush1.bf16.msra.mxu0 %v4087
    %4165 = vmatprep.subr.bf16.mxu0 0
    %4166 = vmatpush1.bf16.msra.mxu0 %v4088
    %4167 = vmatprep.subr.bf16.mxu0 0
    %4168 = vmatpush1.bf16.msra.mxu0 %v4089
    %4169 = vmatprep.subr.bf16.mxu0 0
    %4170 = vmatpush1.bf16.msra.mxu0 %v4090
    %4171 = vmatprep.mubr.bf16.mxu0 %v3938
    %4172 = vmatmul.mubr.bf16.gmra.mrb[0].mxu0 %v3937
    %v4173 = vpop.f32.mrb[0].mxu0
    %v4174 = vadd.f32 %v3945, %v4173
    %v4175 = vpop.f32.mrb[0].mxu0
    %v4176 = vpop.f32.mrb[0].mxu0
    %v4177 = vadd.f32 %v3945, %v4176
    %v4178 = vpop.f32.mrb[0].mxu0
    %4179 = vdwg.mxu0
    %4180 = vmatprep.subr.bf16.mxu0 0
    %4181 = vmatpush1.bf16.msra.mxu0 %v4091
    %4182 = vmatprep.subr.bf16.mxu0 0
    %4183 = vmatpush1.bf16.msra.mxu0 %v4092
    %4184 = vmatprep.subr.bf16.mxu0 0
    %4185 = vmatpush1.bf16.msra.mxu0 %v4093
    %4186 = vmatprep.subr.bf16.mxu0 0
    %4187 = vmatpush1.bf16.msra.mxu0 %v4094
    %4188 = vmatprep.subr.bf16.mxu0 0
    %4189 = vmatpush1.bf16.msra.mxu0 %v4095
    %4190 = vmatprep.subr.bf16.mxu0 0
    %4191 = vmatpush1.bf16.msra.mxu0 %v4096
    %4192 = vmatprep.subr.bf16.mxu0 0
    %4193 = vmatpush1.bf16.msra.mxu0 %v4097
    %4194 = vmatprep.subr.bf16.mxu0 0
    %4195 = vmatpush1.bf16.msra.mxu0 %v4098
    %4196 = vmatprep.subr.bf16.mxu0 0
    %4197 = vmatpush1.bf16.msra.mxu0 %v4099
    %4198 = vmatprep.subr.bf16.mxu0 0
    %4199 = vmatpush1.bf16.msra.mxu0 %v4100
    %4200 = vmatprep.subr.bf16.mxu0 0
    %4201 = vmatpush1.bf16.msra.mxu0 %v4101
    %4202 = vmatprep.subr.bf16.mxu0 0
    %4203 = vmatpush1.bf16.msra.mxu0 %v4102
    %4204 = vmatprep.subr.bf16.mxu0 0
    %4205 = vmatpush1.bf16.msra.mxu0 %v4103
    %4206 = vmatprep.subr.bf16.mxu0 0
    %4207 = vmatpush1.bf16.msra.mxu0 %v4104
    %4208 = vmatprep.subr.bf16.mxu0 0
    %4209 = vmatpush1.bf16.msra.mxu0 %v4105
    %4210 = vmatprep.subr.bf16.mxu0 0
    %4211 = vmatpush1.bf16.msra.mxu0 %v4106
    %4212 = vmatprep.mubr.bf16.mxu0 %v3940
    %4213 = vmatmul.mubr.bf16.gmra.mrb[0].mxu0 %v3939
    %v4214 = vpop.f32.mrb[0].mxu0
    %v4215 = vadd.f32 %v4174, %v4214
    %v4216 = vpop.f32.mrb[0].mxu0
    %v4217 = vpop.f32.mrb[0].mxu0
    %v4218 = vadd.f32 %v4177, %v4217
    %v4219 = vpop.f32.mrb[0].mxu0
    %4220 = vdwg.mxu0
    %v4221 = vadd.f32 %v3659, %v4215
    %v4222 = vadd.f32 %v3660, %v4218
    %4223 = vadd.xlane.f32.xlu0 %v4221
    %v4224 = vpop.xlane.xlu0 %4223
    %4225 = vadd.xlane.f32.xlu0 %v4222
    %v4226 = vpop.xlane.xlu0 %4225
    %v4227 = vmul.f32 %v4224, %v1591
    %v4228 = vmul.f32 %v4226, %v1591
    %v4229 = vsub.f32 %v4221, %v4227
    %v4230 = vsub.f32 %v4222, %v4228
    %v4231 = vmul.f32 %v4229, %v4229
    %v4232 = vmul.f32 %v4230, %v4230
    %4233 = vadd.xlane.f32.xlu0 %v4231
    %v4234 = vpop.xlane.xlu0 %4233
    %4235 = vadd.xlane.f32.xlu0 %v4232
    %v4236 = vpop.xlane.xlu0 %4235
    %v4237 = vmul.f32 %v4234, %v1591
    %v4238 = vmul.f32 %v4236, %v1591
    %v4239 = vadd.f32 %v4237, 1e-05
    %v4240 = vadd.f32 %v4238, 1e-05
    %v4241 = vrsqrt.pop %v4239
    %v4242 = vrsqrt.pop %v4240
    %v4243 = vmul.f32 %v4229, %v4241
    %v4244 = vmul.f32 %v4230, %v4242
    %v4246 = vlaneseq
    %v4247 = vshrl.u32 %v4246, 7
    %v4248 = vsub.s32 0, %v4247
    %v4249 = vrot.slane %v2312, %v4248
    %v4251 = vmul.f32 %v4243, %v4249
    %v4252 = vmul.f32 %v4244, %v4249
    %v4254 = vlaneseq
    %v4255 = vshrl.u32 %v4254, 7
    %v4256 = vsub.s32 0, %v4255
    %v4257 = vrot.slane %v2313, %v4256
    %v4259 = vadd.f32 %v4251, %v4257
    %v4260 = vadd.f32 %v4252, %v4257
    %v4261 = vld [vmem:[#allocation7 + $0x40] sm:$0xf]
    %v4262 = vld [vmem:[#allocation7 + $0x84] sm:$0xf]
    %v4263 = vld [vmem:[#allocation7 + $0xc8] sm:$0xf]
    %v4264 = vld [vmem:[#allocation7 + $0x10c] sm:$0xf]
    %v4265 = vld [vmem:[#allocation7 + $0x150] sm:$0xf]
    %v4266 = vld [vmem:[#allocation7 + $0x194] sm:$0xf]
    %v4267 = vld [vmem:[#allocation7 + $0x1d8] sm:$0xf]
    %v4268 = vld [vmem:[#allocation7 + $0x21c] sm:$0xf]
    %v4269 = vld [vmem:[#allocation7 + $0x260] sm:$0xf]
    %v4270 = vld [vmem:[#allocation7 + $0x2a4] sm:$0xf]
    %v4271 = vld [vmem:[#allocation7 + $0x2e8] sm:$0xf]
    %v4272 = vld [vmem:[#allocation7 + $0x32c] sm:$0xf]
    %v4273 = vld [vmem:[#allocation7 + $0x370] sm:$0xf]
    %v4274 = vld [vmem:[#allocation7 + $0x3b4] sm:$0xf]
    %v4275 = vld [vmem:[#allocation7 + $0x3f8] sm:$0xf]
    %v4276 = vld [vmem:[#allocation7 + $0x43c] sm:$0xf]
    %v4277 = vld [vmem:[#allocation10 + $0x1a] sm:$0x1]
    %v4278 = vpack.c.bf16 %v4260, %v4259
    %v4280 = vlaneseq
    %v4281 = vshrl.u32 %v4280, 7
    %v4282 = vsub.s32 0, %v4281
    %v4283 = vrot.slane %v4277, %v4282
    %v4301 = vunpack.c.l.b16 %v4261
    %v4302 = vunpack.c.l.b16 %v4262
    %v4303 = vunpack.c.l.b16 %v4263
    %v4304 = vunpack.c.l.b16 %v4264
    %v4305 = vunpack.c.l.b16 %v4265
    %v4306 = vunpack.c.l.b16 %v4266
    %v4307 = vunpack.c.l.b16 %v4267
    %v4308 = vunpack.c.l.b16 %v4268
    %v4309 = vunpack.c.l.b16 %v4269
    %v4310 = vunpack.c.l.b16 %v4270
    %v4311 = vunpack.c.l.b16 %v4271
    %v4312 = vunpack.c.l.b16 %v4272
    %v4313 = vunpack.c.l.b16 %v4273
    %v4314 = vunpack.c.l.b16 %v4274
    %v4315 = vunpack.c.l.b16 %v4275
    %v4316 = vunpack.c.l.b16 %v4276
    %v4317 = vpack.c.b16 %v4302, %v4301
    %v4318 = vpack.c.b16 %v4304, %v4303
    %v4319 = vpack.c.b16 %v4306, %v4305
    %v4320 = vpack.c.b16 %v4308, %v4307
    %v4321 = vpack.c.b16 %v4310, %v4309
    %v4322 = vpack.c.b16 %v4312, %v4311
    %v4323 = vpack.c.b16 %v4314, %v4313
    %v4324 = vpack.c.b16 %v4316, %v4315
    %4333 = vmatprep.subr.bf16.mxu0 0
    %4334 = vmatpush1.bf16.msra.mxu0 %v4317
    %4335 = vmatprep.subr.bf16.mxu0 0
    %4336 = vmatpush1.bf16.msra.mxu0 %v4318
    %4337 = vmatprep.subr.bf16.mxu0 0
    %4338 = vmatpush1.bf16.msra.mxu0 %v4319
    %4339 = vmatprep.subr.bf16.mxu0 0
    %4340 = vmatpush1.bf16.msra.mxu0 %v4320
    %4341 = vmatprep.subr.bf16.mxu0 0
    %4342 = vmatpush1.bf16.msra.mxu0 %v4321
    %4343 = vmatprep.subr.bf16.mxu0 0
    %4344 = vmatpush1.bf16.msra.mxu0 %v4322
    %4345 = vmatprep.subr.bf16.mxu0 0
    %4346 = vmatpush1.bf16.msra.mxu0 %v4323
    %4347 = vmatprep.subr.bf16.mxu0 0
    %4348 = vmatpush1.bf16.msra.mxu0 %v4324
    %4349 = vmatprep.subr.bf16.mxu0 0
    %4350 = vmatpush1.bf16.msra.mxu0 0
    %4351 = vmatprep.subr.bf16.mxu0 0
    %4352 = vmatpush1.bf16.msra.mxu0 0
    %4353 = vmatprep.subr.bf16.mxu0 0
    %4354 = vmatpush1.bf16.msra.mxu0 0
    %4355 = vmatprep.subr.bf16.mxu0 0
    %4356 = vmatpush1.bf16.msra.mxu0 0
    %4357 = vmatprep.subr.bf16.mxu0 0
    %4358 = vmatpush1.bf16.msra.mxu0 0
    %4359 = vmatprep.subr.bf16.mxu0 0
    %4360 = vmatpush1.bf16.msra.mxu0 0
    %4361 = vmatprep.subr.bf16.mxu0 0
    %4362 = vmatpush1.bf16.msra.mxu0 0
    %4363 = vmatprep.subr.bf16.mxu0 0
    %4364 = vmatpush1.bf16.msra.mxu0 0
    %4365 = vmatprep.mubr.bf16.mxu0 0
    %4366 = vmatmul.mubr.bf16.gmra.mrb[0].mxu0 %v4278
    %v4367 = vpop.f32.mrb[0].mxu0
    %v4368 = vadd.f32 %v4283, %v4367
    %v4369 = vpop.f32.mrb[0].mxu0
    %v4370 = vpop.f32.mrb[0].mxu0
    %v4371 = vadd.f32 %v4283, %v4370
    %v4372 = vpop.f32.mrb[0].mxu0
    %4373 = vdwg.mxu0
    %4374 = vst [vmem:[#allocation11] sm:$0xff] %v4368
    %4375 = vst [vmem:[#allocation11 + $0x8] sm:$0xff] %v4371
    // Predicated region
    $region46: #{transformer_forward.1} parent=1 // pred_check
      _
    $region47: #{transformer_forward.1} parent=1 // pred_check_branch
      %4377 = sbr.rel (0) target = $region49
    $region48: #{transformer_forward.1} parent=1 // pred_region
      %s4379 = ssub.s32 256, 256
      %4380 = vsyncadd [#allocation4], %s4379
      %s4381 = sshll.u32 [#allocation11], 4
      %s4382 = int_to_ptr.vmem [resolvable:$true] %s4381
      %4387 = dma.vmem_to_hbm [thread:$0]  %s4382, 256, %s6, [#allocation4], 128, 128, 8
    $region49: #{transformer_forward.1} parent=1 // pred_fallthru
      _
    // Predicated region
    $region50: #{transformer_forward.1} parent=1 // pred_check
      _
    $region51: #{transformer_forward.1} parent=1 // pred_check_branch
      %4389 = sbr.rel (0) target = $region53
    $region52: #{transformer_forward.1} parent=1 // pred_region
      %4390 = dma.done [#allocation4], 256
    $region53: #{transformer_forward.1} parent=1 // pred_fallthru
      _
    %4391 = vsyncpa [#allocation3], 1
    %4392 = vsyncpa [#allocation6], 1
    %4393 = vsyncpa [#allocation9], 1
    %4394 = vsyncpa [#allocation4], 1

</llo_original>
